<compile_context>
chip_gen: v7x
topology: tpu7x:2x2x1
jax: 0.10.0
libtpu: 0.0.40
codegen_flags: <defaults>
</compile_context>

<pallas_src>
import functools

import numpy as np
import jax
import jax.numpy as jnp
from jax.experimental import pallas as pl
from jax.experimental.pallas import tpu as pltpu


def _round_up(n, m):
    return ((n + m - 1) // m) * m


# PyTorch LSTM gate order is (i, f, g, o); we store gates as (i, f, o, g) so
# the three sigmoid gates are lane-contiguous (single EUP pass per step).
_GATE_PERM = (0, 1, 3, 2)


# ---------------------------------------------------------------------------
# Kernel: one grid step == one chunk of <=32 time steps.
#   x_ref    : (S_chunk*B_pad, F)   time-major input for this chunk (BN folded
#                                   into weights/bias by the wrapper)
#   wx_ref   : (F,  4*HP)           input->gate weights (BN-scaled, gate order i,f,o,g)
#   wh_ref   : (HP, 4*HP)           hidden->gate weights, zero padded
#   b_ref    : (1,  4*HP)           combined bias (b_ih + b_hh + BN shift term)
#   out_ref  : (S_chunk, B_pad, HP) per-step hidden states (lane-dense)
#   hfin_ref : (B_pad, HP)          hidden carry / final hidden state (resident)
#   cfin_ref : (B_pad, HP)          cell carry / final cell state (resident)
#   xg_ref   : VMEM scratch (S_chunk*B_pad, 4*HP) for the chunk's input projection
# ---------------------------------------------------------------------------
def encoder_kernel(x_ref, wx_ref, wh_ref, b_ref,
                   out_ref, hfin_ref, cfin_ref, xg_ref,
                   *, seq_len, chunk_steps, b_pad, hp, w_dtype, masked_tail):
    chunk = pl.program_id(0)

    # First chunk: zero-init the carried (VMEM-resident) hidden / cell state.
    @pl.when(chunk == 0)
    def _():
        hfin_ref[...] = jnp.zeros_like(hfin_ref)
        cfin_ref[...] = jnp.zeros_like(cfin_ref)

    # One MXU pass for all input->gate projections of this chunk, materialized
    # into VMEM scratch (aligned per-step loads instead of vreg-held slices).
    xg_ref[...] = (
        jnp.dot(x_ref[...].astype(w_dtype), wx_ref[...],
                preferred_element_type=jnp.float32)
        + b_ref[...])

    h = hfin_ref[...]
    c = cfin_ref[...]
    base = chunk * chunk_steps

    # chunk_steps <= 32, so a static unroll is fine (per-chunk program size
    # stays bounded regardless of total S).
    for t in range(chunk_steps):
        gates = (xg_ref[pl.ds(t * b_pad, b_pad), :]
                 + jnp.dot(h.astype(w_dtype), wh_ref[...],
                           preferred_element_type=jnp.float32))     # (B_pad, 4*HP)
        sig = jax.nn.sigmoid(gates[:, :3 * hp])        # i | f | o in one EUP pass
        g = jnp.tanh(gates[:, 3 * hp:])                # candidate gate
        c_new = sig[:, hp:2 * hp] * c + sig[:, :hp] * g
        h_new = sig[:, 2 * hp:3 * hp] * jnp.tanh(c_new)
        if masked_tail:
            # Steps past the true sequence length (tail padding of the last
            # chunk) must not advance the recurrent state.
            valid = (base + t) < seq_len
            c_new = jnp.where(valid, c_new, c)
            h_new = jnp.where(valid, h_new, h)
        c = c_new
        h = h_new
        out_ref[t] = h                                 # aligned, lane-dense store

    # Write the carry back for the next chunk / final state output.
    hfin_ref[...] = h
    cfin_ref[...] = c


# ---------------------------------------------------------------------------
# Wrapper. Matches PyTorch AttentionEncoding.forward (eval mode):
#   data (B, F, S)  ->  (output (B, S, H), (h_n (1, B, H), c_n (1, B, H)))
# ---------------------------------------------------------------------------
def attention_encoding_forward(params, x, eps=1e-5, weight_dtype=jnp.bfloat16):
    B, F, S = x.shape
    H = params["w_hh"].shape[0]
    HP = _round_up(H, 128)          # per-gate lane padding
    B_pad = _round_up(B, 8)         # sublane / MXU-row padding

    # Chunk the sequence: <=32 steps per grid iteration, multiple of 8.
    n_chunks = -(-S // 32)
    S_chunk = _round_up(-(-S // n_chunks), 8)
    S_pad = S_chunk * n_chunks

    # ---- fold eval-mode BatchNorm1d into the input projection --------------
    scale = params["bn_gamma"] / jnp.sqrt(params["bn_var"] + eps)        # (F,)
    shift = params["bn_beta"] - params["bn_mean"] * scale                # (F,)
    w_ih_eff = params["w_ih"] * scale[:, None]                           # (F, 4H)
    bias_eff = params["b_ih"] + params["b_hh"] + shift @ params["w_ih"]  # (4H,)

    # ---- pad each gate to its own 128-lane tile, reorder gates to i,f,o,g --
    perm = list(_GATE_PERM)
    wx_p = jnp.zeros((F, 4, HP), jnp.float32)
    wx_p = wx_p.at[:, :, :H].set(w_ih_eff.reshape(F, 4, H)[:, perm, :])
    wx_p = wx_p.reshape(F, 4 * HP).astype(weight_dtype)

    wh_p = jnp.zeros((HP, 4, HP), jnp.float32)
    wh_p = wh_p.at[:H, :, :H].set(params["w_hh"].reshape(H, 4, H)[:, perm, :])
    wh_p = wh_p.reshape(HP, 4 * HP).astype(weight_dtype)

    b_p = jnp.zeros((1, 4, HP), jnp.float32)
    b_p = b_p.at[0, :, :H].set(bias_eff.reshape(4, H)[perm, :])
    b_p = b_p.reshape(1, 4 * HP)

    # ---- time-major, batch-padded input so per-step rows are 8-aligned -----
    x_tm = jnp.zeros((S_pad, B_pad, F), jnp.float32)
    x_tm = x_tm.at[:S, :B, :].set(jnp.transpose(x, (2, 0, 1)))
    x_flat = x_tm.reshape(S_pad * B_pad, F)

    # ---- VMEM budget (explicit limit; v5e default is only 16 MiB) ----------
    wbytes = jnp.dtype(weight_dtype).itemsize
    est = 2 * (S_chunk * B_pad * F * 4
               + F * 4 * HP * wbytes
               + HP * 4 * HP * wbytes
               + 4 * HP * 4
               + S_chunk * B_pad * HP * 4
               + 2 * B_pad * HP * 4) + S_chunk * B_pad * 4 * HP * 4
    vmem_limit = int(min(max(4 * est, 32 * 1024 * 1024), 64 * 1024 * 1024))

    kernel = functools.partial(
        encoder_kernel,
        seq_len=S, chunk_steps=S_chunk, b_pad=B_pad, hp=HP,
        w_dtype=weight_dtype, masked_tail=(S_pad != S))

    grid_spec = pltpu.PrefetchScalarGridSpec(
        num_scalar_prefetch=0,
        grid=(n_chunks,),
        in_specs=[
            pl.BlockSpec((S_chunk * B_pad, F), lambda i: (i, 0)),   # x (pipelined)
            pl.BlockSpec((F, 4 * HP), lambda i: (0, 0)),            # wx (resident)
            pl.BlockSpec((HP, 4 * HP), lambda i: (0, 0)),           # wh (resident)
            pl.BlockSpec((1, 4 * HP), lambda i: (0, 0)),            # bias
        ],
        out_specs=(
            pl.BlockSpec((S_chunk, B_pad, HP), lambda i: (i, 0, 0)),  # outputs
            pl.BlockSpec((B_pad, HP), lambda i: (0, 0)),              # h carry/final
            pl.BlockSpec((B_pad, HP), lambda i: (0, 0)),              # c carry/final
        ),
        scratch_shapes=[pltpu.VMEM((S_chunk * B_pad, 4 * HP), jnp.float32)],
    )

    out_pad, h_pad, c_pad = pl.pallas_call(
        kernel,
        out_shape=(jax.ShapeDtypeStruct((S_pad, B_pad, HP), jnp.float32),
                   jax.ShapeDtypeStruct((B_pad, HP), jnp.float32),
                   jax.ShapeDtypeStruct((B_pad, HP), jnp.float32)),
        grid_spec=grid_spec,
        compiler_params=pltpu.CompilerParams(
            dimension_semantics=("arbitrary",),
            vmem_limit_bytes=vmem_limit),
    )(x_flat, wx_p, wh_p, b_p)

    # Layout plumbing back to the PyTorch convention (batch_first output,
    # num_layers(=1) leading axis on the hidden states).
    out = jnp.transpose(out_pad[:S, :B, :H], (1, 0, 2))
    h_n = h_pad[:B, :H][None]
    c_n = c_pad[:B, :H][None]
    return out, (h_n, c_n)


# ---------------------------------------------------------------------------
# Parameters (deterministic synthetic init; shapes follow the PyTorch module).
# LSTM weights stored transposed for right-multiplication; gate order i,f,g,o.
# ---------------------------------------------------------------------------
def init_params(key, F, H):
    ks = jax.random.split(key, 8)
    s = 1.0 / np.sqrt(H)
    u = lambda k, shape: jax.random.uniform(k, shape, jnp.float32, -s, s)
    return {
        # BatchNorm1d(F): affine params + (non-trivial) running statistics.
        "bn_gamma": 1.0 + 0.1 * jax.random.normal(ks[0], (F,), jnp.float32),
        "bn_beta": 0.1 * jax.random.normal(ks[1], (F,), jnp.float32),
        "bn_mean": 0.1 * jax.random.normal(ks[2], (F,), jnp.float32),
        "bn_var": 1.0 + 0.1 * jax.random.uniform(ks[3], (F,), jnp.float32),
        # LSTM(F -> H), single layer.
        "w_ih": u(ks[4], (F, 4 * H)),
        "w_hh": u(ks[5], (H, 4 * H)),
        "b_ih": u(ks[6], (4 * H,)),
        "b_hh": u(ks[7], (4 * H,)),
    }


# ---------------------------------------------------------------------------
# Pure-JAX reference (mirrors the PyTorch forward; eval-mode BN, no folding,
# no padding, PyTorch i/f/g/o gate order).
# ---------------------------------------------------------------------------
def reference_forward(p, x, eps=1e-5):
    B, F, S = x.shape
    H = p["w_hh"].shape[0]
    scale = p["bn_gamma"] / jnp.sqrt(p["bn_var"] + eps)
    xb = (x - p["bn_mean"][None, :, None]) * scale[None, :, None] \
        + p["bn_beta"][None, :, None]
    xb = jnp.transpose(xb, (0, 2, 1))                     # (B, S, F)

    bias = p["b_ih"] + p["b_hh"]
    h = jnp.zeros((B, H), jnp.float32)
    c = jnp.zeros((B, H), jnp.float32)
    outs = []
    for t in range(S):
        g = xb[:, t, :] @ p["w_ih"] + h @ p["w_hh"] + bias
        i = jax.nn.sigmoid(g[:, :H])
        f = jax.nn.sigmoid(g[:, H:2 * H])
        gg = jnp.tanh(g[:, 2 * H:3 * H])
        o = jax.nn.sigmoid(g[:, 3 * H:])
        c = f * c + i * gg
        h = o * jnp.tanh(c)
        outs.append(h)
    return jnp.stack(outs, axis=1), (h[None], c[None])


if __name__ == "__main__":
    key = jax.random.PRNGKey(0)
    kp, kx1, kx2 = jax.random.split(key, 3)

    B, F, H = 2, 4, 32            # batch, in_features, hidden
    params = init_params(kp, F, H)

    # --- test 1: S=8 (single chunk), f32 weights, tight tolerance -----------
    S1 = 8
    x1 = jax.random.normal(kx1, (B, F, S1), jnp.float32)      # NCL, like PyTorch
    out, (h_n, c_n) = attention_encoding_forward(params, x1,
                                                 weight_dtype=jnp.float32)
    out = jax.block_until_ready(out)
    assert out.shape == (B, S1, H)
    assert h_n.shape == (1, B, H) and c_n.shape == (1, B, H)
    ref_out, (ref_h, ref_c) = reference_forward(params, x1)
    np.testing.assert_allclose(np.asarray(out), np.asarray(ref_out),
                               atol=1e-4, rtol=1e-4)
    np.testing.assert_allclose(np.asarray(h_n), np.asarray(ref_h),
                               atol=1e-4, rtol=1e-4)
    np.testing.assert_allclose(np.asarray(c_n), np.asarray(ref_c),
                               atol=1e-4, rtol=1e-4)

    # --- test 2: S=40 (multi-chunk + masked tail), f32 weights --------------
    S2 = 40
    x2 = jax.random.normal(kx2, (B, F, S2), jnp.float32)
    out2, (h2, c2) = attention_encoding_forward(params, x2,
                                                weight_dtype=jnp.float32)
    out2 = jax.block_until_ready(out2)
    ref2_out, (ref2_h, ref2_c) = reference_forward(params, x2)
    np.testing.assert_allclose(np.asarray(out2), np.asarray(ref2_out),
                               atol=2e-4, rtol=2e-4)
    np.testing.assert_allclose(np.asarray(h2), np.asarray(ref2_h),
                               atol=2e-4, rtol=2e-4)
    np.testing.assert_allclose(np.asarray(c2), np.asarray(ref2_c),
                               atol=2e-4, rtol=2e-4)

    # --- test 3: bf16 weights (MXU-native), looser tolerance ----------------
    out3, (h3, c3) = attention_encoding_forward(params, x1,
                                                weight_dtype=jnp.bfloat16)
    out3 = jax.block_until_ready(out3)
    np.testing.assert_allclose(np.asarray(out3), np.asarray(ref_out),
                               atol=3e-2, rtol=3e-2)
    np.testing.assert_allclose(np.asarray(h3), np.asarray(ref_h),
                               atol=3e-2, rtol=3e-2)

    print("KERNEL_OK")
</pallas_src>

<mosaic_0001>
module attributes {stable_mosaic.version = 11 : i64} {
  func.func @encoder_kernel(%arg0: i32, %arg1: memref<64x4xf32, #tpu.memory_space<vmem>>, %arg2: memref<4x512xf32, #tpu.memory_space<vmem>>, %arg3: memref<128x512xf32, #tpu.memory_space<vmem>>, %arg4: memref<1x512xf32, #tpu.memory_space<vmem>>, %arg5: memref<8x8x128xf32, #tpu.memory_space<vmem>>, %arg6: memref<8x128xf32, #tpu.memory_space<vmem>>, %arg7: memref<8x128xf32, #tpu.memory_space<vmem>>, %arg8: memref<64x512xf32, #tpu.memory_space<vmem>>) attributes {dimension_semantics = [#tpu.dimension_semantics<arbitrary>], iteration_bounds = array<i64: 1>, scalar_prefetch = 0 : i64, scratch_operands = 1 : i64, tpu.core_type = #tpu.core_type<tc>, window_params = [{transform_indices = @transform_0, window_bounds = array<i64: 64, 4>}, {pipeline_mode = #tpu.pipeline_mode<synchronous>, transform_indices = @transform_1, window_bounds = array<i64: 4, 512>}, {pipeline_mode = #tpu.pipeline_mode<synchronous>, transform_indices = @transform_2, window_bounds = array<i64: 128, 512>}, {pipeline_mode = #tpu.pipeline_mode<synchronous>, transform_indices = @transform_3, window_bounds = array<i64: 1, 512>}, {transform_indices = @transform_4, window_bounds = array<i64: 8, 8, 128>}, {pipeline_mode = #tpu.pipeline_mode<synchronous>, transform_indices = @transform_5, window_bounds = array<i64: 8, 128>}, {pipeline_mode = #tpu.pipeline_mode<synchronous>, transform_indices = @transform_6, window_bounds = array<i64: 8, 128>}]} {
    %c0_i32 = arith.constant 0 : i32
    %0 = arith.cmpi eq, %arg0, %c0_i32 : i32
    %1 = arith.extui %0 : i1 to i32
    %c0_i32_0 = arith.constant 0 : i32
    %2 = arith.cmpi ne, %1, %c0_i32_0 : i32
    scf.if %2 {
      %cst_74 = arith.constant 0.000000e+00 : f32
      %198 = vector.broadcast %cst_74 : f32 to vector<8x128xf32>
      %c0_75 = arith.constant 0 : index
      %c0_76 = arith.constant 0 : index
      %199 = vector.load %arg6[%c0_75, %c0_76] : memref<8x128xf32, #tpu.memory_space<vmem>>, vector<8x128xf32>
      tpu.vector_store %arg6[%c0_75, %c0_76], %198 {strides = array<i32>} : memref<8x128xf32, #tpu.memory_space<vmem>>, vector<8x128xf32>,
      %cst_77 = arith.constant 0.000000e+00 : f32
      %200 = vector.broadcast %cst_77 : f32 to vector<8x128xf32>
      %c0_78 = arith.constant 0 : index
      %c0_79 = arith.constant 0 : index
      %201 = vector.load %arg7[%c0_78, %c0_79] : memref<8x128xf32, #tpu.memory_space<vmem>>, vector<8x128xf32>
      tpu.vector_store %arg7[%c0_78, %c0_79], %200 {strides = array<i32>} : memref<8x128xf32, #tpu.memory_space<vmem>>, vector<8x128xf32>,
    } else {
    }
    %c0 = arith.constant 0 : index
    %c0_1 = arith.constant 0 : index
    %3 = vector.load %arg1[%c0, %c0_1] : memref<64x4xf32, #tpu.memory_space<vmem>>, vector<64x4xf32>
    %c0_2 = arith.constant 0 : index
    %c0_3 = arith.constant 0 : index
    %4 = vector.load %arg2[%c0_2, %c0_3] : memref<4x512xf32, #tpu.memory_space<vmem>>, vector<4x512xf32>
    %cst = arith.constant dense<0.000000e+00> : vector<64x512xf32>
    %5 = tpu.matmul %3, %4, %cst {dimension_numbers = #tpu.dot_dimension_numbers<[1], [0], [0], [1], [0, 0, 1, 1], [], []>} : vector<64x4xf32>, vector<4x512xf32>, vector<64x512xf32> -> vector<64x512xf32>
    %c0_4 = arith.constant 0 : index
    %c0_5 = arith.constant 0 : index
    %6 = vector.load %arg4[%c0_4, %c0_5] : memref<1x512xf32, #tpu.memory_space<vmem>>, vector<1x512xf32>
    %7 = vector.broadcast %6 : vector<1x512xf32> to vector<64x512xf32>
    %8 = arith.addf %5, %7 : vector<64x512xf32>
    %c0_6 = arith.constant 0 : index
    %c0_7 = arith.constant 0 : index
    %9 = vector.load %arg8[%c0_6, %c0_7] : memref<64x512xf32, #tpu.memory_space<vmem>>, vector<64x512xf32>
    tpu.vector_store %arg8[%c0_6, %c0_7], %8 {strides = array<i32>} : memref<64x512xf32, #tpu.memory_space<vmem>>, vector<64x512xf32>,
    %c0_8 = arith.constant 0 : index
    %c0_9 = arith.constant 0 : index
    %10 = vector.load %arg6[%c0_8, %c0_9] : memref<8x128xf32, #tpu.memory_space<vmem>>, vector<8x128xf32>
    %c0_10 = arith.constant 0 : index
    %c0_11 = arith.constant 0 : index
    %11 = vector.load %arg7[%c0_10, %c0_11] : memref<8x128xf32, #tpu.memory_space<vmem>>, vector<8x128xf32>
    %c0_12 = arith.constant 0 : index
    %c0_13 = arith.constant 0 : index
    %12 = vector.load %arg8[%c0_12, %c0_13] : memref<64x512xf32, #tpu.memory_space<vmem>>, vector<8x512xf32>
    %c0_14 = arith.constant 0 : index
    %c0_15 = arith.constant 0 : index
    %13 = vector.load %arg3[%c0_14, %c0_15] : memref<128x512xf32, #tpu.memory_space<vmem>>, vector<128x512xf32>
    %cst_16 = arith.constant dense<0.000000e+00> : vector<8x512xf32>
    %14 = tpu.matmul %10, %13, %cst_16 {dimension_numbers = #tpu.dot_dimension_numbers<[1], [0], [0], [1], [0, 0, 1, 1], [], []>} : vector<8x128xf32>, vector<128x512xf32>, vector<8x512xf32> -> vector<8x512xf32>
    %15 = arith.addf %12, %14 : vector<8x512xf32>
    %16 = vector.extract_strided_slice %15 {offsets = [0, 0], sizes = [8, 384], strides = [1, 1]} : vector<8x512xf32> to vector<8x384xf32>
    %17 = arith.negf %16 : vector<8x384xf32>
    %18 = math.exp %17 : vector<8x384xf32>
    %cst_17 = arith.constant 1.000000e+00 : f32
    %19 = vector.broadcast %cst_17 : f32 to vector<8x384xf32>
    %20 = arith.addf %19, %18 : vector<8x384xf32>
    %21 = arith.divf %19, %20 : vector<8x384xf32>
    %22 = vector.extract_strided_slice %15 {offsets = [0, 384], sizes = [8, 128], strides = [1, 1]} : vector<8x512xf32> to vector<8x128xf32>
    %23 = math.tanh %22 : vector<8x128xf32>
    %24 = vector.extract_strided_slice %21 {offsets = [0, 128], sizes = [8, 128], strides = [1, 1]} : vector<8x384xf32> to vector<8x128xf32>
    %25 = arith.mulf %24, %11 : vector<8x128xf32>
    %26 = vector.extract_strided_slice %21 {offsets = [0, 0], sizes = [8, 128], strides = [1, 1]} : vector<8x384xf32> to vector<8x128xf32>
    %27 = arith.mulf %26, %23 : vector<8x128xf32>
    %28 = arith.addf %25, %27 : vector<8x128xf32>
    %29 = vector.extract_strided_slice %21 {offsets = [0, 256], sizes = [8, 128], strides = [1, 1]} : vector<8x384xf32> to vector<8x128xf32>
    %30 = math.tanh %28 : vector<8x128xf32>
    %31 = arith.mulf %29, %30 : vector<8x128xf32>
    %c0_18 = arith.constant 0 : index
    %c0_19 = arith.constant 0 : index
    %c0_20 = arith.constant 0 : index
    %32 = vector.load %arg5[%c0_18, %c0_19, %c0_20] : memref<8x8x128xf32, #tpu.memory_space<vmem>>, vector<1x8x128xf32>
    %33 = vector.shape_cast %32 : vector<1x8x128xf32> to vector<8x128xf32>
    %34 = vector.shape_cast %31 : vector<8x128xf32> to vector<1x8x128xf32>
    tpu.vector_store %arg5[%c0_18, %c0_19, %c0_20], %34 {strides = array<i32>} : memref<8x8x128xf32, #tpu.memory_space<vmem>>, vector<1x8x128xf32>,
    %c8 = arith.constant 8 : index
    %c0_21 = arith.constant 0 : index
    %35 = vector.load %arg8[%c8, %c0_21] : memref<64x512xf32, #tpu.memory_space<vmem>>, vector<8x512xf32>
    %c0_22 = arith.constant 0 : index
    %c0_23 = arith.constant 0 : index
    %36 = vector.load %arg3[%c0_22, %c0_23] : memref<128x512xf32, #tpu.memory_space<vmem>>, vector<128x512xf32>
    %cst_24 = arith.constant dense<0.000000e+00> : vector<8x512xf32>
    %37 = tpu.matmul %31, %36, %cst_24 {dimension_numbers = #tpu.dot_dimension_numbers<[1], [0], [0], [1], [0, 0, 1, 1], [], []>} : vector<8x128xf32>, vector<128x512xf32>, vector<8x512xf32> -> vector<8x512xf32>
    %38 = arith.addf %35, %37 : vector<8x512xf32>
    %39 = vector.extract_strided_slice %38 {offsets = [0, 0], sizes = [8, 384], strides = [1, 1]} : vector<8x512xf32> to vector<8x384xf32>
    %40 = arith.negf %39 : vector<8x384xf32>
    %41 = math.exp %40 : vector<8x384xf32>
    %cst_25 = arith.constant 1.000000e+00 : f32
    %42 = vector.broadcast %cst_25 : f32 to vector<8x384xf32>
    %43 = arith.addf %42, %41 : vector<8x384xf32>
    %44 = arith.divf %42, %43 : vector<8x384xf32>
    %45 = vector.extract_strided_slice %38 {offsets = [0, 384], sizes = [8, 128], strides = [1, 1]} : vector<8x512xf32> to vector<8x128xf32>
    %46 = math.tanh %45 : vector<8x128xf32>
    %47 = vector.extract_strided_slice %44 {offsets = [0, 128], sizes = [8, 128], strides = [1, 1]} : vector<8x384xf32> to vector<8x128xf32>
    %48 = arith.mulf %47, %28 : vector<8x128xf32>
    %49 = vector.extract_strided_slice %44 {offsets = [0, 0], sizes = [8, 128], strides = [1, 1]} : vector<8x384xf32> to vector<8x128xf32>
    %50 = arith.mulf %49, %46 : vector<8x128xf32>
    %51 = arith.addf %48, %50 : vector<8x128xf32>
    %52 = vector.extract_strided_slice %44 {offsets = [0, 256], sizes = [8, 128], strides = [1, 1]} : vector<8x384xf32> to vector<8x128xf32>
    %53 = math.tanh %51 : vector<8x128xf32>
    %54 = arith.mulf %52, %53 : vector<8x128xf32>
    %c1 = arith.constant 1 : index
    %c0_26 = arith.constant 0 : index
    %c0_27 = arith.constant 0 : index
    %55 = vector.load %arg5[%c1, %c0_26, %c0_27] : memref<8x8x128xf32, #tpu.memory_space<vmem>>, vector<1x8x128xf32>
    %56 = vector.shape_cast %55 : vector<1x8x128xf32> to vector<8x128xf32>
    %57 = vector.shape_cast %54 : vector<8x128xf32> to vector<1x8x128xf32>
    tpu.vector_store %arg5[%c1, %c0_26, %c0_27], %57 {strides = array<i32>} : memref<8x8x128xf32, #tpu.memory_space<vmem>>, vector<1x8x128xf32>,
    %c16 = arith.constant 16 : index
    %c0_28 = arith.constant 0 : index
    %58 = vector.load %arg8[%c16, %c0_28] : memref<64x512xf32, #tpu.memory_space<vmem>>, vector<8x512xf32>
    %c0_29 = arith.constant 0 : index
    %c0_30 = arith.constant 0 : index
    %59 = vector.load %arg3[%c0_29, %c0_30] : memref<128x512xf32, #tpu.memory_space<vmem>>, vector<128x512xf32>
    %cst_31 = arith.constant dense<0.000000e+00> : vector<8x512xf32>
    %60 = tpu.matmul %54, %59, %cst_31 {dimension_numbers = #tpu.dot_dimension_numbers<[1], [0], [0], [1], [0, 0, 1, 1], [], []>} : vector<8x128xf32>, vector<128x512xf32>, vector<8x512xf32> -> vector<8x512xf32>
    %61 = arith.addf %58, %60 : vector<8x512xf32>
    %62 = vector.extract_strided_slice %61 {offsets = [0, 0], sizes = [8, 384], strides = [1, 1]} : vector<8x512xf32> to vector<8x384xf32>
    %63 = arith.negf %62 : vector<8x384xf32>
    %64 = math.exp %63 : vector<8x384xf32>
    %cst_32 = arith.constant 1.000000e+00 : f32
    %65 = vector.broadcast %cst_32 : f32 to vector<8x384xf32>
    %66 = arith.addf %65, %64 : vector<8x384xf32>
    %67 = arith.divf %65, %66 : vector<8x384xf32>
    %68 = vector.extract_strided_slice %61 {offsets = [0, 384], sizes = [8, 128], strides = [1, 1]} : vector<8x512xf32> to vector<8x128xf32>
    %69 = math.tanh %68 : vector<8x128xf32>
    %70 = vector.extract_strided_slice %67 {offsets = [0, 128], sizes = [8, 128], strides = [1, 1]} : vector<8x384xf32> to vector<8x128xf32>
    %71 = arith.mulf %70, %51 : vector<8x128xf32>
    %72 = vector.extract_strided_slice %67 {offsets = [0, 0], sizes = [8, 128], strides = [1, 1]} : vector<8x384xf32> to vector<8x128xf32>
    %73 = arith.mulf %72, %69 : vector<8x128xf32>
    %74 = arith.addf %71, %73 : vector<8x128xf32>
    %75 = vector.extract_strided_slice %67 {offsets = [0, 256], sizes = [8, 128], strides = [1, 1]} : vector<8x384xf32> to vector<8x128xf32>
    %76 = math.tanh %74 : vector<8x128xf32>
    %77 = arith.mulf %75, %76 : vector<8x128xf32>
    %c2 = arith.constant 2 : index
    %c0_33 = arith.constant 0 : index
    %c0_34 = arith.constant 0 : index
    %78 = vector.load %arg5[%c2, %c0_33, %c0_34] : memref<8x8x128xf32, #tpu.memory_space<vmem>>, vector<1x8x128xf32>
    %79 = vector.shape_cast %78 : vector<1x8x128xf32> to vector<8x128xf32>
    %80 = vector.shape_cast %77 : vector<8x128xf32> to vector<1x8x128xf32>
    tpu.vector_store %arg5[%c2, %c0_33, %c0_34], %80 {strides = array<i32>} : memref<8x8x128xf32, #tpu.memory_space<vmem>>, vector<1x8x128xf32>,
    %c24 = arith.constant 24 : index
    %c0_35 = arith.constant 0 : index
    %81 = vector.load %arg8[%c24, %c0_35] : memref<64x512xf32, #tpu.memory_space<vmem>>, vector<8x512xf32>
    %c0_36 = arith.constant 0 : index
    %c0_37 = arith.constant 0 : index
    %82 = vector.load %arg3[%c0_36, %c0_37] : memref<128x512xf32, #tpu.memory_space<vmem>>, vector<128x512xf32>
    %cst_38 = arith.constant dense<0.000000e+00> : vector<8x512xf32>
    %83 = tpu.matmul %77, %82, %cst_38 {dimension_numbers = #tpu.dot_dimension_numbers<[1], [0], [0], [1], [0, 0, 1, 1], [], []>} : vector<8x128xf32>, vector<128x512xf32>, vector<8x512xf32> -> vector<8x512xf32>
    %84 = arith.addf %81, %83 : vector<8x512xf32>
    %85 = vector.extract_strided_slice %84 {offsets = [0, 0], sizes = [8, 384], strides = [1, 1]} : vector<8x512xf32> to vector<8x384xf32>
    %86 = arith.negf %85 : vector<8x384xf32>
    %87 = math.exp %86 : vector<8x384xf32>
    %cst_39 = arith.constant 1.000000e+00 : f32
    %88 = vector.broadcast %cst_39 : f32 to vector<8x384xf32>
    %89 = arith.addf %88, %87 : vector<8x384xf32>
    %90 = arith.divf %88, %89 : vector<8x384xf32>
    %91 = vector.extract_strided_slice %84 {offsets = [0, 384], sizes = [8, 128], strides = [1, 1]} : vector<8x512xf32> to vector<8x128xf32>
    %92 = math.tanh %91 : vector<8x128xf32>
    %93 = vector.extract_strided_slice %90 {offsets = [0, 128], sizes = [8, 128], strides = [1, 1]} : vector<8x384xf32> to vector<8x128xf32>
    %94 = arith.mulf %93, %74 : vector<8x128xf32>
    %95 = vector.extract_strided_slice %90 {offsets = [0, 0], sizes = [8, 128], strides = [1, 1]} : vector<8x384xf32> to vector<8x128xf32>
    %96 = arith.mulf %95, %92 : vector<8x128xf32>
    %97 = arith.addf %94, %96 : vector<8x128xf32>
    %98 = vector.extract_strided_slice %90 {offsets = [0, 256], sizes = [8, 128], strides = [1, 1]} : vector<8x384xf32> to vector<8x128xf32>
    %99 = math.tanh %97 : vector<8x128xf32>
    %100 = arith.mulf %98, %99 : vector<8x128xf32>
    %c3 = arith.constant 3 : index
    %c0_40 = arith.constant 0 : index
    %c0_41 = arith.constant 0 : index
    %101 = vector.load %arg5[%c3, %c0_40, %c0_41] : memref<8x8x128xf32, #tpu.memory_space<vmem>>, vector<1x8x128xf32>
    %102 = vector.shape_cast %101 : vector<1x8x128xf32> to vector<8x128xf32>
    %103 = vector.shape_cast %100 : vector<8x128xf32> to vector<1x8x128xf32>
    tpu.vector_store %arg5[%c3, %c0_40, %c0_41], %103 {strides = array<i32>} : memref<8x8x128xf32, #tpu.memory_space<vmem>>, vector<1x8x128xf32>,
    %c32 = arith.constant 32 : index
    %c0_42 = arith.constant 0 : index
    %104 = vector.load %arg8[%c32, %c0_42] : memref<64x512xf32, #tpu.memory_space<vmem>>, vector<8x512xf32>
    %c0_43 = arith.constant 0 : index
    %c0_44 = arith.constant 0 : index
    %105 = vector.load %arg3[%c0_43, %c0_44] : memref<128x512xf32, #tpu.memory_space<vmem>>, vector<128x512xf32>
    %cst_45 = arith.constant dense<0.000000e+00> : vector<8x512xf32>
    %106 = tpu.matmul %100, %105, %cst_45 {dimension_numbers = #tpu.dot_dimension_numbers<[1], [0], [0], [1], [0, 0, 1, 1], [], []>} : vector<8x128xf32>, vector<128x512xf32>, vector<8x512xf32> -> vector<8x512xf32>
    %107 = arith.addf %104, %106 : vector<8x512xf32>
    %108 = vector.extract_strided_slice %107 {offsets = [0, 0], sizes = [8, 384], strides = [1, 1]} : vector<8x512xf32> to vector<8x384xf32>
    %109 = arith.negf %108 : vector<8x384xf32>
    %110 = math.exp %109 : vector<8x384xf32>
    %cst_46 = arith.constant 1.000000e+00 : f32
    %111 = vector.broadcast %cst_46 : f32 to vector<8x384xf32>
    %112 = arith.addf %111, %110 : vector<8x384xf32>
    %113 = arith.divf %111, %112 : vector<8x384xf32>
    %114 = vector.extract_strided_slice %107 {offsets = [0, 384], sizes = [8, 128], strides = [1, 1]} : vector<8x512xf32> to vector<8x128xf32>
    %115 = math.tanh %114 : vector<8x128xf32>
    %116 = vector.extract_strided_slice %113 {offsets = [0, 128], sizes = [8, 128], strides = [1, 1]} : vector<8x384xf32> to vector<8x128xf32>
    %117 = arith.mulf %116, %97 : vector<8x128xf32>
    %118 = vector.extract_strided_slice %113 {offsets = [0, 0], sizes = [8, 128], strides = [1, 1]} : vector<8x384xf32> to vector<8x128xf32>
    %119 = arith.mulf %118, %115 : vector<8x128xf32>
    %120 = arith.addf %117, %119 : vector<8x128xf32>
    %121 = vector.extract_strided_slice %113 {offsets = [0, 256], sizes = [8, 128], strides = [1, 1]} : vector<8x384xf32> to vector<8x128xf32>
    %122 = math.tanh %120 : vector<8x128xf32>
    %123 = arith.mulf %121, %122 : vector<8x128xf32>
    %c4 = arith.constant 4 : index
    %c0_47 = arith.constant 0 : index
    %c0_48 = arith.constant 0 : index
    %124 = vector.load %arg5[%c4, %c0_47, %c0_48] : memref<8x8x128xf32, #tpu.memory_space<vmem>>, vector<1x8x128xf32>
    %125 = vector.shape_cast %124 : vector<1x8x128xf32> to vector<8x128xf32>
    %126 = vector.shape_cast %123 : vector<8x128xf32> to vector<1x8x128xf32>
    tpu.vector_store %arg5[%c4, %c0_47, %c0_48], %126 {strides = array<i32>} : memref<8x8x128xf32, #tpu.memory_space<vmem>>, vector<1x8x128xf32>,
    %c40 = arith.constant 40 : index
    %c0_49 = arith.constant 0 : index
    %127 = vector.load %arg8[%c40, %c0_49] : memref<64x512xf32, #tpu.memory_space<vmem>>, vector<8x512xf32>
    %c0_50 = arith.constant 0 : index
    %c0_51 = arith.constant 0 : index
    %128 = vector.load %arg3[%c0_50, %c0_51] : memref<128x512xf32, #tpu.memory_space<vmem>>, vector<128x512xf32>
    %cst_52 = arith.constant dense<0.000000e+00> : vector<8x512xf32>
    %129 = tpu.matmul %123, %128, %cst_52 {dimension_numbers = #tpu.dot_dimension_numbers<[1], [0], [0], [1], [0, 0, 1, 1], [], []>} : vector<8x128xf32>, vector<128x512xf32>, vector<8x512xf32> -> vector<8x512xf32>
    %130 = arith.addf %127, %129 : vector<8x512xf32>
    %131 = vector.extract_strided_slice %130 {offsets = [0, 0], sizes = [8, 384], strides = [1, 1]} : vector<8x512xf32> to vector<8x384xf32>
    %132 = arith.negf %131 : vector<8x384xf32>
    %133 = math.exp %132 : vector<8x384xf32>
    %cst_53 = arith.constant 1.000000e+00 : f32
    %134 = vector.broadcast %cst_53 : f32 to vector<8x384xf32>
    %135 = arith.addf %134, %133 : vector<8x384xf32>
    %136 = arith.divf %134, %135 : vector<8x384xf32>
    %137 = vector.extract_strided_slice %130 {offsets = [0, 384], sizes = [8, 128], strides = [1, 1]} : vector<8x512xf32> to vector<8x128xf32>
    %138 = math.tanh %137 : vector<8x128xf32>
    %139 = vector.extract_strided_slice %136 {offsets = [0, 128], sizes = [8, 128], strides = [1, 1]} : vector<8x384xf32> to vector<8x128xf32>
    %140 = arith.mulf %139, %120 : vector<8x128xf32>
    %141 = vector.extract_strided_slice %136 {offsets = [0, 0], sizes = [8, 128], strides = [1, 1]} : vector<8x384xf32> to vector<8x128xf32>
    %142 = arith.mulf %141, %138 : vector<8x128xf32>
    %143 = arith.addf %140, %142 : vector<8x128xf32>
    %144 = vector.extract_strided_slice %136 {offsets = [0, 256], sizes = [8, 128], strides = [1, 1]} : vector<8x384xf32> to vector<8x128xf32>
    %145 = math.tanh %143 : vector<8x128xf32>
    %146 = arith.mulf %144, %145 : vector<8x128xf32>
    %c5 = arith.constant 5 : index
    %c0_54 = arith.constant 0 : index
    %c0_55 = arith.constant 0 : index
    %147 = vector.load %arg5[%c5, %c0_54, %c0_55] : memref<8x8x128xf32, #tpu.memory_space<vmem>>, vector<1x8x128xf32>
    %148 = vector.shape_cast %147 : vector<1x8x128xf32> to vector<8x128xf32>
    %149 = vector.shape_cast %146 : vector<8x128xf32> to vector<1x8x128xf32>
    tpu.vector_store %arg5[%c5, %c0_54, %c0_55], %149 {strides = array<i32>} : memref<8x8x128xf32, #tpu.memory_space<vmem>>, vector<1x8x128xf32>,
    %c48 = arith.constant 48 : index
    %c0_56 = arith.constant 0 : index
    %150 = vector.load %arg8[%c48, %c0_56] : memref<64x512xf32, #tpu.memory_space<vmem>>, vector<8x512xf32>
    %c0_57 = arith.constant 0 : index
    %c0_58 = arith.constant 0 : index
    %151 = vector.load %arg3[%c0_57, %c0_58] : memref<128x512xf32, #tpu.memory_space<vmem>>, vector<128x512xf32>
    %cst_59 = arith.constant dense<0.000000e+00> : vector<8x512xf32>
    %152 = tpu.matmul %146, %151, %cst_59 {dimension_numbers = #tpu.dot_dimension_numbers<[1], [0], [0], [1], [0, 0, 1, 1], [], []>} : vector<8x128xf32>, vector<128x512xf32>, vector<8x512xf32> -> vector<8x512xf32>
    %153 = arith.addf %150, %152 : vector<8x512xf32>
    %154 = vector.extract_strided_slice %153 {offsets = [0, 0], sizes = [8, 384], strides = [1, 1]} : vector<8x512xf32> to vector<8x384xf32>
    %155 = arith.negf %154 : vector<8x384xf32>
    %156 = math.exp %155 : vector<8x384xf32>
    %cst_60 = arith.constant 1.000000e+00 : f32
    %157 = vector.broadcast %cst_60 : f32 to vector<8x384xf32>
    %158 = arith.addf %157, %156 : vector<8x384xf32>
    %159 = arith.divf %157, %158 : vector<8x384xf32>
    %160 = vector.extract_strided_slice %153 {offsets = [0, 384], sizes = [8, 128], strides = [1, 1]} : vector<8x512xf32> to vector<8x128xf32>
    %161 = math.tanh %160 : vector<8x128xf32>
    %162 = vector.extract_strided_slice %159 {offsets = [0, 128], sizes = [8, 128], strides = [1, 1]} : vector<8x384xf32> to vector<8x128xf32>
    %163 = arith.mulf %162, %143 : vector<8x128xf32>
    %164 = vector.extract_strided_slice %159 {offsets = [0, 0], sizes = [8, 128], strides = [1, 1]} : vector<8x384xf32> to vector<8x128xf32>
    %165 = arith.mulf %164, %161 : vector<8x128xf32>
    %166 = arith.addf %163, %165 : vector<8x128xf32>
    %167 = vector.extract_strided_slice %159 {offsets = [0, 256], sizes = [8, 128], strides = [1, 1]} : vector<8x384xf32> to vector<8x128xf32>
    %168 = math.tanh %166 : vector<8x128xf32>
    %169 = arith.mulf %167, %168 : vector<8x128xf32>
    %c6 = arith.constant 6 : index
    %c0_61 = arith.constant 0 : index
    %c0_62 = arith.constant 0 : index
    %170 = vector.load %arg5[%c6, %c0_61, %c0_62] : memref<8x8x128xf32, #tpu.memory_space<vmem>>, vector<1x8x128xf32>
    %171 = vector.shape_cast %170 : vector<1x8x128xf32> to vector<8x128xf32>
    %172 = vector.shape_cast %169 : vector<8x128xf32> to vector<1x8x128xf32>
    tpu.vector_store %arg5[%c6, %c0_61, %c0_62], %172 {strides = array<i32>} : memref<8x8x128xf32, #tpu.memory_space<vmem>>, vector<1x8x128xf32>,
    %c56 = arith.constant 56 : index
    %c0_63 = arith.constant 0 : index
    %173 = vector.load %arg8[%c56, %c0_63] : memref<64x512xf32, #tpu.memory_space<vmem>>, vector<8x512xf32>
    %c0_64 = arith.constant 0 : index
    %c0_65 = arith.constant 0 : index
    %174 = vector.load %arg3[%c0_64, %c0_65] : memref<128x512xf32, #tpu.memory_space<vmem>>, vector<128x512xf32>
    %cst_66 = arith.constant dense<0.000000e+00> : vector<8x512xf32>
    %175 = tpu.matmul %169, %174, %cst_66 {dimension_numbers = #tpu.dot_dimension_numbers<[1], [0], [0], [1], [0, 0, 1, 1], [], []>} : vector<8x128xf32>, vector<128x512xf32>, vector<8x512xf32> -> vector<8x512xf32>
    %176 = arith.addf %173, %175 : vector<8x512xf32>
    %177 = vector.extract_strided_slice %176 {offsets = [0, 0], sizes = [8, 384], strides = [1, 1]} : vector<8x512xf32> to vector<8x384xf32>
    %178 = arith.negf %177 : vector<8x384xf32>
    %179 = math.exp %178 : vector<8x384xf32>
    %cst_67 = arith.constant 1.000000e+00 : f32
    %180 = vector.broadcast %cst_67 : f32 to vector<8x384xf32>
    %181 = arith.addf %180, %179 : vector<8x384xf32>
    %182 = arith.divf %180, %181 : vector<8x384xf32>
    %183 = vector.extract_strided_slice %176 {offsets = [0, 384], sizes = [8, 128], strides = [1, 1]} : vector<8x512xf32> to vector<8x128xf32>
    %184 = math.tanh %183 : vector<8x128xf32>
    %185 = vector.extract_strided_slice %182 {offsets = [0, 128], sizes = [8, 128], strides = [1, 1]} : vector<8x384xf32> to vector<8x128xf32>
    %186 = arith.mulf %185, %166 : vector<8x128xf32>
    %187 = vector.extract_strided_slice %182 {offsets = [0, 0], sizes = [8, 128], strides = [1, 1]} : vector<8x384xf32> to vector<8x128xf32>
    %188 = arith.mulf %187, %184 : vector<8x128xf32>
    %189 = arith.addf %186, %188 : vector<8x128xf32>
    %190 = vector.extract_strided_slice %182 {offsets = [0, 256], sizes = [8, 128], strides = [1, 1]} : vector<8x384xf32> to vector<8x128xf32>
    %191 = math.tanh %189 : vector<8x128xf32>
    %192 = arith.mulf %190, %191 : vector<8x128xf32>
    %c7 = arith.constant 7 : index
    %c0_68 = arith.constant 0 : index
    %c0_69 = arith.constant 0 : index
    %193 = vector.load %arg5[%c7, %c0_68, %c0_69] : memref<8x8x128xf32, #tpu.memory_space<vmem>>, vector<1x8x128xf32>
    %194 = vector.shape_cast %193 : vector<1x8x128xf32> to vector<8x128xf32>
    %195 = vector.shape_cast %192 : vector<8x128xf32> to vector<1x8x128xf32>
    tpu.vector_store %arg5[%c7, %c0_68, %c0_69], %195 {strides = array<i32>} : memref<8x8x128xf32, #tpu.memory_space<vmem>>, vector<1x8x128xf32>,
    %c0_70 = arith.constant 0 : index
    %c0_71 = arith.constant 0 : index
    %196 = vector.load %arg6[%c0_70, %c0_71] : memref<8x128xf32, #tpu.memory_space<vmem>>, vector<8x128xf32>
    tpu.vector_store %arg6[%c0_70, %c0_71], %192 {strides = array<i32>} : memref<8x128xf32, #tpu.memory_space<vmem>>, vector<8x128xf32>,
    %c0_72 = arith.constant 0 : index
    %c0_73 = arith.constant 0 : index
    %197 = vector.load %arg7[%c0_72, %c0_73] : memref<8x128xf32, #tpu.memory_space<vmem>>, vector<8x128xf32>
    tpu.vector_store %arg7[%c0_72, %c0_73], %189 {strides = array<i32>} : memref<8x128xf32, #tpu.memory_space<vmem>>, vector<8x128xf32>,
    return
  }
  func.func @transform_0(%arg0: i32) -> (i32, i32) {
    %c0_i32 = arith.constant 0 : i32
    %c0_i32_0 = arith.constant 0 : i32
    return %arg0, %c0_i32 : i32, i32
  }
  func.func @transform_1(%arg0: i32) -> (i32, i32) {
    %c0_i32 = arith.constant 0 : i32
    %c0_i32_0 = arith.constant 0 : i32
    %c0_i32_1 = arith.constant 0 : i32
    return %c0_i32, %c0_i32_0 : i32, i32
  }
  func.func @transform_2(%arg0: i32) -> (i32, i32) {
    %c0_i32 = arith.constant 0 : i32
    %c0_i32_0 = arith.constant 0 : i32
    %c0_i32_1 = arith.constant 0 : i32
    return %c0_i32, %c0_i32_0 : i32, i32
  }
  func.func @transform_3(%arg0: i32) -> (i32, i32) {
    %c0_i32 = arith.constant 0 : i32
    %c0_i32_0 = arith.constant 0 : i32
    %c0_i32_1 = arith.constant 0 : i32
    return %c0_i32, %c0_i32_0 : i32, i32
  }
  func.func @transform_4(%arg0: i32) -> (i32, i32, i32) {
    %c0_i32 = arith.constant 0 : i32
    %c0_i32_0 = arith.constant 0 : i32
    %c0_i32_1 = arith.constant 0 : i32
    return %arg0, %c0_i32, %c0_i32_0 : i32, i32, i32
  }
  func.func @transform_5(%arg0: i32) -> (i32, i32) {
    %c0_i32 = arith.constant 0 : i32
    %c0_i32_0 = arith.constant 0 : i32
    %c0_i32_1 = arith.constant 0 : i32
    return %c0_i32, %c0_i32_0 : i32, i32
  }
  func.func @transform_6(%arg0: i32) -> (i32, i32) {
    %c0_i32 = arith.constant 0 : i32
    %c0_i32_0 = arith.constant 0 : i32
    %c0_i32_1 = arith.constant 0 : i32
    return %c0_i32, %c0_i32_0 : i32, i32
  }
}

</mosaic_0001>

<llo_original>
// kernel: tpu_custom_call.1
$region0: #{tpu_custom_call.1}
  #allocation0 [shape = 'u32[]', space=smem, size = 0x4, offset = 0x4, fixed_abs, tag = 'smem constant byte address 0x4 - core index']
  #allocation1 [shape = 'u32[144,128]{1,0:T(1,128)}', space=vmem, size = 0x12000, scoped, tag = 'internal scratch']
  #allocation2 [shape = 'f32[64,512]{1,0:T(8,128)}', space=vmem, size = 0x20000, scoped, tag = 'scratch operand']
  %s0 = inlined_call_operand.vmem [shape: f32[64,4], index: 0, kind: input, shape index: {}]
  %s1 = inlined_call_operand.vmem [shape: f32[4,512], index: 1, kind: input, shape index: {}]
  %s2 = inlined_call_operand.hbm [shape: f32[128,512], index: 2, kind: input, shape index: {}]
  %s3 = inlined_call_operand.vmem [shape: f32[1,512], index: 3, kind: input, shape index: {}]
  %s4 = inlined_call_operand.hbm [shape: f32[8,8,128], index: 4, kind: output, shape index: {0}]
  %s5 = inlined_call_operand.hbm [shape: f32[8,128], index: 5, kind: output, shape index: {1}]
  %s6 = inlined_call_operand.hbm [shape: f32[8,128], index: 6, kind: output, shape index: {2}]
  %7 = xla_tuple %s4, %s5, %s6
  %s8 = sld [smem:[#allocation0]]
  $region50: #{tpu_custom_call.1} parent=0
    _
  %s10 = ssub.s32 1, %s8
  %s11 = scalar_select 0, %s10, %s8
  $region1: #{tpu_custom_call.1} parent=0
    #allocation3 [shape = 'u8[262144]{0}', space=vmem, size = 0x40000, scoped, tag = 'input window, operand 2, single buffered']
    #allocation4 [shape = 's32[1]{0}', space=sflag, size = 0x4, scoped, tag = 'scoped memory for tpu_custom_call.1']
    #allocation5 [shape = 's32[1]{0}', space=sflag, size = 0x4, scoped, tag = 'scoped memory for tpu_custom_call.1']
    #allocation6 [shape = 'u8[32768]{0}', space=vmem, size = 0x8000, scoped, tag = 'output window, operand 0, single buffered']
    #allocation7 [shape = 'u8[4096]{0}', space=vmem, size = 0x1000, scoped, tag = 'output window, operand 1, single buffered']
    #allocation8 [shape = 's32[1]{0}', space=sflag, size = 0x4, scoped, tag = 'scoped memory for tpu_custom_call.1']
    #allocation9 [shape = 'u8[4096]{0}', space=vmem, size = 0x1000, scoped, tag = 'output window, operand 2, single buffered']
    %12 = vsyncpa [#allocation4], 0
    %13 = vsyncpa [#allocation5], 0
    %14 = vsyncpa [#allocation8], 0
    // Predicated region
    $region2: #{tpu_custom_call.1} parent=1 // pred_check
      _
    $region3: #{tpu_custom_call.1} parent=1 // pred_check_branch
      %16 = sbr.rel (0) target = $region5
    $region4: #{tpu_custom_call.1} parent=1 // pred_region
      _
    $region5: #{tpu_custom_call.1} parent=1 // pred_fallthru
      _
    // Predicated region
    $region6: #{tpu_custom_call.1} parent=1 // pred_check
      _
    $region7: #{tpu_custom_call.1} parent=1 // pred_check_branch
      %18 = sbr.rel (0) target = $region9
    $region8: #{tpu_custom_call.1} parent=1 // pred_region
      _
    $region9: #{tpu_custom_call.1} parent=1 // pred_fallthru
      _
    // Predicated region
    $region10: #{tpu_custom_call.1} parent=1 // pred_check
      _
    $region11: #{tpu_custom_call.1} parent=1 // pred_check_branch
      %20 = sbr.rel (0) target = $region13
    $region12: #{tpu_custom_call.1} parent=1 // pred_region
      %s22 = ssub.s32 8192, 8192
      %23 = vsyncadd [#allocation4], %s22
      %s24 = sshll.u32 [#allocation3], 4
      %s25 = int_to_ptr.vmem [resolvable:$true] %s24
      %30 = dma.hbm_to_vmem [thread:$0]  %s2, 8192, %s25, [#allocation4], 512, 512, 32
    $region13: #{tpu_custom_call.1} parent=1 // pred_fallthru
      _
    // Predicated region
    $region14: #{tpu_custom_call.1} parent=1 // pred_check
      _
    $region15: #{tpu_custom_call.1} parent=1 // pred_check_branch
      %32 = sbr.rel (0) target = $region17
    $region16: #{tpu_custom_call.1} parent=1 // pred_region
      _
    $region17: #{tpu_custom_call.1} parent=1 // pred_fallthru
      _
    // Predicated region
    $region18: #{tpu_custom_call.1} parent=1 // pred_check
      _
    $region19: #{tpu_custom_call.1} parent=1 // pred_check_branch
      %34 = sbr.rel (0) target = $region21
    $region20: #{tpu_custom_call.1} parent=1 // pred_region
      %35 = dma.done [#allocation4], 8192
    $region21: #{tpu_custom_call.1} parent=1 // pred_fallthru
      _
    %p36 = scmp.eq.s32.totalorder 0, 0
    // Predicated region
    $region22: #{tpu_custom_call.1} parent=1 // pred_check
      %p37 = pneg %p36
    $region23: #{tpu_custom_call.1} parent=1 // pred_check_branch
      %39 = sbr.rel (%p37) target = $region25
    $region24: #{tpu_custom_call.1} parent=1 // pred_region
      %40 = vst [vmem:[#allocation7] sm:$0xff] 0.0
      %41 = vst [vmem:[#allocation9] sm:$0xff] 0.0
    $region25: #{tpu_custom_call.1} parent=1 // pred_fallthru
      _
    %v42 = vld [vmem:[%s0] sm:$0xff]
    %v43 = vld [vmem:[%s0 + $0x8] sm:$0xff]
    %v44 = vld [vmem:[%s0 + $0x10] sm:$0xff]
    %v45 = vld [vmem:[%s0 + $0x18] sm:$0xff]
    %v46 = vld [vmem:[%s0 + $0x20] sm:$0xff]
    %v47 = vld [vmem:[%s0 + $0x28] sm:$0xff]
    %v48 = vld [vmem:[%s0 + $0x30] sm:$0xff]
    %v49 = vld [vmem:[%s0 + $0x38] sm:$0xff]
    %v50 = vld [vmem:[%s1] sm:$0xff]
    %v51 = vld [vmem:[%s1 + $0x8] sm:$0xff]
    %v52 = vld [vmem:[%s3] sm:$0xf]
    %v54 = vlaneseq
    %v55 = vshrl.u32 %v54, 7
    %v56 = vsub.s32 0, %v55
    %v57 = vrot.slane %v52, %v56
    %v58 = vlaneseq
    %v59 = vshrl.u32 %v58, 7
    %v60 = vsub.s32 1, %v59
    %v61 = vrot.slane %v52, %v60
    %v62 = vlaneseq
    %v63 = vshrl.u32 %v62, 7
    %v64 = vsub.s32 2, %v63
    %v65 = vrot.slane %v52, %v64
    %v66 = vlaneseq
    %v67 = vshrl.u32 %v66, 7
    %v68 = vsub.s32 3, %v67
    %v69 = vrot.slane %v52, %v68
    %v76 = vcombine.high %v50, %v50
    %v77 = vcombine.high %v51, %v51
    %vm78 = vcmask 31744
    %v80 = vsel %vm78, %v42, 0
    %v83 = vsel %vm78, %v43, 0
    %v86 = vsel %vm78, %v44, 0
    %v89 = vsel %vm78, %v45, 0
    %v92 = vsel %vm78, %v46, 0
    %v95 = vsel %vm78, %v47, 0
    %v98 = vsel %vm78, %v48, 0
    %v101 = vsel %vm78, %v49, 0
    %vm103 = vcmask 1043456
    %v104 = vsel %vm103, %v50, 0
    %v106 = vsel %vm103, %v76, 0
    %v108 = vsel %vm103, %v51, 0
    %v110 = vsel %vm103, %v77, 0
    %112 = vmatprep.subr.mxu0 %v106
    %113 = vmatpush1.msra.mxu0 %v104
    %114 = vmatprep.subr.mxu0 0.0
    %115 = vmatpush1.msra.mxu0 0.0
    %116 = vmatprep.subr.mxu0 0.0
    %117 = vmatpush1.msra.mxu0 0.0
    %118 = vmatprep.subr.mxu0 0.0
    %119 = vmatpush1.msra.mxu0 0.0
    %120 = vmatprep.subr.mxu0 0.0
    %121 = vmatpush1.msra.mxu0 0.0
    %122 = vmatprep.subr.mxu0 0.0
    %123 = vmatpush1.msra.mxu0 0.0
    %124 = vmatprep.subr.mxu0 0.0
    %125 = vmatpush1.msra.mxu0 0.0
    %126 = vmatprep.subr.mxu0 0.0
    %127 = vmatpush1.msra.mxu0 0.0
    %128 = vmatprep.subr.mxu0 0.0
    %129 = vmatpush1.msra.mxu0 0.0
    %130 = vmatprep.subr.mxu0 0.0
    %131 = vmatpush1.msra.mxu0 0.0
    %132 = vmatprep.subr.mxu0 0.0
    %133 = vmatpush1.msra.mxu0 0.0
    %134 = vmatprep.subr.mxu0 0.0
    %135 = vmatpush1.msra.mxu0 0.0
    %136 = vmatprep.subr.mxu0 0.0
    %137 = vmatpush1.msra.mxu0 0.0
    %138 = vmatprep.subr.mxu0 0.0
    %139 = vmatpush1.msra.mxu0 0.0
    %140 = vmatprep.subr.mxu0 0.0
    %141 = vmatpush1.msra.mxu0 0.0
    %142 = vmatprep.subr.mxu0 0.0
    %143 = vmatpush1.msra.mxu0 0.0
    %144 = vmatprep.subr.mxu0 0.0
    %145 = vmatpush1.msra.mxu0 0.0
    %146 = vmatprep.subr.mxu0 0.0
    %147 = vmatpush1.msra.mxu0 0.0
    %148 = vmatprep.subr.mxu0 0.0
    %149 = vmatpush1.msra.mxu0 0.0
    %150 = vmatprep.subr.mxu0 0.0
    %151 = vmatpush1.msra.mxu0 0.0
    %152 = vmatprep.subr.mxu0 0.0
    %153 = vmatpush1.msra.mxu0 0.0
    %154 = vmatprep.subr.mxu0 0.0
    %155 = vmatpush1.msra.mxu0 0.0
    %156 = vmatprep.subr.mxu0 0.0
    %157 = vmatpush1.msra.mxu0 0.0
    %158 = vmatprep.subr.mxu0 0.0
    %159 = vmatpush1.msra.mxu0 0.0
    %160 = vmatprep.subr.mxu0 0.0
    %161 = vmatpush1.msra.mxu0 0.0
    %162 = vmatprep.subr.mxu0 0.0
    %163 = vmatpush1.msra.mxu0 0.0
    %164 = vmatprep.subr.mxu0 0.0
    %165 = vmatpush1.msra.mxu0 0.0
    %166 = vmatprep.subr.mxu0 0.0
    %167 = vmatpush1.msra.mxu0 0.0
    %168 = vmatprep.subr.mxu0 0.0
    %169 = vmatpush1.msra.mxu0 0.0
    %170 = vmatprep.subr.mxu0 0.0
    %171 = vmatpush1.msra.mxu0 0.0
    %172 = vmatprep.subr.mxu0 0.0
    %173 = vmatpush1.msra.mxu0 0.0
    %174 = vmatprep.subr.mxu0 0.0
    %175 = vmatpush1.msra.mxu0 0.0
    %176 = vmatprep.mubr.f32.mxu0 0.0
    %177 = vmatmul.mubr.f32.gmra.mrb[0].mxu0 %v80
    %v178 = vpop.f32.mrb[0].mxu0
    %v179 = vadd.f32 %v57, %v178
    %v180 = vpop.f32.mrb[0].mxu0
    %v181 = vadd.f32 %v61, %v180
    %182 = vmatprep.mubr.f32.mxu0 0.0
    %183 = vmatmul.mubr.f32.gmra.mrb[0].mxu0 %v83
    %v184 = vpop.f32.mrb[0].mxu0
    %v185 = vadd.f32 %v57, %v184
    %v186 = vpop.f32.mrb[0].mxu0
    %v187 = vadd.f32 %v61, %v186
    %188 = vmatprep.mubr.f32.mxu0 0.0
    %189 = vmatmul.mubr.f32.gmra.mrb[0].mxu0 %v86
    %v190 = vpop.f32.mrb[0].mxu0
    %v191 = vadd.f32 %v57, %v190
    %v192 = vpop.f32.mrb[0].mxu0
    %v193 = vadd.f32 %v61, %v192
    %194 = vmatprep.mubr.f32.mxu0 0.0
    %195 = vmatmul.mubr.f32.gmra.mrb[0].mxu0 %v89
    %v196 = vpop.f32.mrb[0].mxu0
    %v197 = vadd.f32 %v57, %v196
    %v198 = vpop.f32.mrb[0].mxu0
    %v199 = vadd.f32 %v61, %v198
    %200 = vmatprep.mubr.f32.mxu0 0.0
    %201 = vmatmul.mubr.f32.gmra.mrb[0].mxu0 %v92
    %v202 = vpop.f32.mrb[0].mxu0
    %v203 = vadd.f32 %v57, %v202
    %v204 = vpop.f32.mrb[0].mxu0
    %v205 = vadd.f32 %v61, %v204
    %206 = vmatprep.mubr.f32.mxu0 0.0
    %207 = vmatmul.mubr.f32.gmra.mrb[0].mxu0 %v95
    %v208 = vpop.f32.mrb[0].mxu0
    %v209 = vadd.f32 %v57, %v208
    %v210 = vpop.f32.mrb[0].mxu0
    %v211 = vadd.f32 %v61, %v210
    %212 = vmatprep.mubr.f32.mxu0 0.0
    %213 = vmatmul.mubr.f32.gmra.mrb[0].mxu0 %v98
    %v214 = vpop.f32.mrb[0].mxu0
    %v215 = vadd.f32 %v57, %v214
    %v216 = vpop.f32.mrb[0].mxu0
    %v217 = vadd.f32 %v61, %v216
    %218 = vmatprep.mubr.f32.mxu0 0.0
    %219 = vmatmul.mubr.f32.gmra.mrb[0].mxu0 %v101
    %v220 = vpop.f32.mrb[0].mxu0
    %v221 = vadd.f32 %v57, %v220
    %v222 = vpop.f32.mrb[0].mxu0
    %v223 = vadd.f32 %v61, %v222
    %224 = vdwg.mxu0
    %225 = vmatprep.subr.mxu0 %v110
    %226 = vmatpush1.msra.mxu0 %v108
    %227 = vmatprep.subr.mxu0 0.0
    %228 = vmatpush1.msra.mxu0 0.0
    %229 = vmatprep.subr.mxu0 0.0
    %230 = vmatpush1.msra.mxu0 0.0
    %231 = vmatprep.subr.mxu0 0.0
    %232 = vmatpush1.msra.mxu0 0.0
    %233 = vmatprep.subr.mxu0 0.0
    %234 = vmatpush1.msra.mxu0 0.0
    %235 = vmatprep.subr.mxu0 0.0
    %236 = vmatpush1.msra.mxu0 0.0
    %237 = vmatprep.subr.mxu0 0.0
    %238 = vmatpush1.msra.mxu0 0.0
    %239 = vmatprep.subr.mxu0 0.0
    %240 = vmatpush1.msra.mxu0 0.0
    %241 = vmatprep.subr.mxu0 0.0
    %242 = vmatpush1.msra.mxu0 0.0
    %243 = vmatprep.subr.mxu0 0.0
    %244 = vmatpush1.msra.mxu0 0.0
    %245 = vmatprep.subr.mxu0 0.0
    %246 = vmatpush1.msra.mxu0 0.0
    %247 = vmatprep.subr.mxu0 0.0
    %248 = vmatpush1.msra.mxu0 0.0
    %249 = vmatprep.subr.mxu0 0.0
    %250 = vmatpush1.msra.mxu0 0.0
    %251 = vmatprep.subr.mxu0 0.0
    %252 = vmatpush1.msra.mxu0 0.0
    %253 = vmatprep.subr.mxu0 0.0
    %254 = vmatpush1.msra.mxu0 0.0
    %255 = vmatprep.subr.mxu0 0.0
    %256 = vmatpush1.msra.mxu0 0.0
    %257 = vmatprep.subr.mxu0 0.0
    %258 = vmatpush1.msra.mxu0 0.0
    %259 = vmatprep.subr.mxu0 0.0
    %260 = vmatpush1.msra.mxu0 0.0
    %261 = vmatprep.subr.mxu0 0.0
    %262 = vmatpush1.msra.mxu0 0.0
    %263 = vmatprep.subr.mxu0 0.0
    %264 = vmatpush1.msra.mxu0 0.0
    %265 = vmatprep.subr.mxu0 0.0
    %266 = vmatpush1.msra.mxu0 0.0
    %267 = vmatprep.subr.mxu0 0.0
    %268 = vmatpush1.msra.mxu0 0.0
    %269 = vmatprep.subr.mxu0 0.0
    %270 = vmatpush1.msra.mxu0 0.0
    %271 = vmatprep.subr.mxu0 0.0
    %272 = vmatpush1.msra.mxu0 0.0
    %273 = vmatprep.subr.mxu0 0.0
    %274 = vmatpush1.msra.mxu0 0.0
    %275 = vmatprep.subr.mxu0 0.0
    %276 = vmatpush1.msra.mxu0 0.0
    %277 = vmatprep.subr.mxu0 0.0
    %278 = vmatpush1.msra.mxu0 0.0
    %279 = vmatprep.subr.mxu0 0.0
    %280 = vmatpush1.msra.mxu0 0.0
    %281 = vmatprep.subr.mxu0 0.0
    %282 = vmatpush1.msra.mxu0 0.0
    %283 = vmatprep.subr.mxu0 0.0
    %284 = vmatpush1.msra.mxu0 0.0
    %285 = vmatprep.subr.mxu0 0.0
    %286 = vmatpush1.msra.mxu0 0.0
    %287 = vmatprep.subr.mxu0 0.0
    %288 = vmatpush1.msra.mxu0 0.0
    %289 = vmatprep.mubr.f32.mxu0 0.0
    %290 = vmatmul.mubr.f32.gmra.mrb[0].mxu0 %v80
    %v291 = vpop.f32.mrb[0].mxu0
    %v292 = vadd.f32 %v65, %v291
    %v293 = vpop.f32.mrb[0].mxu0
    %v294 = vadd.f32 %v69, %v293
    %295 = vmatprep.mubr.f32.mxu0 0.0
    %296 = vmatmul.mubr.f32.gmra.mrb[0].mxu0 %v83
    %v297 = vpop.f32.mrb[0].mxu0
    %v298 = vadd.f32 %v65, %v297
    %v299 = vpop.f32.mrb[0].mxu0
    %v300 = vadd.f32 %v69, %v299
    %301 = vmatprep.mubr.f32.mxu0 0.0
    %302 = vmatmul.mubr.f32.gmra.mrb[0].mxu0 %v86
    %v303 = vpop.f32.mrb[0].mxu0
    %v304 = vadd.f32 %v65, %v303
    %v305 = vpop.f32.mrb[0].mxu0
    %v306 = vadd.f32 %v69, %v305
    %307 = vmatprep.mubr.f32.mxu0 0.0
    %308 = vmatmul.mubr.f32.gmra.mrb[0].mxu0 %v89
    %v309 = vpop.f32.mrb[0].mxu0
    %v310 = vadd.f32 %v65, %v309
    %v311 = vpop.f32.mrb[0].mxu0
    %v312 = vadd.f32 %v69, %v311
    %313 = vmatprep.mubr.f32.mxu0 0.0
    %314 = vmatmul.mubr.f32.gmra.mrb[0].mxu0 %v92
    %v315 = vpop.f32.mrb[0].mxu0
    %v316 = vadd.f32 %v65, %v315
    %v317 = vpop.f32.mrb[0].mxu0
    %v318 = vadd.f32 %v69, %v317
    %319 = vmatprep.mubr.f32.mxu0 0.0
    %320 = vmatmul.mubr.f32.gmra.mrb[0].mxu0 %v95
    %v321 = vpop.f32.mrb[0].mxu0
    %v322 = vadd.f32 %v65, %v321
    %v323 = vpop.f32.mrb[0].mxu0
    %v324 = vadd.f32 %v69, %v323
    %325 = vmatprep.mubr.f32.mxu0 0.0
    %326 = vmatmul.mubr.f32.gmra.mrb[0].mxu0 %v98
    %v327 = vpop.f32.mrb[0].mxu0
    %v328 = vadd.f32 %v65, %v327
    %v329 = vpop.f32.mrb[0].mxu0
    %v330 = vadd.f32 %v69, %v329
    %331 = vmatprep.mubr.f32.mxu0 0.0
    %332 = vmatmul.mubr.f32.gmra.mrb[0].mxu0 %v101
    %v333 = vpop.f32.mrb[0].mxu0
    %v334 = vadd.f32 %v65, %v333
    %v335 = vpop.f32.mrb[0].mxu0
    %v336 = vadd.f32 %v69, %v335
    %337 = vdwg.mxu0
    %338 = vst [vmem:[#allocation2] sm:$0xff] %v179
    %339 = vst [vmem:[#allocation2 + $0x8] sm:$0xff] %v181
    %340 = vst [vmem:[#allocation2 + $0x10] sm:$0xff] %v292
    %341 = vst [vmem:[#allocation2 + $0x18] sm:$0xff] %v294
    %342 = vst [vmem:[#allocation2 + $0x20] sm:$0xff] %v185
    %343 = vst [vmem:[#allocation2 + $0x28] sm:$0xff] %v187
    %344 = vst [vmem:[#allocation2 + $0x30] sm:$0xff] %v298
    %345 = vst [vmem:[#allocation2 + $0x38] sm:$0xff] %v300
    %346 = vst [vmem:[#allocation2 + $0x40] sm:$0xff] %v191
    %347 = vst [vmem:[#allocation2 + $0x48] sm:$0xff] %v193
    %348 = vst [vmem:[#allocation2 + $0x50] sm:$0xff] %v304
    %349 = vst [vmem:[#allocation2 + $0x58] sm:$0xff] %v306
    %350 = vst [vmem:[#allocation2 + $0x60] sm:$0xff] %v197
    %351 = vst [vmem:[#allocation2 + $0x68] sm:$0xff] %v199
    %352 = vst [vmem:[#allocation2 + $0x70] sm:$0xff] %v310
    %353 = vst [vmem:[#allocation2 + $0x78] sm:$0xff] %v312
    %354 = vst [vmem:[#allocation2 + $0x80] sm:$0xff] %v203
    %355 = vst [vmem:[#allocation2 + $0x88] sm:$0xff] %v205
    %356 = vst [vmem:[#allocation2 + $0x90] sm:$0xff] %v316
    %357 = vst [vmem:[#allocation2 + $0x98] sm:$0xff] %v318
    %358 = vst [vmem:[#allocation2 + $0xa0] sm:$0xff] %v209
    %359 = vst [vmem:[#allocation2 + $0xa8] sm:$0xff] %v211
    %360 = vst [vmem:[#allocation2 + $0xb0] sm:$0xff] %v322
    %361 = vst [vmem:[#allocation2 + $0xb8] sm:$0xff] %v324
    %362 = vst [vmem:[#allocation2 + $0xc0] sm:$0xff] %v215
    %363 = vst [vmem:[#allocation2 + $0xc8] sm:$0xff] %v217
    %364 = vst [vmem:[#allocation2 + $0xd0] sm:$0xff] %v328
    %365 = vst [vmem:[#allocation2 + $0xd8] sm:$0xff] %v330
    %366 = vst [vmem:[#allocation2 + $0xe0] sm:$0xff] %v221
    %367 = vst [vmem:[#allocation2 + $0xe8] sm:$0xff] %v223
    %368 = vst [vmem:[#allocation2 + $0xf0] sm:$0xff] %v334
    %369 = vst [vmem:[#allocation2 + $0xf8] sm:$0xff] %v336
    %v370 = vld [vmem:[#allocation7] sm:$0xff]
    %v371 = vld [vmem:[#allocation9] sm:$0xff]
    %v372 = vld [vmem:[#allocation2] sm:$0xff]
    %v373 = vld [vmem:[#allocation2 + $0x8] sm:$0xff]
    %v374 = vld [vmem:[#allocation2 + $0x10] sm:$0xff]
    %v375 = vld [vmem:[#allocation2 + $0x18] sm:$0xff]
    %v376 = vld [vmem:[#allocation3] sm:$0xff]
    %v377 = vld [vmem:[#allocation3 + $0x8] sm:$0xff]
    %v378 = vld [vmem:[#allocation3 + $0x10] sm:$0xff]
    %v379 = vld [vmem:[#allocation3 + $0x18] sm:$0xff]
    %v380 = vld [vmem:[#allocation3 + $0x20] sm:$0xff]
    %v381 = vld [vmem:[#allocation3 + $0x28] sm:$0xff]
    %v382 = vld [vmem:[#allocation3 + $0x30] sm:$0xff]
    %v383 = vld [vmem:[#allocation3 + $0x38] sm:$0xff]
    %v384 = vld [vmem:[#allocation3 + $0x40] sm:$0xff]
    %v385 = vld [vmem:[#allocation3 + $0x48] sm:$0xff]
    %v386 = vld [vmem:[#allocation3 + $0x50] sm:$0xff]
    %v387 = vld [vmem:[#allocation3 + $0x58] sm:$0xff]
    %v388 = vld [vmem:[#allocation3 + $0x60] sm:$0xff]
    %v389 = vld [vmem:[#allocation3 + $0x68] sm:$0xff]
    %v390 = vld [vmem:[#allocation3 + $0x70] sm:$0xff]
    %v391 = vld [vmem:[#allocation3 + $0x78] sm:$0xff]
    %v392 = vld [vmem:[#allocation3 + $0x80] sm:$0xff]
    %v393 = vld [vmem:[#allocation3 + $0x88] sm:$0xff]
    %v394 = vld [vmem:[#allocation3 + $0x90] sm:$0xff]
    %v395 = vld [vmem:[#allocation3 + $0x98] sm:$0xff]
    %v396 = vld [vmem:[#allocation3 + $0xa0] sm:$0xff]
    %v397 = vld [vmem:[#allocation3 + $0xa8] sm:$0xff]
    %v398 = vld [vmem:[#allocation3 + $0xb0] sm:$0xff]
    %v399 = vld [vmem:[#allocation3 + $0xb8] sm:$0xff]
    %v400 = vld [vmem:[#allocation3 + $0xc0] sm:$0xff]
    %v401 = vld [vmem:[#allocation3 + $0xc8] sm:$0xff]
    %v402 = vld [vmem:[#allocation3 + $0xd0] sm:$0xff]
    %v403 = vld [vmem:[#allocation3 + $0xd8] sm:$0xff]
    %v404 = vld [vmem:[#allocation3 + $0xe0] sm:$0xff]
    %v405 = vld [vmem:[#allocation3 + $0xe8] sm:$0xff]
    %v406 = vld [vmem:[#allocation3 + $0xf0] sm:$0xff]
    %v407 = vld [vmem:[#allocation3 + $0xf8] sm:$0xff]
    %v408 = vld [vmem:[#allocation3 + $0x100] sm:$0xff]
    %v409 = vld [vmem:[#allocation3 + $0x108] sm:$0xff]
    %v410 = vld [vmem:[#allocation3 + $0x110] sm:$0xff]
    %v411 = vld [vmem:[#allocation3 + $0x118] sm:$0xff]
    %v412 = vld [vmem:[#allocation3 + $0x120] sm:$0xff]
    %v413 = vld [vmem:[#allocation3 + $0x128] sm:$0xff]
    %v414 = vld [vmem:[#allocation3 + $0x130] sm:$0xff]
    %v415 = vld [vmem:[#allocation3 + $0x138] sm:$0xff]
    %v416 = vld [vmem:[#allocation3 + $0x140] sm:$0xff]
    %v417 = vld [vmem:[#allocation3 + $0x148] sm:$0xff]
    %v418 = vld [vmem:[#allocation3 + $0x150] sm:$0xff]
    %v419 = vld [vmem:[#allocation3 + $0x158] sm:$0xff]
    %v420 = vld [vmem:[#allocation3 + $0x160] sm:$0xff]
    %v421 = vld [vmem:[#allocation3 + $0x168] sm:$0xff]
    %v422 = vld [vmem:[#allocation3 + $0x170] sm:$0xff]
    %v423 = vld [vmem:[#allocation3 + $0x178] sm:$0xff]
    %v424 = vld [vmem:[#allocation3 + $0x180] sm:$0xff]
    %v425 = vld [vmem:[#allocation3 + $0x188] sm:$0xff]
    %v426 = vld [vmem:[#allocation3 + $0x190] sm:$0xff]
    %v427 = vld [vmem:[#allocation3 + $0x198] sm:$0xff]
    %v428 = vld [vmem:[#allocation3 + $0x1a0] sm:$0xff]
    %v429 = vld [vmem:[#allocation3 + $0x1a8] sm:$0xff]
    %v430 = vld [vmem:[#allocation3 + $0x1b0] sm:$0xff]
    %v431 = vld [vmem:[#allocation3 + $0x1b8] sm:$0xff]
    %v432 = vld [vmem:[#allocation3 + $0x1c0] sm:$0xff]
    %v433 = vld [vmem:[#allocation3 + $0x1c8] sm:$0xff]
    %v434 = vld [vmem:[#allocation3 + $0x1d0] sm:$0xff]
    %v435 = vld [vmem:[#allocation3 + $0x1d8] sm:$0xff]
    %v436 = vld [vmem:[#allocation3 + $0x1e0] sm:$0xff]
    %v437 = vld [vmem:[#allocation3 + $0x1e8] sm:$0xff]
    %v438 = vld [vmem:[#allocation3 + $0x1f0] sm:$0xff]
    %v439 = vld [vmem:[#allocation3 + $0x1f8] sm:$0xff]
    %440 = vmatprep.subr.mxu0 %v377
    %441 = vmatpush1.msra.mxu0 %v376
    %442 = vmatprep.subr.mxu0 %v381
    %443 = vmatpush1.msra.mxu0 %v380
    %444 = vmatprep.subr.mxu0 %v385
    %445 = vmatpush1.msra.mxu0 %v384
    %446 = vmatprep.subr.mxu0 %v389
    %447 = vmatpush1.msra.mxu0 %v388
    %448 = vmatprep.subr.mxu0 %v393
    %449 = vmatpush1.msra.mxu0 %v392
    %450 = vmatprep.subr.mxu0 %v397
    %451 = vmatpush1.msra.mxu0 %v396
    %452 = vmatprep.subr.mxu0 %v401
    %453 = vmatpush1.msra.mxu0 %v400
    %454 = vmatprep.subr.mxu0 %v405
    %455 = vmatpush1.msra.mxu0 %v404
    %456 = vmatprep.subr.mxu0 %v409
    %457 = vmatpush1.msra.mxu0 %v408
    %458 = vmatprep.subr.mxu0 %v413
    %459 = vmatpush1.msra.mxu0 %v412
    %460 = vmatprep.subr.mxu0 %v417
    %461 = vmatpush1.msra.mxu0 %v416
    %462 = vmatprep.subr.mxu0 %v421
    %463 = vmatpush1.msra.mxu0 %v420
    %464 = vmatprep.subr.mxu0 %v425
    %465 = vmatpush1.msra.mxu0 %v424
    %466 = vmatprep.subr.mxu0 %v429
    %467 = vmatpush1.msra.mxu0 %v428
    %468 = vmatprep.subr.mxu0 %v433
    %469 = vmatpush1.msra.mxu0 %v432
    %470 = vmatprep.subr.mxu0 %v437
    %471 = vmatpush1.msra.mxu0 %v436
    %472 = vmatprep.subr.mxu0 0.0
    %473 = vmatpush1.msra.mxu0 0.0
    %474 = vmatprep.subr.mxu0 0.0
    %475 = vmatpush1.msra.mxu0 0.0
    %476 = vmatprep.subr.mxu0 0.0
    %477 = vmatpush1.msra.mxu0 0.0
    %478 = vmatprep.subr.mxu0 0.0
    %479 = vmatpush1.msra.mxu0 0.0
    %480 = vmatprep.subr.mxu0 0.0
    %481 = vmatpush1.msra.mxu0 0.0
    %482 = vmatprep.subr.mxu0 0.0
    %483 = vmatpush1.msra.mxu0 0.0
    %484 = vmatprep.subr.mxu0 0.0
    %485 = vmatpush1.msra.mxu0 0.0
    %486 = vmatprep.subr.mxu0 0.0
    %487 = vmatpush1.msra.mxu0 0.0
    %488 = vmatprep.subr.mxu0 0.0
    %489 = vmatpush1.msra.mxu0 0.0
    %490 = vmatprep.subr.mxu0 0.0
    %491 = vmatpush1.msra.mxu0 0.0
    %492 = vmatprep.subr.mxu0 0.0
    %493 = vmatpush1.msra.mxu0 0.0
    %494 = vmatprep.subr.mxu0 0.0
    %495 = vmatpush1.msra.mxu0 0.0
    %496 = vmatprep.subr.mxu0 0.0
    %497 = vmatpush1.msra.mxu0 0.0
    %498 = vmatprep.subr.mxu0 0.0
    %499 = vmatpush1.msra.mxu0 0.0
    %500 = vmatprep.subr.mxu0 0.0
    %501 = vmatpush1.msra.mxu0 0.0
    %502 = vmatprep.subr.mxu0 0.0
    %503 = vmatpush1.msra.mxu0 0.0
    %504 = vmatprep.mubr.f32.mxu0 0.0
    %505 = vmatmul.mubr.f32.gmra.mrb[0].mxu0 %v370
    %v506 = vpop.f32.mrb[0].mxu0
    %v507 = vadd.f32 0.0, %v506
    %v508 = vpop.f32.mrb[0].mxu0
    %v509 = vadd.f32 0.0, %v508
    %510 = vdwg.mxu0
    %511 = vmatprep.subr.mxu0 %v379
    %512 = vmatpush1.msra.mxu0 %v378
    %513 = vmatprep.subr.mxu0 %v383
    %514 = vmatpush1.msra.mxu0 %v382
    %515 = vmatprep.subr.mxu0 %v387
    %516 = vmatpush1.msra.mxu0 %v386
    %517 = vmatprep.subr.mxu0 %v391
    %518 = vmatpush1.msra.mxu0 %v390
    %519 = vmatprep.subr.mxu0 %v395
    %520 = vmatpush1.msra.mxu0 %v394
    %521 = vmatprep.subr.mxu0 %v399
    %522 = vmatpush1.msra.mxu0 %v398
    %523 = vmatprep.subr.mxu0 %v403
    %524 = vmatpush1.msra.mxu0 %v402
    %525 = vmatprep.subr.mxu0 %v407
    %526 = vmatpush1.msra.mxu0 %v406
    %527 = vmatprep.subr.mxu0 %v411
    %528 = vmatpush1.msra.mxu0 %v410
    %529 = vmatprep.subr.mxu0 %v415
    %530 = vmatpush1.msra.mxu0 %v414
    %531 = vmatprep.subr.mxu0 %v419
    %532 = vmatpush1.msra.mxu0 %v418
    %533 = vmatprep.subr.mxu0 %v423
    %534 = vmatpush1.msra.mxu0 %v422
    %535 = vmatprep.subr.mxu0 %v427
    %536 = vmatpush1.msra.mxu0 %v426
    %537 = vmatprep.subr.mxu0 %v431
    %538 = vmatpush1.msra.mxu0 %v430
    %539 = vmatprep.subr.mxu0 %v435
    %540 = vmatpush1.msra.mxu0 %v434
    %541 = vmatprep.subr.mxu0 %v439
    %542 = vmatpush1.msra.mxu0 %v438
    %543 = vmatprep.subr.mxu0 0.0
    %544 = vmatpush1.msra.mxu0 0.0
    %545 = vmatprep.subr.mxu0 0.0
    %546 = vmatpush1.msra.mxu0 0.0
    %547 = vmatprep.subr.mxu0 0.0
    %548 = vmatpush1.msra.mxu0 0.0
    %549 = vmatprep.subr.mxu0 0.0
    %550 = vmatpush1.msra.mxu0 0.0
    %551 = vmatprep.subr.mxu0 0.0
    %552 = vmatpush1.msra.mxu0 0.0
    %553 = vmatprep.subr.mxu0 0.0
    %554 = vmatpush1.msra.mxu0 0.0
    %555 = vmatprep.subr.mxu0 0.0
    %556 = vmatpush1.msra.mxu0 0.0
    %557 = vmatprep.subr.mxu0 0.0
    %558 = vmatpush1.msra.mxu0 0.0
    %559 = vmatprep.subr.mxu0 0.0
    %560 = vmatpush1.msra.mxu0 0.0
    %561 = vmatprep.subr.mxu0 0.0
    %562 = vmatpush1.msra.mxu0 0.0
    %563 = vmatprep.subr.mxu0 0.0
    %564 = vmatpush1.msra.mxu0 0.0
    %565 = vmatprep.subr.mxu0 0.0
    %566 = vmatpush1.msra.mxu0 0.0
    %567 = vmatprep.subr.mxu0 0.0
    %568 = vmatpush1.msra.mxu0 0.0
    %569 = vmatprep.subr.mxu0 0.0
    %570 = vmatpush1.msra.mxu0 0.0
    %571 = vmatprep.subr.mxu0 0.0
    %572 = vmatpush1.msra.mxu0 0.0
    %573 = vmatprep.subr.mxu0 0.0
    %574 = vmatpush1.msra.mxu0 0.0
    %575 = vmatprep.mubr.f32.mxu0 0.0
    %576 = vmatmul.mubr.f32.gmra.mrb[0].mxu0 %v370
    %v577 = vpop.f32.mrb[0].mxu0
    %v578 = vadd.f32 0.0, %v577
    %v579 = vpop.f32.mrb[0].mxu0
    %v580 = vadd.f32 0.0, %v579
    %581 = vdwg.mxu0
    %v582 = vadd.f32 %v372, %v507
    %v583 = vadd.f32 %v373, %v509
    %v584 = vadd.f32 %v374, %v578
    %v585 = vadd.f32 %v375, %v580
    %v586 = vxor.u32 %v582, 2147483648
    %v587 = vxor.u32 %v583, 2147483648
    %v588 = vxor.u32 %v584, 2147483648
    %v589 = vmul.f32 %v586, 1.442695
    %v590 = vpow.pop %v589
    %v591 = vmul.f32 %v587, 1.442695
    %v592 = vpow.pop %v591
    %v593 = vmul.f32 %v588, 1.442695
    %v594 = vpow.pop %v593
    %v595 = vadd.f32 %v590, 1.0
    %v596 = vadd.f32 %v592, 1.0
    %v597 = vadd.f32 %v594, 1.0
    %v598 = vrcp.pop %v595
    %v599 = vmul.f32 1.0, %v598
    %v600 = vrcp.pop %v596
    %v601 = vmul.f32 1.0, %v600
    %v602 = vrcp.pop %v597
    %v603 = vmul.f32 1.0, %v602
    %v604 = vtanh.pop %v585
    %v605 = vmul.f32 %v601, %v371
    %v606 = vmul.f32 %v599, %v604
    %v607 = vadd.f32 %v605, %v606
    %v608 = vtanh.pop %v607
    %v609 = vmul.f32 %v603, %v608
    %610 = vst [vmem:[#allocation6] sm:$0xff] %v609
    %v611 = vld [vmem:[#allocation2 + $0x20] sm:$0xff]
    %v612 = vld [vmem:[#allocation2 + $0x28] sm:$0xff]
    %v613 = vld [vmem:[#allocation2 + $0x30] sm:$0xff]
    %v614 = vld [vmem:[#allocation2 + $0x38] sm:$0xff]
    %v615 = vld [vmem:[#allocation3] sm:$0xff]
    %v616 = vld [vmem:[#allocation3 + $0x8] sm:$0xff]
    %v617 = vld [vmem:[#allocation3 + $0x10] sm:$0xff]
    %v618 = vld [vmem:[#allocation3 + $0x18] sm:$0xff]
    %v619 = vld [vmem:[#allocation3 + $0x20] sm:$0xff]
    %v620 = vld [vmem:[#allocation3 + $0x28] sm:$0xff]
    %v621 = vld [vmem:[#allocation3 + $0x30] sm:$0xff]
    %v622 = vld [vmem:[#allocation3 + $0x38] sm:$0xff]
    %v623 = vld [vmem:[#allocation3 + $0x40] sm:$0xff]
    %v624 = vld [vmem:[#allocation3 + $0x48] sm:$0xff]
    %v625 = vld [vmem:[#allocation3 + $0x50] sm:$0xff]
    %v626 = vld [vmem:[#allocation3 + $0x58] sm:$0xff]
    %v627 = vld [vmem:[#allocation3 + $0x60] sm:$0xff]
    %v628 = vld [vmem:[#allocation3 + $0x68] sm:$0xff]
    %v629 = vld [vmem:[#allocation3 + $0x70] sm:$0xff]
    %v630 = vld [vmem:[#allocation3 + $0x78] sm:$0xff]
    %v631 = vld [vmem:[#allocation3 + $0x80] sm:$0xff]
    %v632 = vld [vmem:[#allocation3 + $0x88] sm:$0xff]
    %v633 = vld [vmem:[#allocation3 + $0x90] sm:$0xff]
    %v634 = vld [vmem:[#allocation3 + $0x98] sm:$0xff]
    %v635 = vld [vmem:[#allocation3 + $0xa0] sm:$0xff]
    %v636 = vld [vmem:[#allocation3 + $0xa8] sm:$0xff]
    %v637 = vld [vmem:[#allocation3 + $0xb0] sm:$0xff]
    %v638 = vld [vmem:[#allocation3 + $0xb8] sm:$0xff]
    %v639 = vld [vmem:[#allocation3 + $0xc0] sm:$0xff]
    %v640 = vld [vmem:[#allocation3 + $0xc8] sm:$0xff]
    %v641 = vld [vmem:[#allocation3 + $0xd0] sm:$0xff]
    %v642 = vld [vmem:[#allocation3 + $0xd8] sm:$0xff]
    %v643 = vld [vmem:[#allocation3 + $0xe0] sm:$0xff]
    %v644 = vld [vmem:[#allocation3 + $0xe8] sm:$0xff]
    %v645 = vld [vmem:[#allocation3 + $0xf0] sm:$0xff]
    %v646 = vld [vmem:[#allocation3 + $0xf8] sm:$0xff]
    %v647 = vld [vmem:[#allocation3 + $0x100] sm:$0xff]
    %v648 = vld [vmem:[#allocation3 + $0x108] sm:$0xff]
    %v649 = vld [vmem:[#allocation3 + $0x110] sm:$0xff]
    %v650 = vld [vmem:[#allocation3 + $0x118] sm:$0xff]
    %v651 = vld [vmem:[#allocation3 + $0x120] sm:$0xff]
    %v652 = vld [vmem:[#allocation3 + $0x128] sm:$0xff]
    %v653 = vld [vmem:[#allocation3 + $0x130] sm:$0xff]
    %v654 = vld [vmem:[#allocation3 + $0x138] sm:$0xff]
    %v655 = vld [vmem:[#allocation3 + $0x140] sm:$0xff]
    %v656 = vld [vmem:[#allocation3 + $0x148] sm:$0xff]
    %v657 = vld [vmem:[#allocation3 + $0x150] sm:$0xff]
    %v658 = vld [vmem:[#allocation3 + $0x158] sm:$0xff]
    %v659 = vld [vmem:[#allocation3 + $0x160] sm:$0xff]
    %v660 = vld [vmem:[#allocation3 + $0x168] sm:$0xff]
    %v661 = vld [vmem:[#allocation3 + $0x170] sm:$0xff]
    %v662 = vld [vmem:[#allocation3 + $0x178] sm:$0xff]
    %v663 = vld [vmem:[#allocation3 + $0x180] sm:$0xff]
    %v664 = vld [vmem:[#allocation3 + $0x188] sm:$0xff]
    %v665 = vld [vmem:[#allocation3 + $0x190] sm:$0xff]
    %v666 = vld [vmem:[#allocation3 + $0x198] sm:$0xff]
    %v667 = vld [vmem:[#allocation3 + $0x1a0] sm:$0xff]
    %v668 = vld [vmem:[#allocation3 + $0x1a8] sm:$0xff]
    %v669 = vld [vmem:[#allocation3 + $0x1b0] sm:$0xff]
    %v670 = vld [vmem:[#allocation3 + $0x1b8] sm:$0xff]
    %v671 = vld [vmem:[#allocation3 + $0x1c0] sm:$0xff]
    %v672 = vld [vmem:[#allocation3 + $0x1c8] sm:$0xff]
    %v673 = vld [vmem:[#allocation3 + $0x1d0] sm:$0xff]
    %v674 = vld [vmem:[#allocation3 + $0x1d8] sm:$0xff]
    %v675 = vld [vmem:[#allocation3 + $0x1e0] sm:$0xff]
    %v676 = vld [vmem:[#allocation3 + $0x1e8] sm:$0xff]
    %v677 = vld [vmem:[#allocation3 + $0x1f0] sm:$0xff]
    %v678 = vld [vmem:[#allocation3 + $0x1f8] sm:$0xff]
    %679 = vmatprep.subr.mxu0 %v616
    %680 = vmatpush1.msra.mxu0 %v615
    %681 = vmatprep.subr.mxu0 %v620
    %682 = vmatpush1.msra.mxu0 %v619
    %683 = vmatprep.subr.mxu0 %v624
    %684 = vmatpush1.msra.mxu0 %v623
    %685 = vmatprep.subr.mxu0 %v628
    %686 = vmatpush1.msra.mxu0 %v627
    %687 = vmatprep.subr.mxu0 %v632
    %688 = vmatpush1.msra.mxu0 %v631
    %689 = vmatprep.subr.mxu0 %v636
    %690 = vmatpush1.msra.mxu0 %v635
    %691 = vmatprep.subr.mxu0 %v640
    %692 = vmatpush1.msra.mxu0 %v639
    %693 = vmatprep.subr.mxu0 %v644
    %694 = vmatpush1.msra.mxu0 %v643
    %695 = vmatprep.subr.mxu0 %v648
    %696 = vmatpush1.msra.mxu0 %v647
    %697 = vmatprep.subr.mxu0 %v652
    %698 = vmatpush1.msra.mxu0 %v651
    %699 = vmatprep.subr.mxu0 %v656
    %700 = vmatpush1.msra.mxu0 %v655
    %701 = vmatprep.subr.mxu0 %v660
    %702 = vmatpush1.msra.mxu0 %v659
    %703 = vmatprep.subr.mxu0 %v664
    %704 = vmatpush1.msra.mxu0 %v663
    %705 = vmatprep.subr.mxu0 %v668
    %706 = vmatpush1.msra.mxu0 %v667
    %707 = vmatprep.subr.mxu0 %v672
    %708 = vmatpush1.msra.mxu0 %v671
    %709 = vmatprep.subr.mxu0 %v676
    %710 = vmatpush1.msra.mxu0 %v675
    %711 = vmatprep.subr.mxu0 0.0
    %712 = vmatpush1.msra.mxu0 0.0
    %713 = vmatprep.subr.mxu0 0.0
    %714 = vmatpush1.msra.mxu0 0.0
    %715 = vmatprep.subr.mxu0 0.0
    %716 = vmatpush1.msra.mxu0 0.0
    %717 = vmatprep.subr.mxu0 0.0
    %718 = vmatpush1.msra.mxu0 0.0
    %719 = vmatprep.subr.mxu0 0.0
    %720 = vmatpush1.msra.mxu0 0.0
    %721 = vmatprep.subr.mxu0 0.0
    %722 = vmatpush1.msra.mxu0 0.0
    %723 = vmatprep.subr.mxu0 0.0
    %724 = vmatpush1.msra.mxu0 0.0
    %725 = vmatprep.subr.mxu0 0.0
    %726 = vmatpush1.msra.mxu0 0.0
    %727 = vmatprep.subr.mxu0 0.0
    %728 = vmatpush1.msra.mxu0 0.0
    %729 = vmatprep.subr.mxu0 0.0
    %730 = vmatpush1.msra.mxu0 0.0
    %731 = vmatprep.subr.mxu0 0.0
    %732 = vmatpush1.msra.mxu0 0.0
    %733 = vmatprep.subr.mxu0 0.0
    %734 = vmatpush1.msra.mxu0 0.0
    %735 = vmatprep.subr.mxu0 0.0
    %736 = vmatpush1.msra.mxu0 0.0
    %737 = vmatprep.subr.mxu0 0.0
    %738 = vmatpush1.msra.mxu0 0.0
    %739 = vmatprep.subr.mxu0 0.0
    %740 = vmatpush1.msra.mxu0 0.0
    %741 = vmatprep.subr.mxu0 0.0
    %742 = vmatpush1.msra.mxu0 0.0
    %743 = vmatprep.mubr.f32.mxu0 0.0
    %744 = vmatmul.mubr.f32.gmra.mrb[0].mxu0 %v609
    %v745 = vpop.f32.mrb[0].mxu0
    %v746 = vadd.f32 0.0, %v745
    %v747 = vpop.f32.mrb[0].mxu0
    %v748 = vadd.f32 0.0, %v747
    %749 = vdwg.mxu0
    %750 = vmatprep.subr.mxu0 %v618
    %751 = vmatpush1.msra.mxu0 %v617
    %752 = vmatprep.subr.mxu0 %v622
    %753 = vmatpush1.msra.mxu0 %v621
    %754 = vmatprep.subr.mxu0 %v626
    %755 = vmatpush1.msra.mxu0 %v625
    %756 = vmatprep.subr.mxu0 %v630
    %757 = vmatpush1.msra.mxu0 %v629
    %758 = vmatprep.subr.mxu0 %v634
    %759 = vmatpush1.msra.mxu0 %v633
    %760 = vmatprep.subr.mxu0 %v638
    %761 = vmatpush1.msra.mxu0 %v637
    %762 = vmatprep.subr.mxu0 %v642
    %763 = vmatpush1.msra.mxu0 %v641
    %764 = vmatprep.subr.mxu0 %v646
    %765 = vmatpush1.msra.mxu0 %v645
    %766 = vmatprep.subr.mxu0 %v650
    %767 = vmatpush1.msra.mxu0 %v649
    %768 = vmatprep.subr.mxu0 %v654
    %769 = vmatpush1.msra.mxu0 %v653
    %770 = vmatprep.subr.mxu0 %v658
    %771 = vmatpush1.msra.mxu0 %v657
    %772 = vmatprep.subr.mxu0 %v662
    %773 = vmatpush1.msra.mxu0 %v661
    %774 = vmatprep.subr.mxu0 %v666
    %775 = vmatpush1.msra.mxu0 %v665
    %776 = vmatprep.subr.mxu0 %v670
    %777 = vmatpush1.msra.mxu0 %v669
    %778 = vmatprep.subr.mxu0 %v674
    %779 = vmatpush1.msra.mxu0 %v673
    %780 = vmatprep.subr.mxu0 %v678
    %781 = vmatpush1.msra.mxu0 %v677
    %782 = vmatprep.subr.mxu0 0.0
    %783 = vmatpush1.msra.mxu0 0.0
    %784 = vmatprep.subr.mxu0 0.0
    %785 = vmatpush1.msra.mxu0 0.0
    %786 = vmatprep.subr.mxu0 0.0
    %787 = vmatpush1.msra.mxu0 0.0
    %788 = vmatprep.subr.mxu0 0.0
    %789 = vmatpush1.msra.mxu0 0.0
    %790 = vmatprep.subr.mxu0 0.0
    %791 = vmatpush1.msra.mxu0 0.0
    %792 = vmatprep.subr.mxu0 0.0
    %793 = vmatpush1.msra.mxu0 0.0
    %794 = vmatprep.subr.mxu0 0.0
    %795 = vmatpush1.msra.mxu0 0.0
    %796 = vmatprep.subr.mxu0 0.0
    %797 = vmatpush1.msra.mxu0 0.0
    %798 = vmatprep.subr.mxu0 0.0
    %799 = vmatpush1.msra.mxu0 0.0
    %800 = vmatprep.subr.mxu0 0.0
    %801 = vmatpush1.msra.mxu0 0.0
    %802 = vmatprep.subr.mxu0 0.0
    %803 = vmatpush1.msra.mxu0 0.0
    %804 = vmatprep.subr.mxu0 0.0
    %805 = vmatpush1.msra.mxu0 0.0
    %806 = vmatprep.subr.mxu0 0.0
    %807 = vmatpush1.msra.mxu0 0.0
    %808 = vmatprep.subr.mxu0 0.0
    %809 = vmatpush1.msra.mxu0 0.0
    %810 = vmatprep.subr.mxu0 0.0
    %811 = vmatpush1.msra.mxu0 0.0
    %812 = vmatprep.subr.mxu0 0.0
    %813 = vmatpush1.msra.mxu0 0.0
    %814 = vmatprep.mubr.f32.mxu0 0.0
    %815 = vmatmul.mubr.f32.gmra.mrb[0].mxu0 %v609
    %v816 = vpop.f32.mrb[0].mxu0
    %v817 = vadd.f32 0.0, %v816
    %v818 = vpop.f32.mrb[0].mxu0
    %v819 = vadd.f32 0.0, %v818
    %820 = vdwg.mxu0
    %v821 = vadd.f32 %v611, %v746
    %v822 = vadd.f32 %v612, %v748
    %v823 = vadd.f32 %v613, %v817
    %v824 = vadd.f32 %v614, %v819
    %v825 = vxor.u32 %v821, 2147483648
    %v826 = vxor.u32 %v822, 2147483648
    %v827 = vxor.u32 %v823, 2147483648
    %v828 = vmul.f32 %v825, 1.442695
    %v829 = vpow.pop %v828
    %v830 = vmul.f32 %v826, 1.442695
    %v831 = vpow.pop %v830
    %v832 = vmul.f32 %v827, 1.442695
    %v833 = vpow.pop %v832
    %v834 = vadd.f32 %v829, 1.0
    %v835 = vadd.f32 %v831, 1.0
    %v836 = vadd.f32 %v833, 1.0
    %v837 = vrcp.pop %v834
    %v838 = vmul.f32 1.0, %v837
    %v839 = vrcp.pop %v835
    %v840 = vmul.f32 1.0, %v839
    %v841 = vrcp.pop %v836
    %v842 = vmul.f32 1.0, %v841
    %v843 = vtanh.pop %v824
    %v844 = vmul.f32 %v840, %v607
    %v845 = vmul.f32 %v838, %v843
    %v846 = vadd.f32 %v844, %v845
    %v847 = vtanh.pop %v846
    %v848 = vmul.f32 %v842, %v847
    %s849 = scalar_lea.vmem [#allocation6], 8
    %850 = vst [vmem:[%s849] sm:$0xff] %v848
    %v851 = vld [vmem:[#allocation2 + $0x40] sm:$0xff]
    %v852 = vld [vmem:[#allocation2 + $0x48] sm:$0xff]
    %v853 = vld [vmem:[#allocation2 + $0x50] sm:$0xff]
    %v854 = vld [vmem:[#allocation2 + $0x58] sm:$0xff]
    %v855 = vld [vmem:[#allocation3] sm:$0xff]
    %v856 = vld [vmem:[#allocation3 + $0x8] sm:$0xff]
    %v857 = vld [vmem:[#allocation3 + $0x10] sm:$0xff]
    %v858 = vld [vmem:[#allocation3 + $0x18] sm:$0xff]
    %v859 = vld [vmem:[#allocation3 + $0x20] sm:$0xff]
    %v860 = vld [vmem:[#allocation3 + $0x28] sm:$0xff]
    %v861 = vld [vmem:[#allocation3 + $0x30] sm:$0xff]
    %v862 = vld [vmem:[#allocation3 + $0x38] sm:$0xff]
    %v863 = vld [vmem:[#allocation3 + $0x40] sm:$0xff]
    %v864 = vld [vmem:[#allocation3 + $0x48] sm:$0xff]
    %v865 = vld [vmem:[#allocation3 + $0x50] sm:$0xff]
    %v866 = vld [vmem:[#allocation3 + $0x58] sm:$0xff]
    %v867 = vld [vmem:[#allocation3 + $0x60] sm:$0xff]
    %v868 = vld [vmem:[#allocation3 + $0x68] sm:$0xff]
    %v869 = vld [vmem:[#allocation3 + $0x70] sm:$0xff]
    %v870 = vld [vmem:[#allocation3 + $0x78] sm:$0xff]
    %v871 = vld [vmem:[#allocation3 + $0x80] sm:$0xff]
    %v872 = vld [vmem:[#allocation3 + $0x88] sm:$0xff]
    %v873 = vld [vmem:[#allocation3 + $0x90] sm:$0xff]
    %v874 = vld [vmem:[#allocation3 + $0x98] sm:$0xff]
    %v875 = vld [vmem:[#allocation3 + $0xa0] sm:$0xff]
    %v876 = vld [vmem:[#allocation3 + $0xa8] sm:$0xff]
    %v877 = vld [vmem:[#allocation3 + $0xb0] sm:$0xff]
    %v878 = vld [vmem:[#allocation3 + $0xb8] sm:$0xff]
    %v879 = vld [vmem:[#allocation3 + $0xc0] sm:$0xff]
    %v880 = vld [vmem:[#allocation3 + $0xc8] sm:$0xff]
    %v881 = vld [vmem:[#allocation3 + $0xd0] sm:$0xff]
    %v882 = vld [vmem:[#allocation3 + $0xd8] sm:$0xff]
    %v883 = vld [vmem:[#allocation3 + $0xe0] sm:$0xff]
    %v884 = vld [vmem:[#allocation3 + $0xe8] sm:$0xff]
    %v885 = vld [vmem:[#allocation3 + $0xf0] sm:$0xff]
    %v886 = vld [vmem:[#allocation3 + $0xf8] sm:$0xff]
    %v887 = vld [vmem:[#allocation3 + $0x100] sm:$0xff]
    %v888 = vld [vmem:[#allocation3 + $0x108] sm:$0xff]
    %v889 = vld [vmem:[#allocation3 + $0x110] sm:$0xff]
    %v890 = vld [vmem:[#allocation3 + $0x118] sm:$0xff]
    %v891 = vld [vmem:[#allocation3 + $0x120] sm:$0xff]
    %v892 = vld [vmem:[#allocation3 + $0x128] sm:$0xff]
    %v893 = vld [vmem:[#allocation3 + $0x130] sm:$0xff]
    %v894 = vld [vmem:[#allocation3 + $0x138] sm:$0xff]
    %v895 = vld [vmem:[#allocation3 + $0x140] sm:$0xff]
    %v896 = vld [vmem:[#allocation3 + $0x148] sm:$0xff]
    %v897 = vld [vmem:[#allocation3 + $0x150] sm:$0xff]
    %v898 = vld [vmem:[#allocation3 + $0x158] sm:$0xff]
    %v899 = vld [vmem:[#allocation3 + $0x160] sm:$0xff]
    %v900 = vld [vmem:[#allocation3 + $0x168] sm:$0xff]
    %v901 = vld [vmem:[#allocation3 + $0x170] sm:$0xff]
    %v902 = vld [vmem:[#allocation3 + $0x178] sm:$0xff]
    %v903 = vld [vmem:[#allocation3 + $0x180] sm:$0xff]
    %v904 = vld [vmem:[#allocation3 + $0x188] sm:$0xff]
    %v905 = vld [vmem:[#allocation3 + $0x190] sm:$0xff]
    %v906 = vld [vmem:[#allocation3 + $0x198] sm:$0xff]
    %v907 = vld [vmem:[#allocation3 + $0x1a0] sm:$0xff]
    %v908 = vld [vmem:[#allocation3 + $0x1a8] sm:$0xff]
    %v909 = vld [vmem:[#allocation3 + $0x1b0] sm:$0xff]
    %v910 = vld [vmem:[#allocation3 + $0x1b8] sm:$0xff]
    %v911 = vld [vmem:[#allocation3 + $0x1c0] sm:$0xff]
    %v912 = vld [vmem:[#allocation3 + $0x1c8] sm:$0xff]
    %v913 = vld [vmem:[#allocation3 + $0x1d0] sm:$0xff]
    %v914 = vld [vmem:[#allocation3 + $0x1d8] sm:$0xff]
    %v915 = vld [vmem:[#allocation3 + $0x1e0] sm:$0xff]
    %v916 = vld [vmem:[#allocation3 + $0x1e8] sm:$0xff]
    %v917 = vld [vmem:[#allocation3 + $0x1f0] sm:$0xff]
    %v918 = vld [vmem:[#allocation3 + $0x1f8] sm:$0xff]
    %919 = vmatprep.subr.mxu0 %v856
    %920 = vmatpush1.msra.mxu0 %v855
    %921 = vmatprep.subr.mxu0 %v860
    %922 = vmatpush1.msra.mxu0 %v859
    %923 = vmatprep.subr.mxu0 %v864
    %924 = vmatpush1.msra.mxu0 %v863
    %925 = vmatprep.subr.mxu0 %v868
    %926 = vmatpush1.msra.mxu0 %v867
    %927 = vmatprep.subr.mxu0 %v872
    %928 = vmatpush1.msra.mxu0 %v871
    %929 = vmatprep.subr.mxu0 %v876
    %930 = vmatpush1.msra.mxu0 %v875
    %931 = vmatprep.subr.mxu0 %v880
    %932 = vmatpush1.msra.mxu0 %v879
    %933 = vmatprep.subr.mxu0 %v884
    %934 = vmatpush1.msra.mxu0 %v883
    %935 = vmatprep.subr.mxu0 %v888
    %936 = vmatpush1.msra.mxu0 %v887
    %937 = vmatprep.subr.mxu0 %v892
    %938 = vmatpush1.msra.mxu0 %v891
    %939 = vmatprep.subr.mxu0 %v896
    %940 = vmatpush1.msra.mxu0 %v895
    %941 = vmatprep.subr.mxu0 %v900
    %942 = vmatpush1.msra.mxu0 %v899
    %943 = vmatprep.subr.mxu0 %v904
    %944 = vmatpush1.msra.mxu0 %v903
    %945 = vmatprep.subr.mxu0 %v908
    %946 = vmatpush1.msra.mxu0 %v907
    %947 = vmatprep.subr.mxu0 %v912
    %948 = vmatpush1.msra.mxu0 %v911
    %949 = vmatprep.subr.mxu0 %v916
    %950 = vmatpush1.msra.mxu0 %v915
    %951 = vmatprep.subr.mxu0 0.0
    %952 = vmatpush1.msra.mxu0 0.0
    %953 = vmatprep.subr.mxu0 0.0
    %954 = vmatpush1.msra.mxu0 0.0
    %955 = vmatprep.subr.mxu0 0.0
    %956 = vmatpush1.msra.mxu0 0.0
    %957 = vmatprep.subr.mxu0 0.0
    %958 = vmatpush1.msra.mxu0 0.0
    %959 = vmatprep.subr.mxu0 0.0
    %960 = vmatpush1.msra.mxu0 0.0
    %961 = vmatprep.subr.mxu0 0.0
    %962 = vmatpush1.msra.mxu0 0.0
    %963 = vmatprep.subr.mxu0 0.0
    %964 = vmatpush1.msra.mxu0 0.0
    %965 = vmatprep.subr.mxu0 0.0
    %966 = vmatpush1.msra.mxu0 0.0
    %967 = vmatprep.subr.mxu0 0.0
    %968 = vmatpush1.msra.mxu0 0.0
    %969 = vmatprep.subr.mxu0 0.0
    %970 = vmatpush1.msra.mxu0 0.0
    %971 = vmatprep.subr.mxu0 0.0
    %972 = vmatpush1.msra.mxu0 0.0
    %973 = vmatprep.subr.mxu0 0.0
    %974 = vmatpush1.msra.mxu0 0.0
    %975 = vmatprep.subr.mxu0 0.0
    %976 = vmatpush1.msra.mxu0 0.0
    %977 = vmatprep.subr.mxu0 0.0
    %978 = vmatpush1.msra.mxu0 0.0
    %979 = vmatprep.subr.mxu0 0.0
    %980 = vmatpush1.msra.mxu0 0.0
    %981 = vmatprep.subr.mxu0 0.0
    %982 = vmatpush1.msra.mxu0 0.0
    %983 = vmatprep.mubr.f32.mxu0 0.0
    %984 = vmatmul.mubr.f32.gmra.mrb[0].mxu0 %v848
    %v985 = vpop.f32.mrb[0].mxu0
    %v986 = vadd.f32 0.0, %v985
    %v987 = vpop.f32.mrb[0].mxu0
    %v988 = vadd.f32 0.0, %v987
    %989 = vdwg.mxu0
    %990 = vmatprep.subr.mxu0 %v858
    %991 = vmatpush1.msra.mxu0 %v857
    %992 = vmatprep.subr.mxu0 %v862
    %993 = vmatpush1.msra.mxu0 %v861
    %994 = vmatprep.subr.mxu0 %v866
    %995 = vmatpush1.msra.mxu0 %v865
    %996 = vmatprep.subr.mxu0 %v870
    %997 = vmatpush1.msra.mxu0 %v869
    %998 = vmatprep.subr.mxu0 %v874
    %999 = vmatpush1.msra.mxu0 %v873
    %1000 = vmatprep.subr.mxu0 %v878
    %1001 = vmatpush1.msra.mxu0 %v877
    %1002 = vmatprep.subr.mxu0 %v882
    %1003 = vmatpush1.msra.mxu0 %v881
    %1004 = vmatprep.subr.mxu0 %v886
    %1005 = vmatpush1.msra.mxu0 %v885
    %1006 = vmatprep.subr.mxu0 %v890
    %1007 = vmatpush1.msra.mxu0 %v889
    %1008 = vmatprep.subr.mxu0 %v894
    %1009 = vmatpush1.msra.mxu0 %v893
    %1010 = vmatprep.subr.mxu0 %v898
    %1011 = vmatpush1.msra.mxu0 %v897
    %1012 = vmatprep.subr.mxu0 %v902
    %1013 = vmatpush1.msra.mxu0 %v901
    %1014 = vmatprep.subr.mxu0 %v906
    %1015 = vmatpush1.msra.mxu0 %v905
    %1016 = vmatprep.subr.mxu0 %v910
    %1017 = vmatpush1.msra.mxu0 %v909
    %1018 = vmatprep.subr.mxu0 %v914
    %1019 = vmatpush1.msra.mxu0 %v913
    %1020 = vmatprep.subr.mxu0 %v918
    %1021 = vmatpush1.msra.mxu0 %v917
    %1022 = vmatprep.subr.mxu0 0.0
    %1023 = vmatpush1.msra.mxu0 0.0
    %1024 = vmatprep.subr.mxu0 0.0
    %1025 = vmatpush1.msra.mxu0 0.0
    %1026 = vmatprep.subr.mxu0 0.0
    %1027 = vmatpush1.msra.mxu0 0.0
    %1028 = vmatprep.subr.mxu0 0.0
    %1029 = vmatpush1.msra.mxu0 0.0
    %1030 = vmatprep.subr.mxu0 0.0
    %1031 = vmatpush1.msra.mxu0 0.0
    %1032 = vmatprep.subr.mxu0 0.0
    %1033 = vmatpush1.msra.mxu0 0.0
    %1034 = vmatprep.subr.mxu0 0.0
    %1035 = vmatpush1.msra.mxu0 0.0
    %1036 = vmatprep.subr.mxu0 0.0
    %1037 = vmatpush1.msra.mxu0 0.0
    %1038 = vmatprep.subr.mxu0 0.0
    %1039 = vmatpush1.msra.mxu0 0.0
    %1040 = vmatprep.subr.mxu0 0.0
    %1041 = vmatpush1.msra.mxu0 0.0
    %1042 = vmatprep.subr.mxu0 0.0
    %1043 = vmatpush1.msra.mxu0 0.0
    %1044 = vmatprep.subr.mxu0 0.0
    %1045 = vmatpush1.msra.mxu0 0.0
    %1046 = vmatprep.subr.mxu0 0.0
    %1047 = vmatpush1.msra.mxu0 0.0
    %1048 = vmatprep.subr.mxu0 0.0
    %1049 = vmatpush1.msra.mxu0 0.0
    %1050 = vmatprep.subr.mxu0 0.0
    %1051 = vmatpush1.msra.mxu0 0.0
    %1052 = vmatprep.subr.mxu0 0.0
    %1053 = vmatpush1.msra.mxu0 0.0
    %1054 = vmatprep.mubr.f32.mxu0 0.0
    %1055 = vmatmul.mubr.f32.gmra.mrb[0].mxu0 %v848
    %v1056 = vpop.f32.mrb[0].mxu0
    %v1057 = vadd.f32 0.0, %v1056
    %v1058 = vpop.f32.mrb[0].mxu0
    %v1059 = vadd.f32 0.0, %v1058
    %1060 = vdwg.mxu0
    %v1061 = vadd.f32 %v851, %v986
    %v1062 = vadd.f32 %v852, %v988
    %v1063 = vadd.f32 %v853, %v1057
    %v1064 = vadd.f32 %v854, %v1059
    %v1065 = vxor.u32 %v1061, 2147483648
    %v1066 = vxor.u32 %v1062, 2147483648
    %v1067 = vxor.u32 %v1063, 2147483648
    %v1068 = vmul.f32 %v1065, 1.442695
    %v1069 = vpow.pop %v1068
    %v1070 = vmul.f32 %v1066, 1.442695
    %v1071 = vpow.pop %v1070
    %v1072 = vmul.f32 %v1067, 1.442695
    %v1073 = vpow.pop %v1072
    %v1074 = vadd.f32 %v1069, 1.0
    %v1075 = vadd.f32 %v1071, 1.0
    %v1076 = vadd.f32 %v1073, 1.0
    %v1077 = vrcp.pop %v1074
    %v1078 = vmul.f32 1.0, %v1077
    %v1079 = vrcp.pop %v1075
    %v1080 = vmul.f32 1.0, %v1079
    %v1081 = vrcp.pop %v1076
    %v1082 = vmul.f32 1.0, %v1081
    %v1083 = vtanh.pop %v1064
    %v1084 = vmul.f32 %v1080, %v846
    %v1085 = vmul.f32 %v1078, %v1083
    %v1086 = vadd.f32 %v1084, %v1085
    %v1087 = vtanh.pop %v1086
    %v1088 = vmul.f32 %v1082, %v1087
    %s1089 = scalar_lea.vmem [#allocation6], 16
    %1090 = vst [vmem:[%s1089] sm:$0xff] %v1088
    %v1091 = vld [vmem:[#allocation2 + $0x60] sm:$0xff]
    %v1092 = vld [vmem:[#allocation2 + $0x68] sm:$0xff]
    %v1093 = vld [vmem:[#allocation2 + $0x70] sm:$0xff]
    %v1094 = vld [vmem:[#allocation2 + $0x78] sm:$0xff]
    %v1095 = vld [vmem:[#allocation3] sm:$0xff]
    %v1096 = vld [vmem:[#allocation3 + $0x8] sm:$0xff]
    %v1097 = vld [vmem:[#allocation3 + $0x10] sm:$0xff]
    %v1098 = vld [vmem:[#allocation3 + $0x18] sm:$0xff]
    %v1099 = vld [vmem:[#allocation3 + $0x20] sm:$0xff]
    %v1100 = vld [vmem:[#allocation3 + $0x28] sm:$0xff]
    %v1101 = vld [vmem:[#allocation3 + $0x30] sm:$0xff]
    %v1102 = vld [vmem:[#allocation3 + $0x38] sm:$0xff]
    %v1103 = vld [vmem:[#allocation3 + $0x40] sm:$0xff]
    %v1104 = vld [vmem:[#allocation3 + $0x48] sm:$0xff]
    %v1105 = vld [vmem:[#allocation3 + $0x50] sm:$0xff]
    %v1106 = vld [vmem:[#allocation3 + $0x58] sm:$0xff]
    %v1107 = vld [vmem:[#allocation3 + $0x60] sm:$0xff]
    %v1108 = vld [vmem:[#allocation3 + $0x68] sm:$0xff]
    %v1109 = vld [vmem:[#allocation3 + $0x70] sm:$0xff]
    %v1110 = vld [vmem:[#allocation3 + $0x78] sm:$0xff]
    %v1111 = vld [vmem:[#allocation3 + $0x80] sm:$0xff]
    %v1112 = vld [vmem:[#allocation3 + $0x88] sm:$0xff]
    %v1113 = vld [vmem:[#allocation3 + $0x90] sm:$0xff]
    %v1114 = vld [vmem:[#allocation3 + $0x98] sm:$0xff]
    %v1115 = vld [vmem:[#allocation3 + $0xa0] sm:$0xff]
    %v1116 = vld [vmem:[#allocation3 + $0xa8] sm:$0xff]
    %v1117 = vld [vmem:[#allocation3 + $0xb0] sm:$0xff]
    %v1118 = vld [vmem:[#allocation3 + $0xb8] sm:$0xff]
    %v1119 = vld [vmem:[#allocation3 + $0xc0] sm:$0xff]
    %v1120 = vld [vmem:[#allocation3 + $0xc8] sm:$0xff]
    %v1121 = vld [vmem:[#allocation3 + $0xd0] sm:$0xff]
    %v1122 = vld [vmem:[#allocation3 + $0xd8] sm:$0xff]
    %v1123 = vld [vmem:[#allocation3 + $0xe0] sm:$0xff]
    %v1124 = vld [vmem:[#allocation3 + $0xe8] sm:$0xff]
    %v1125 = vld [vmem:[#allocation3 + $0xf0] sm:$0xff]
    %v1126 = vld [vmem:[#allocation3 + $0xf8] sm:$0xff]
    %v1127 = vld [vmem:[#allocation3 + $0x100] sm:$0xff]
    %v1128 = vld [vmem:[#allocation3 + $0x108] sm:$0xff]
    %v1129 = vld [vmem:[#allocation3 + $0x110] sm:$0xff]
    %v1130 = vld [vmem:[#allocation3 + $0x118] sm:$0xff]
    %v1131 = vld [vmem:[#allocation3 + $0x120] sm:$0xff]
    %v1132 = vld [vmem:[#allocation3 + $0x128] sm:$0xff]
    %v1133 = vld [vmem:[#allocation3 + $0x130] sm:$0xff]
    %v1134 = vld [vmem:[#allocation3 + $0x138] sm:$0xff]
    %v1135 = vld [vmem:[#allocation3 + $0x140] sm:$0xff]
    %v1136 = vld [vmem:[#allocation3 + $0x148] sm:$0xff]
    %v1137 = vld [vmem:[#allocation3 + $0x150] sm:$0xff]
    %v1138 = vld [vmem:[#allocation3 + $0x158] sm:$0xff]
    %v1139 = vld [vmem:[#allocation3 + $0x160] sm:$0xff]
    %v1140 = vld [vmem:[#allocation3 + $0x168] sm:$0xff]
    %v1141 = vld [vmem:[#allocation3 + $0x170] sm:$0xff]
    %v1142 = vld [vmem:[#allocation3 + $0x178] sm:$0xff]
    %v1143 = vld [vmem:[#allocation3 + $0x180] sm:$0xff]
    %v1144 = vld [vmem:[#allocation3 + $0x188] sm:$0xff]
    %v1145 = vld [vmem:[#allocation3 + $0x190] sm:$0xff]
    %v1146 = vld [vmem:[#allocation3 + $0x198] sm:$0xff]
    %v1147 = vld [vmem:[#allocation3 + $0x1a0] sm:$0xff]
    %v1148 = vld [vmem:[#allocation3 + $0x1a8] sm:$0xff]
    %v1149 = vld [vmem:[#allocation3 + $0x1b0] sm:$0xff]
    %v1150 = vld [vmem:[#allocation3 + $0x1b8] sm:$0xff]
    %v1151 = vld [vmem:[#allocation3 + $0x1c0] sm:$0xff]
    %v1152 = vld [vmem:[#allocation3 + $0x1c8] sm:$0xff]
    %v1153 = vld [vmem:[#allocation3 + $0x1d0] sm:$0xff]
    %v1154 = vld [vmem:[#allocation3 + $0x1d8] sm:$0xff]
    %v1155 = vld [vmem:[#allocation3 + $0x1e0] sm:$0xff]
    %v1156 = vld [vmem:[#allocation3 + $0x1e8] sm:$0xff]
    %v1157 = vld [vmem:[#allocation3 + $0x1f0] sm:$0xff]
    %v1158 = vld [vmem:[#allocation3 + $0x1f8] sm:$0xff]
    %1159 = vmatprep.subr.mxu0 %v1096
    %1160 = vmatpush1.msra.mxu0 %v1095
    %1161 = vmatprep.subr.mxu0 %v1100
    %1162 = vmatpush1.msra.mxu0 %v1099
    %1163 = vmatprep.subr.mxu0 %v1104
    %1164 = vmatpush1.msra.mxu0 %v1103
    %1165 = vmatprep.subr.mxu0 %v1108
    %1166 = vmatpush1.msra.mxu0 %v1107
    %1167 = vmatprep.subr.mxu0 %v1112
    %1168 = vmatpush1.msra.mxu0 %v1111
    %1169 = vmatprep.subr.mxu0 %v1116
    %1170 = vmatpush1.msra.mxu0 %v1115
    %1171 = vmatprep.subr.mxu0 %v1120
    %1172 = vmatpush1.msra.mxu0 %v1119
    %1173 = vmatprep.subr.mxu0 %v1124
    %1174 = vmatpush1.msra.mxu0 %v1123
    %1175 = vmatprep.subr.mxu0 %v1128
    %1176 = vmatpush1.msra.mxu0 %v1127
    %1177 = vmatprep.subr.mxu0 %v1132
    %1178 = vmatpush1.msra.mxu0 %v1131
    %1179 = vmatprep.subr.mxu0 %v1136
    %1180 = vmatpush1.msra.mxu0 %v1135
    %1181 = vmatprep.subr.mxu0 %v1140
    %1182 = vmatpush1.msra.mxu0 %v1139
    %1183 = vmatprep.subr.mxu0 %v1144
    %1184 = vmatpush1.msra.mxu0 %v1143
    %1185 = vmatprep.subr.mxu0 %v1148
    %1186 = vmatpush1.msra.mxu0 %v1147
    %1187 = vmatprep.subr.mxu0 %v1152
    %1188 = vmatpush1.msra.mxu0 %v1151
    %1189 = vmatprep.subr.mxu0 %v1156
    %1190 = vmatpush1.msra.mxu0 %v1155
    %1191 = vmatprep.subr.mxu0 0.0
    %1192 = vmatpush1.msra.mxu0 0.0
    %1193 = vmatprep.subr.mxu0 0.0
    %1194 = vmatpush1.msra.mxu0 0.0
    %1195 = vmatprep.subr.mxu0 0.0
    %1196 = vmatpush1.msra.mxu0 0.0
    %1197 = vmatprep.subr.mxu0 0.0
    %1198 = vmatpush1.msra.mxu0 0.0
    %1199 = vmatprep.subr.mxu0 0.0
    %1200 = vmatpush1.msra.mxu0 0.0
    %1201 = vmatprep.subr.mxu0 0.0
    %1202 = vmatpush1.msra.mxu0 0.0
    %1203 = vmatprep.subr.mxu0 0.0
    %1204 = vmatpush1.msra.mxu0 0.0
    %1205 = vmatprep.subr.mxu0 0.0
    %1206 = vmatpush1.msra.mxu0 0.0
    %1207 = vmatprep.subr.mxu0 0.0
    %1208 = vmatpush1.msra.mxu0 0.0
    %1209 = vmatprep.subr.mxu0 0.0
    %1210 = vmatpush1.msra.mxu0 0.0
    %1211 = vmatprep.subr.mxu0 0.0
    %1212 = vmatpush1.msra.mxu0 0.0
    %1213 = vmatprep.subr.mxu0 0.0
    %1214 = vmatpush1.msra.mxu0 0.0
    %1215 = vmatprep.subr.mxu0 0.0
    %1216 = vmatpush1.msra.mxu0 0.0
    %1217 = vmatprep.subr.mxu0 0.0
    %1218 = vmatpush1.msra.mxu0 0.0
    %1219 = vmatprep.subr.mxu0 0.0
    %1220 = vmatpush1.msra.mxu0 0.0
    %1221 = vmatprep.subr.mxu0 0.0
    %1222 = vmatpush1.msra.mxu0 0.0
    %1223 = vmatprep.mubr.f32.mxu0 0.0
    %1224 = vmatmul.mubr.f32.gmra.mrb[0].mxu0 %v1088
    %v1225 = vpop.f32.mrb[0].mxu0
    %v1226 = vadd.f32 0.0, %v1225
    %v1227 = vpop.f32.mrb[0].mxu0
    %v1228 = vadd.f32 0.0, %v1227
    %1229 = vdwg.mxu0
    %1230 = vmatprep.subr.mxu0 %v1098
    %1231 = vmatpush1.msra.mxu0 %v1097
    %1232 = vmatprep.subr.mxu0 %v1102
    %1233 = vmatpush1.msra.mxu0 %v1101
    %1234 = vmatprep.subr.mxu0 %v1106
    %1235 = vmatpush1.msra.mxu0 %v1105
    %1236 = vmatprep.subr.mxu0 %v1110
    %1237 = vmatpush1.msra.mxu0 %v1109
    %1238 = vmatprep.subr.mxu0 %v1114
    %1239 = vmatpush1.msra.mxu0 %v1113
    %1240 = vmatprep.subr.mxu0 %v1118
    %1241 = vmatpush1.msra.mxu0 %v1117
    %1242 = vmatprep.subr.mxu0 %v1122
    %1243 = vmatpush1.msra.mxu0 %v1121
    %1244 = vmatprep.subr.mxu0 %v1126
    %1245 = vmatpush1.msra.mxu0 %v1125
    %1246 = vmatprep.subr.mxu0 %v1130
    %1247 = vmatpush1.msra.mxu0 %v1129
    %1248 = vmatprep.subr.mxu0 %v1134
    %1249 = vmatpush1.msra.mxu0 %v1133
    %1250 = vmatprep.subr.mxu0 %v1138
    %1251 = vmatpush1.msra.mxu0 %v1137
    %1252 = vmatprep.subr.mxu0 %v1142
    %1253 = vmatpush1.msra.mxu0 %v1141
    %1254 = vmatprep.subr.mxu0 %v1146
    %1255 = vmatpush1.msra.mxu0 %v1145
    %1256 = vmatprep.subr.mxu0 %v1150
    %1257 = vmatpush1.msra.mxu0 %v1149
    %1258 = vmatprep.subr.mxu0 %v1154
    %1259 = vmatpush1.msra.mxu0 %v1153
    %1260 = vmatprep.subr.mxu0 %v1158
    %1261 = vmatpush1.msra.mxu0 %v1157
    %1262 = vmatprep.subr.mxu0 0.0
    %1263 = vmatpush1.msra.mxu0 0.0
    %1264 = vmatprep.subr.mxu0 0.0
    %1265 = vmatpush1.msra.mxu0 0.0
    %1266 = vmatprep.subr.mxu0 0.0
    %1267 = vmatpush1.msra.mxu0 0.0
    %1268 = vmatprep.subr.mxu0 0.0
    %1269 = vmatpush1.msra.mxu0 0.0
    %1270 = vmatprep.subr.mxu0 0.0
    %1271 = vmatpush1.msra.mxu0 0.0
    %1272 = vmatprep.subr.mxu0 0.0
    %1273 = vmatpush1.msra.mxu0 0.0
    %1274 = vmatprep.subr.mxu0 0.0
    %1275 = vmatpush1.msra.mxu0 0.0
    %1276 = vmatprep.subr.mxu0 0.0
    %1277 = vmatpush1.msra.mxu0 0.0
    %1278 = vmatprep.subr.mxu0 0.0
    %1279 = vmatpush1.msra.mxu0 0.0
    %1280 = vmatprep.subr.mxu0 0.0
    %1281 = vmatpush1.msra.mxu0 0.0
    %1282 = vmatprep.subr.mxu0 0.0
    %1283 = vmatpush1.msra.mxu0 0.0
    %1284 = vmatprep.subr.mxu0 0.0
    %1285 = vmatpush1.msra.mxu0 0.0
    %1286 = vmatprep.subr.mxu0 0.0
    %1287 = vmatpush1.msra.mxu0 0.0
    %1288 = vmatprep.subr.mxu0 0.0
    %1289 = vmatpush1.msra.mxu0 0.0
    %1290 = vmatprep.subr.mxu0 0.0
    %1291 = vmatpush1.msra.mxu0 0.0
    %1292 = vmatprep.subr.mxu0 0.0
    %1293 = vmatpush1.msra.mxu0 0.0
    %1294 = vmatprep.mubr.f32.mxu0 0.0
    %1295 = vmatmul.mubr.f32.gmra.mrb[0].mxu0 %v1088
    %v1296 = vpop.f32.mrb[0].mxu0
    %v1297 = vadd.f32 0.0, %v1296
    %v1298 = vpop.f32.mrb[0].mxu0
    %v1299 = vadd.f32 0.0, %v1298
    %1300 = vdwg.mxu0
    %v1301 = vadd.f32 %v1091, %v1226
    %v1302 = vadd.f32 %v1092, %v1228
    %v1303 = vadd.f32 %v1093, %v1297
    %v1304 = vadd.f32 %v1094, %v1299
    %v1305 = vxor.u32 %v1301, 2147483648
    %v1306 = vxor.u32 %v1302, 2147483648
    %v1307 = vxor.u32 %v1303, 2147483648
    %v1308 = vmul.f32 %v1305, 1.442695
    %v1309 = vpow.pop %v1308
    %v1310 = vmul.f32 %v1306, 1.442695
    %v1311 = vpow.pop %v1310
    %v1312 = vmul.f32 %v1307, 1.442695
    %v1313 = vpow.pop %v1312
    %v1314 = vadd.f32 %v1309, 1.0
    %v1315 = vadd.f32 %v1311, 1.0
    %v1316 = vadd.f32 %v1313, 1.0
    %v1317 = vrcp.pop %v1314
    %v1318 = vmul.f32 1.0, %v1317
    %v1319 = vrcp.pop %v1315
    %v1320 = vmul.f32 1.0, %v1319
    %v1321 = vrcp.pop %v1316
    %v1322 = vmul.f32 1.0, %v1321
    %v1323 = vtanh.pop %v1304
    %v1324 = vmul.f32 %v1320, %v1086
    %v1325 = vmul.f32 %v1318, %v1323
    %v1326 = vadd.f32 %v1324, %v1325
    %v1327 = vtanh.pop %v1326
    %v1328 = vmul.f32 %v1322, %v1327
    %s1329 = scalar_lea.vmem [#allocation6], 24
    %1330 = vst [vmem:[%s1329] sm:$0xff] %v1328
    %v1331 = vld [vmem:[#allocation2 + $0x80] sm:$0xff]
    %v1332 = vld [vmem:[#allocation2 + $0x88] sm:$0xff]
    %v1333 = vld [vmem:[#allocation2 + $0x90] sm:$0xff]
    %v1334 = vld [vmem:[#allocation2 + $0x98] sm:$0xff]
    %v1335 = vld [vmem:[#allocation3] sm:$0xff]
    %v1336 = vld [vmem:[#allocation3 + $0x8] sm:$0xff]
    %v1337 = vld [vmem:[#allocation3 + $0x10] sm:$0xff]
    %v1338 = vld [vmem:[#allocation3 + $0x18] sm:$0xff]
    %v1339 = vld [vmem:[#allocation3 + $0x20] sm:$0xff]
    %v1340 = vld [vmem:[#allocation3 + $0x28] sm:$0xff]
    %v1341 = vld [vmem:[#allocation3 + $0x30] sm:$0xff]
    %v1342 = vld [vmem:[#allocation3 + $0x38] sm:$0xff]
    %v1343 = vld [vmem:[#allocation3 + $0x40] sm:$0xff]
    %v1344 = vld [vmem:[#allocation3 + $0x48] sm:$0xff]
    %v1345 = vld [vmem:[#allocation3 + $0x50] sm:$0xff]
    %v1346 = vld [vmem:[#allocation3 + $0x58] sm:$0xff]
    %v1347 = vld [vmem:[#allocation3 + $0x60] sm:$0xff]
    %v1348 = vld [vmem:[#allocation3 + $0x68] sm:$0xff]
    %v1349 = vld [vmem:[#allocation3 + $0x70] sm:$0xff]
    %v1350 = vld [vmem:[#allocation3 + $0x78] sm:$0xff]
    %v1351 = vld [vmem:[#allocation3 + $0x80] sm:$0xff]
    %v1352 = vld [vmem:[#allocation3 + $0x88] sm:$0xff]
    %v1353 = vld [vmem:[#allocation3 + $0x90] sm:$0xff]
    %v1354 = vld [vmem:[#allocation3 + $0x98] sm:$0xff]
    %v1355 = vld [vmem:[#allocation3 + $0xa0] sm:$0xff]
    %v1356 = vld [vmem:[#allocation3 + $0xa8] sm:$0xff]
    %v1357 = vld [vmem:[#allocation3 + $0xb0] sm:$0xff]
    %v1358 = vld [vmem:[#allocation3 + $0xb8] sm:$0xff]
    %v1359 = vld [vmem:[#allocation3 + $0xc0] sm:$0xff]
    %v1360 = vld [vmem:[#allocation3 + $0xc8] sm:$0xff]
    %v1361 = vld [vmem:[#allocation3 + $0xd0] sm:$0xff]
    %v1362 = vld [vmem:[#allocation3 + $0xd8] sm:$0xff]
    %v1363 = vld [vmem:[#allocation3 + $0xe0] sm:$0xff]
    %v1364 = vld [vmem:[#allocation3 + $0xe8] sm:$0xff]
    %v1365 = vld [vmem:[#allocation3 + $0xf0] sm:$0xff]
    %v1366 = vld [vmem:[#allocation3 + $0xf8] sm:$0xff]
    %v1367 = vld [vmem:[#allocation3 + $0x100] sm:$0xff]
    %v1368 = vld [vmem:[#allocation3 + $0x108] sm:$0xff]
    %v1369 = vld [vmem:[#allocation3 + $0x110] sm:$0xff]
    %v1370 = vld [vmem:[#allocation3 + $0x118] sm:$0xff]
    %v1371 = vld [vmem:[#allocation3 + $0x120] sm:$0xff]
    %v1372 = vld [vmem:[#allocation3 + $0x128] sm:$0xff]
    %v1373 = vld [vmem:[#allocation3 + $0x130] sm:$0xff]
    %v1374 = vld [vmem:[#allocation3 + $0x138] sm:$0xff]
    %v1375 = vld [vmem:[#allocation3 + $0x140] sm:$0xff]
    %v1376 = vld [vmem:[#allocation3 + $0x148] sm:$0xff]
    %v1377 = vld [vmem:[#allocation3 + $0x150] sm:$0xff]
    %v1378 = vld [vmem:[#allocation3 + $0x158] sm:$0xff]
    %v1379 = vld [vmem:[#allocation3 + $0x160] sm:$0xff]
    %v1380 = vld [vmem:[#allocation3 + $0x168] sm:$0xff]
    %v1381 = vld [vmem:[#allocation3 + $0x170] sm:$0xff]
    %v1382 = vld [vmem:[#allocation3 + $0x178] sm:$0xff]
    %v1383 = vld [vmem:[#allocation3 + $0x180] sm:$0xff]
    %v1384 = vld [vmem:[#allocation3 + $0x188] sm:$0xff]
    %v1385 = vld [vmem:[#allocation3 + $0x190] sm:$0xff]
    %v1386 = vld [vmem:[#allocation3 + $0x198] sm:$0xff]
    %v1387 = vld [vmem:[#allocation3 + $0x1a0] sm:$0xff]
    %v1388 = vld [vmem:[#allocation3 + $0x1a8] sm:$0xff]
    %v1389 = vld [vmem:[#allocation3 + $0x1b0] sm:$0xff]
    %v1390 = vld [vmem:[#allocation3 + $0x1b8] sm:$0xff]
    %v1391 = vld [vmem:[#allocation3 + $0x1c0] sm:$0xff]
    %v1392 = vld [vmem:[#allocation3 + $0x1c8] sm:$0xff]
    %v1393 = vld [vmem:[#allocation3 + $0x1d0] sm:$0xff]
    %v1394 = vld [vmem:[#allocation3 + $0x1d8] sm:$0xff]
    %v1395 = vld [vmem:[#allocation3 + $0x1e0] sm:$0xff]
    %v1396 = vld [vmem:[#allocation3 + $0x1e8] sm:$0xff]
    %v1397 = vld [vmem:[#allocation3 + $0x1f0] sm:$0xff]
    %v1398 = vld [vmem:[#allocation3 + $0x1f8] sm:$0xff]
    %1399 = vmatprep.subr.mxu0 %v1336
    %1400 = vmatpush1.msra.mxu0 %v1335
    %1401 = vmatprep.subr.mxu0 %v1340
    %1402 = vmatpush1.msra.mxu0 %v1339
    %1403 = vmatprep.subr.mxu0 %v1344
    %1404 = vmatpush1.msra.mxu0 %v1343
    %1405 = vmatprep.subr.mxu0 %v1348
    %1406 = vmatpush1.msra.mxu0 %v1347
    %1407 = vmatprep.subr.mxu0 %v1352
    %1408 = vmatpush1.msra.mxu0 %v1351
    %1409 = vmatprep.subr.mxu0 %v1356
    %1410 = vmatpush1.msra.mxu0 %v1355
    %1411 = vmatprep.subr.mxu0 %v1360
    %1412 = vmatpush1.msra.mxu0 %v1359
    %1413 = vmatprep.subr.mxu0 %v1364
    %1414 = vmatpush1.msra.mxu0 %v1363
    %1415 = vmatprep.subr.mxu0 %v1368
    %1416 = vmatpush1.msra.mxu0 %v1367
    %1417 = vmatprep.subr.mxu0 %v1372
    %1418 = vmatpush1.msra.mxu0 %v1371
    %1419 = vmatprep.subr.mxu0 %v1376
    %1420 = vmatpush1.msra.mxu0 %v1375
    %1421 = vmatprep.subr.mxu0 %v1380
    %1422 = vmatpush1.msra.mxu0 %v1379
    %1423 = vmatprep.subr.mxu0 %v1384
    %1424 = vmatpush1.msra.mxu0 %v1383
    %1425 = vmatprep.subr.mxu0 %v1388
    %1426 = vmatpush1.msra.mxu0 %v1387
    %1427 = vmatprep.subr.mxu0 %v1392
    %1428 = vmatpush1.msra.mxu0 %v1391
    %1429 = vmatprep.subr.mxu0 %v1396
    %1430 = vmatpush1.msra.mxu0 %v1395
    %1431 = vmatprep.subr.mxu0 0.0
    %1432 = vmatpush1.msra.mxu0 0.0
    %1433 = vmatprep.subr.mxu0 0.0
    %1434 = vmatpush1.msra.mxu0 0.0
    %1435 = vmatprep.subr.mxu0 0.0
    %1436 = vmatpush1.msra.mxu0 0.0
    %1437 = vmatprep.subr.mxu0 0.0
    %1438 = vmatpush1.msra.mxu0 0.0
    %1439 = vmatprep.subr.mxu0 0.0
    %1440 = vmatpush1.msra.mxu0 0.0
    %1441 = vmatprep.subr.mxu0 0.0
    %1442 = vmatpush1.msra.mxu0 0.0
    %1443 = vmatprep.subr.mxu0 0.0
    %1444 = vmatpush1.msra.mxu0 0.0
    %1445 = vmatprep.subr.mxu0 0.0
    %1446 = vmatpush1.msra.mxu0 0.0
    %1447 = vmatprep.subr.mxu0 0.0
    %1448 = vmatpush1.msra.mxu0 0.0
    %1449 = vmatprep.subr.mxu0 0.0
    %1450 = vmatpush1.msra.mxu0 0.0
    %1451 = vmatprep.subr.mxu0 0.0
    %1452 = vmatpush1.msra.mxu0 0.0
    %1453 = vmatprep.subr.mxu0 0.0
    %1454 = vmatpush1.msra.mxu0 0.0
    %1455 = vmatprep.subr.mxu0 0.0
    %1456 = vmatpush1.msra.mxu0 0.0
    %1457 = vmatprep.subr.mxu0 0.0
    %1458 = vmatpush1.msra.mxu0 0.0
    %1459 = vmatprep.subr.mxu0 0.0
    %1460 = vmatpush1.msra.mxu0 0.0
    %1461 = vmatprep.subr.mxu0 0.0
    %1462 = vmatpush1.msra.mxu0 0.0
    %1463 = vmatprep.mubr.f32.mxu0 0.0
    %1464 = vmatmul.mubr.f32.gmra.mrb[0].mxu0 %v1328
    %v1465 = vpop.f32.mrb[0].mxu0
    %v1466 = vadd.f32 0.0, %v1465
    %v1467 = vpop.f32.mrb[0].mxu0
    %v1468 = vadd.f32 0.0, %v1467
    %1469 = vdwg.mxu0
    %1470 = vmatprep.subr.mxu0 %v1338
    %1471 = vmatpush1.msra.mxu0 %v1337
    %1472 = vmatprep.subr.mxu0 %v1342
    %1473 = vmatpush1.msra.mxu0 %v1341
    %1474 = vmatprep.subr.mxu0 %v1346
    %1475 = vmatpush1.msra.mxu0 %v1345
    %1476 = vmatprep.subr.mxu0 %v1350
    %1477 = vmatpush1.msra.mxu0 %v1349
    %1478 = vmatprep.subr.mxu0 %v1354
    %1479 = vmatpush1.msra.mxu0 %v1353
    %1480 = vmatprep.subr.mxu0 %v1358
    %1481 = vmatpush1.msra.mxu0 %v1357
    %1482 = vmatprep.subr.mxu0 %v1362
    %1483 = vmatpush1.msra.mxu0 %v1361
    %1484 = vmatprep.subr.mxu0 %v1366
    %1485 = vmatpush1.msra.mxu0 %v1365
    %1486 = vmatprep.subr.mxu0 %v1370
    %1487 = vmatpush1.msra.mxu0 %v1369
    %1488 = vmatprep.subr.mxu0 %v1374
    %1489 = vmatpush1.msra.mxu0 %v1373
    %1490 = vmatprep.subr.mxu0 %v1378
    %1491 = vmatpush1.msra.mxu0 %v1377
    %1492 = vmatprep.subr.mxu0 %v1382
    %1493 = vmatpush1.msra.mxu0 %v1381
    %1494 = vmatprep.subr.mxu0 %v1386
    %1495 = vmatpush1.msra.mxu0 %v1385
    %1496 = vmatprep.subr.mxu0 %v1390
    %1497 = vmatpush1.msra.mxu0 %v1389
    %1498 = vmatprep.subr.mxu0 %v1394
    %1499 = vmatpush1.msra.mxu0 %v1393
    %1500 = vmatprep.subr.mxu0 %v1398
    %1501 = vmatpush1.msra.mxu0 %v1397
    %1502 = vmatprep.subr.mxu0 0.0
    %1503 = vmatpush1.msra.mxu0 0.0
    %1504 = vmatprep.subr.mxu0 0.0
    %1505 = vmatpush1.msra.mxu0 0.0
    %1506 = vmatprep.subr.mxu0 0.0
    %1507 = vmatpush1.msra.mxu0 0.0
    %1508 = vmatprep.subr.mxu0 0.0
    %1509 = vmatpush1.msra.mxu0 0.0
    %1510 = vmatprep.subr.mxu0 0.0
    %1511 = vmatpush1.msra.mxu0 0.0
    %1512 = vmatprep.subr.mxu0 0.0
    %1513 = vmatpush1.msra.mxu0 0.0
    %1514 = vmatprep.subr.mxu0 0.0
    %1515 = vmatpush1.msra.mxu0 0.0
    %1516 = vmatprep.subr.mxu0 0.0
    %1517 = vmatpush1.msra.mxu0 0.0
    %1518 = vmatprep.subr.mxu0 0.0
    %1519 = vmatpush1.msra.mxu0 0.0
    %1520 = vmatprep.subr.mxu0 0.0
    %1521 = vmatpush1.msra.mxu0 0.0
    %1522 = vmatprep.subr.mxu0 0.0
    %1523 = vmatpush1.msra.mxu0 0.0
    %1524 = vmatprep.subr.mxu0 0.0
    %1525 = vmatpush1.msra.mxu0 0.0
    %1526 = vmatprep.subr.mxu0 0.0
    %1527 = vmatpush1.msra.mxu0 0.0
    %1528 = vmatprep.subr.mxu0 0.0
    %1529 = vmatpush1.msra.mxu0 0.0
    %1530 = vmatprep.subr.mxu0 0.0
    %1531 = vmatpush1.msra.mxu0 0.0
    %1532 = vmatprep.subr.mxu0 0.0
    %1533 = vmatpush1.msra.mxu0 0.0
    %1534 = vmatprep.mubr.f32.mxu0 0.0
    %1535 = vmatmul.mubr.f32.gmra.mrb[0].mxu0 %v1328
    %v1536 = vpop.f32.mrb[0].mxu0
    %v1537 = vadd.f32 0.0, %v1536
    %v1538 = vpop.f32.mrb[0].mxu0
    %v1539 = vadd.f32 0.0, %v1538
    %1540 = vdwg.mxu0
    %v1541 = vadd.f32 %v1331, %v1466
    %v1542 = vadd.f32 %v1332, %v1468
    %v1543 = vadd.f32 %v1333, %v1537
    %v1544 = vadd.f32 %v1334, %v1539
    %v1545 = vxor.u32 %v1541, 2147483648
    %v1546 = vxor.u32 %v1542, 2147483648
    %v1547 = vxor.u32 %v1543, 2147483648
    %v1548 = vmul.f32 %v1545, 1.442695
    %v1549 = vpow.pop %v1548
    %v1550 = vmul.f32 %v1546, 1.442695
    %v1551 = vpow.pop %v1550
    %v1552 = vmul.f32 %v1547, 1.442695
    %v1553 = vpow.pop %v1552
    %v1554 = vadd.f32 %v1549, 1.0
    %v1555 = vadd.f32 %v1551, 1.0
    %v1556 = vadd.f32 %v1553, 1.0
    %v1557 = vrcp.pop %v1554
    %v1558 = vmul.f32 1.0, %v1557
    %v1559 = vrcp.pop %v1555
    %v1560 = vmul.f32 1.0, %v1559
    %v1561 = vrcp.pop %v1556
    %v1562 = vmul.f32 1.0, %v1561
    %v1563 = vtanh.pop %v1544
    %v1564 = vmul.f32 %v1560, %v1326
    %v1565 = vmul.f32 %v1558, %v1563
    %v1566 = vadd.f32 %v1564, %v1565
    %v1567 = vtanh.pop %v1566
    %v1568 = vmul.f32 %v1562, %v1567
    %s1569 = scalar_lea.vmem [#allocation6], 32
    %1570 = vst [vmem:[%s1569] sm:$0xff] %v1568
    %v1571 = vld [vmem:[#allocation2 + $0xa0] sm:$0xff]
    %v1572 = vld [vmem:[#allocation2 + $0xa8] sm:$0xff]
    %v1573 = vld [vmem:[#allocation2 + $0xb0] sm:$0xff]
    %v1574 = vld [vmem:[#allocation2 + $0xb8] sm:$0xff]
    %v1575 = vld [vmem:[#allocation3] sm:$0xff]
    %v1576 = vld [vmem:[#allocation3 + $0x8] sm:$0xff]
    %v1577 = vld [vmem:[#allocation3 + $0x10] sm:$0xff]
    %v1578 = vld [vmem:[#allocation3 + $0x18] sm:$0xff]
    %v1579 = vld [vmem:[#allocation3 + $0x20] sm:$0xff]
    %v1580 = vld [vmem:[#allocation3 + $0x28] sm:$0xff]
    %v1581 = vld [vmem:[#allocation3 + $0x30] sm:$0xff]
    %v1582 = vld [vmem:[#allocation3 + $0x38] sm:$0xff]
    %v1583 = vld [vmem:[#allocation3 + $0x40] sm:$0xff]
    %v1584 = vld [vmem:[#allocation3 + $0x48] sm:$0xff]
    %v1585 = vld [vmem:[#allocation3 + $0x50] sm:$0xff]
    %v1586 = vld [vmem:[#allocation3 + $0x58] sm:$0xff]
    %v1587 = vld [vmem:[#allocation3 + $0x60] sm:$0xff]
    %v1588 = vld [vmem:[#allocation3 + $0x68] sm:$0xff]
    %v1589 = vld [vmem:[#allocation3 + $0x70] sm:$0xff]
    %v1590 = vld [vmem:[#allocation3 + $0x78] sm:$0xff]
    %v1591 = vld [vmem:[#allocation3 + $0x80] sm:$0xff]
    %v1592 = vld [vmem:[#allocation3 + $0x88] sm:$0xff]
    %v1593 = vld [vmem:[#allocation3 + $0x90] sm:$0xff]
    %v1594 = vld [vmem:[#allocation3 + $0x98] sm:$0xff]
    %v1595 = vld [vmem:[#allocation3 + $0xa0] sm:$0xff]
    %v1596 = vld [vmem:[#allocation3 + $0xa8] sm:$0xff]
    %v1597 = vld [vmem:[#allocation3 + $0xb0] sm:$0xff]
    %v1598 = vld [vmem:[#allocation3 + $0xb8] sm:$0xff]
    %v1599 = vld [vmem:[#allocation3 + $0xc0] sm:$0xff]
    %v1600 = vld [vmem:[#allocation3 + $0xc8] sm:$0xff]
    %v1601 = vld [vmem:[#allocation3 + $0xd0] sm:$0xff]
    %v1602 = vld [vmem:[#allocation3 + $0xd8] sm:$0xff]
    %v1603 = vld [vmem:[#allocation3 + $0xe0] sm:$0xff]
    %v1604 = vld [vmem:[#allocation3 + $0xe8] sm:$0xff]
    %v1605 = vld [vmem:[#allocation3 + $0xf0] sm:$0xff]
    %v1606 = vld [vmem:[#allocation3 + $0xf8] sm:$0xff]
    %v1607 = vld [vmem:[#allocation3 + $0x100] sm:$0xff]
    %v1608 = vld [vmem:[#allocation3 + $0x108] sm:$0xff]
    %v1609 = vld [vmem:[#allocation3 + $0x110] sm:$0xff]
    %v1610 = vld [vmem:[#allocation3 + $0x118] sm:$0xff]
    %v1611 = vld [vmem:[#allocation3 + $0x120] sm:$0xff]
    %v1612 = vld [vmem:[#allocation3 + $0x128] sm:$0xff]
    %v1613 = vld [vmem:[#allocation3 + $0x130] sm:$0xff]
    %v1614 = vld [vmem:[#allocation3 + $0x138] sm:$0xff]
    %v1615 = vld [vmem:[#allocation3 + $0x140] sm:$0xff]
    %v1616 = vld [vmem:[#allocation3 + $0x148] sm:$0xff]
    %v1617 = vld [vmem:[#allocation3 + $0x150] sm:$0xff]
    %v1618 = vld [vmem:[#allocation3 + $0x158] sm:$0xff]
    %v1619 = vld [vmem:[#allocation3 + $0x160] sm:$0xff]
    %v1620 = vld [vmem:[#allocation3 + $0x168] sm:$0xff]
    %v1621 = vld [vmem:[#allocation3 + $0x170] sm:$0xff]
    %v1622 = vld [vmem:[#allocation3 + $0x178] sm:$0xff]
    %v1623 = vld [vmem:[#allocation3 + $0x180] sm:$0xff]
    %v1624 = vld [vmem:[#allocation3 + $0x188] sm:$0xff]
    %v1625 = vld [vmem:[#allocation3 + $0x190] sm:$0xff]
    %v1626 = vld [vmem:[#allocation3 + $0x198] sm:$0xff]
    %v1627 = vld [vmem:[#allocation3 + $0x1a0] sm:$0xff]
    %v1628 = vld [vmem:[#allocation3 + $0x1a8] sm:$0xff]
    %v1629 = vld [vmem:[#allocation3 + $0x1b0] sm:$0xff]
    %v1630 = vld [vmem:[#allocation3 + $0x1b8] sm:$0xff]
    %v1631 = vld [vmem:[#allocation3 + $0x1c0] sm:$0xff]
    %v1632 = vld [vmem:[#allocation3 + $0x1c8] sm:$0xff]
    %v1633 = vld [vmem:[#allocation3 + $0x1d0] sm:$0xff]
    %v1634 = vld [vmem:[#allocation3 + $0x1d8] sm:$0xff]
    %v1635 = vld [vmem:[#allocation3 + $0x1e0] sm:$0xff]
    %v1636 = vld [vmem:[#allocation3 + $0x1e8] sm:$0xff]
    %v1637 = vld [vmem:[#allocation3 + $0x1f0] sm:$0xff]
    %v1638 = vld [vmem:[#allocation3 + $0x1f8] sm:$0xff]
    %1639 = vmatprep.subr.mxu0 %v1576
    %1640 = vmatpush1.msra.mxu0 %v1575
    %1641 = vmatprep.subr.mxu0 %v1580
    %1642 = vmatpush1.msra.mxu0 %v1579
    %1643 = vmatprep.subr.mxu0 %v1584
    %1644 = vmatpush1.msra.mxu0 %v1583
    %1645 = vmatprep.subr.mxu0 %v1588
    %1646 = vmatpush1.msra.mxu0 %v1587
    %1647 = vmatprep.subr.mxu0 %v1592
    %1648 = vmatpush1.msra.mxu0 %v1591
    %1649 = vmatprep.subr.mxu0 %v1596
    %1650 = vmatpush1.msra.mxu0 %v1595
    %1651 = vmatprep.subr.mxu0 %v1600
    %1652 = vmatpush1.msra.mxu0 %v1599
    %1653 = vmatprep.subr.mxu0 %v1604
    %1654 = vmatpush1.msra.mxu0 %v1603
    %1655 = vmatprep.subr.mxu0 %v1608
    %1656 = vmatpush1.msra.mxu0 %v1607
    %1657 = vmatprep.subr.mxu0 %v1612
    %1658 = vmatpush1.msra.mxu0 %v1611
    %1659 = vmatprep.subr.mxu0 %v1616
    %1660 = vmatpush1.msra.mxu0 %v1615
    %1661 = vmatprep.subr.mxu0 %v1620
    %1662 = vmatpush1.msra.mxu0 %v1619
    %1663 = vmatprep.subr.mxu0 %v1624
    %1664 = vmatpush1.msra.mxu0 %v1623
    %1665 = vmatprep.subr.mxu0 %v1628
    %1666 = vmatpush1.msra.mxu0 %v1627
    %1667 = vmatprep.subr.mxu0 %v1632
    %1668 = vmatpush1.msra.mxu0 %v1631
    %1669 = vmatprep.subr.mxu0 %v1636
    %1670 = vmatpush1.msra.mxu0 %v1635
    %1671 = vmatprep.subr.mxu0 0.0
    %1672 = vmatpush1.msra.mxu0 0.0
    %1673 = vmatprep.subr.mxu0 0.0
    %1674 = vmatpush1.msra.mxu0 0.0
    %1675 = vmatprep.subr.mxu0 0.0
    %1676 = vmatpush1.msra.mxu0 0.0
    %1677 = vmatprep.subr.mxu0 0.0
    %1678 = vmatpush1.msra.mxu0 0.0
    %1679 = vmatprep.subr.mxu0 0.0
    %1680 = vmatpush1.msra.mxu0 0.0
    %1681 = vmatprep.subr.mxu0 0.0
    %1682 = vmatpush1.msra.mxu0 0.0
    %1683 = vmatprep.subr.mxu0 0.0
    %1684 = vmatpush1.msra.mxu0 0.0
    %1685 = vmatprep.subr.mxu0 0.0
    %1686 = vmatpush1.msra.mxu0 0.0
    %1687 = vmatprep.subr.mxu0 0.0
    %1688 = vmatpush1.msra.mxu0 0.0
    %1689 = vmatprep.subr.mxu0 0.0
    %1690 = vmatpush1.msra.mxu0 0.0
    %1691 = vmatprep.subr.mxu0 0.0
    %1692 = vmatpush1.msra.mxu0 0.0
    %1693 = vmatprep.subr.mxu0 0.0
    %1694 = vmatpush1.msra.mxu0 0.0
    %1695 = vmatprep.subr.mxu0 0.0
    %1696 = vmatpush1.msra.mxu0 0.0
    %1697 = vmatprep.subr.mxu0 0.0
    %1698 = vmatpush1.msra.mxu0 0.0
    %1699 = vmatprep.subr.mxu0 0.0
    %1700 = vmatpush1.msra.mxu0 0.0
    %1701 = vmatprep.subr.mxu0 0.0
    %1702 = vmatpush1.msra.mxu0 0.0
    %1703 = vmatprep.mubr.f32.mxu0 0.0
    %1704 = vmatmul.mubr.f32.gmra.mrb[0].mxu0 %v1568
    %v1705 = vpop.f32.mrb[0].mxu0
    %v1706 = vadd.f32 0.0, %v1705
    %v1707 = vpop.f32.mrb[0].mxu0
    %v1708 = vadd.f32 0.0, %v1707
    %1709 = vdwg.mxu0
    %1710 = vmatprep.subr.mxu0 %v1578
    %1711 = vmatpush1.msra.mxu0 %v1577
    %1712 = vmatprep.subr.mxu0 %v1582
    %1713 = vmatpush1.msra.mxu0 %v1581
    %1714 = vmatprep.subr.mxu0 %v1586
    %1715 = vmatpush1.msra.mxu0 %v1585
    %1716 = vmatprep.subr.mxu0 %v1590
    %1717 = vmatpush1.msra.mxu0 %v1589
    %1718 = vmatprep.subr.mxu0 %v1594
    %1719 = vmatpush1.msra.mxu0 %v1593
    %1720 = vmatprep.subr.mxu0 %v1598
    %1721 = vmatpush1.msra.mxu0 %v1597
    %1722 = vmatprep.subr.mxu0 %v1602
    %1723 = vmatpush1.msra.mxu0 %v1601
    %1724 = vmatprep.subr.mxu0 %v1606
    %1725 = vmatpush1.msra.mxu0 %v1605
    %1726 = vmatprep.subr.mxu0 %v1610
    %1727 = vmatpush1.msra.mxu0 %v1609
    %1728 = vmatprep.subr.mxu0 %v1614
    %1729 = vmatpush1.msra.mxu0 %v1613
    %1730 = vmatprep.subr.mxu0 %v1618
    %1731 = vmatpush1.msra.mxu0 %v1617
    %1732 = vmatprep.subr.mxu0 %v1622
    %1733 = vmatpush1.msra.mxu0 %v1621
    %1734 = vmatprep.subr.mxu0 %v1626
    %1735 = vmatpush1.msra.mxu0 %v1625
    %1736 = vmatprep.subr.mxu0 %v1630
    %1737 = vmatpush1.msra.mxu0 %v1629
    %1738 = vmatprep.subr.mxu0 %v1634
    %1739 = vmatpush1.msra.mxu0 %v1633
    %1740 = vmatprep.subr.mxu0 %v1638
    %1741 = vmatpush1.msra.mxu0 %v1637
    %1742 = vmatprep.subr.mxu0 0.0
    %1743 = vmatpush1.msra.mxu0 0.0
    %1744 = vmatprep.subr.mxu0 0.0
    %1745 = vmatpush1.msra.mxu0 0.0
    %1746 = vmatprep.subr.mxu0 0.0
    %1747 = vmatpush1.msra.mxu0 0.0
    %1748 = vmatprep.subr.mxu0 0.0
    %1749 = vmatpush1.msra.mxu0 0.0
    %1750 = vmatprep.subr.mxu0 0.0
    %1751 = vmatpush1.msra.mxu0 0.0
    %1752 = vmatprep.subr.mxu0 0.0
    %1753 = vmatpush1.msra.mxu0 0.0
    %1754 = vmatprep.subr.mxu0 0.0
    %1755 = vmatpush1.msra.mxu0 0.0
    %1756 = vmatprep.subr.mxu0 0.0
    %1757 = vmatpush1.msra.mxu0 0.0
    %1758 = vmatprep.subr.mxu0 0.0
    %1759 = vmatpush1.msra.mxu0 0.0
    %1760 = vmatprep.subr.mxu0 0.0
    %1761 = vmatpush1.msra.mxu0 0.0
    %1762 = vmatprep.subr.mxu0 0.0
    %1763 = vmatpush1.msra.mxu0 0.0
    %1764 = vmatprep.subr.mxu0 0.0
    %1765 = vmatpush1.msra.mxu0 0.0
    %1766 = vmatprep.subr.mxu0 0.0
    %1767 = vmatpush1.msra.mxu0 0.0
    %1768 = vmatprep.subr.mxu0 0.0
    %1769 = vmatpush1.msra.mxu0 0.0
    %1770 = vmatprep.subr.mxu0 0.0
    %1771 = vmatpush1.msra.mxu0 0.0
    %1772 = vmatprep.subr.mxu0 0.0
    %1773 = vmatpush1.msra.mxu0 0.0
    %1774 = vmatprep.mubr.f32.mxu0 0.0
    %1775 = vmatmul.mubr.f32.gmra.mrb[0].mxu0 %v1568
    %v1776 = vpop.f32.mrb[0].mxu0
    %v1777 = vadd.f32 0.0, %v1776
    %v1778 = vpop.f32.mrb[0].mxu0
    %v1779 = vadd.f32 0.0, %v1778
    %1780 = vdwg.mxu0
    %v1781 = vadd.f32 %v1571, %v1706
    %v1782 = vadd.f32 %v1572, %v1708
    %v1783 = vadd.f32 %v1573, %v1777
    %v1784 = vadd.f32 %v1574, %v1779
    %v1785 = vxor.u32 %v1781, 2147483648
    %v1786 = vxor.u32 %v1782, 2147483648
    %v1787 = vxor.u32 %v1783, 2147483648
    %v1788 = vmul.f32 %v1785, 1.442695
    %v1789 = vpow.pop %v1788
    %v1790 = vmul.f32 %v1786, 1.442695
    %v1791 = vpow.pop %v1790
    %v1792 = vmul.f32 %v1787, 1.442695
    %v1793 = vpow.pop %v1792
    %v1794 = vadd.f32 %v1789, 1.0
    %v1795 = vadd.f32 %v1791, 1.0
    %v1796 = vadd.f32 %v1793, 1.0
    %v1797 = vrcp.pop %v1794
    %v1798 = vmul.f32 1.0, %v1797
    %v1799 = vrcp.pop %v1795
    %v1800 = vmul.f32 1.0, %v1799
    %v1801 = vrcp.pop %v1796
    %v1802 = vmul.f32 1.0, %v1801
    %v1803 = vtanh.pop %v1784
    %v1804 = vmul.f32 %v1800, %v1566
    %v1805 = vmul.f32 %v1798, %v1803
    %v1806 = vadd.f32 %v1804, %v1805
    %v1807 = vtanh.pop %v1806
    %v1808 = vmul.f32 %v1802, %v1807
    %s1809 = scalar_lea.vmem [#allocation6], 40
    %1810 = vst [vmem:[%s1809] sm:$0xff] %v1808
    %v1811 = vld [vmem:[#allocation2 + $0xc0] sm:$0xff]
    %v1812 = vld [vmem:[#allocation2 + $0xc8] sm:$0xff]
    %v1813 = vld [vmem:[#allocation2 + $0xd0] sm:$0xff]
    %v1814 = vld [vmem:[#allocation2 + $0xd8] sm:$0xff]
    %v1815 = vld [vmem:[#allocation3] sm:$0xff]
    %v1816 = vld [vmem:[#allocation3 + $0x8] sm:$0xff]
    %v1817 = vld [vmem:[#allocation3 + $0x10] sm:$0xff]
    %v1818 = vld [vmem:[#allocation3 + $0x18] sm:$0xff]
    %v1819 = vld [vmem:[#allocation3 + $0x20] sm:$0xff]
    %v1820 = vld [vmem:[#allocation3 + $0x28] sm:$0xff]
    %v1821 = vld [vmem:[#allocation3 + $0x30] sm:$0xff]
    %v1822 = vld [vmem:[#allocation3 + $0x38] sm:$0xff]
    %v1823 = vld [vmem:[#allocation3 + $0x40] sm:$0xff]
    %v1824 = vld [vmem:[#allocation3 + $0x48] sm:$0xff]
    %v1825 = vld [vmem:[#allocation3 + $0x50] sm:$0xff]
    %v1826 = vld [vmem:[#allocation3 + $0x58] sm:$0xff]
    %v1827 = vld [vmem:[#allocation3 + $0x60] sm:$0xff]
    %v1828 = vld [vmem:[#allocation3 + $0x68] sm:$0xff]
    %v1829 = vld [vmem:[#allocation3 + $0x70] sm:$0xff]
    %v1830 = vld [vmem:[#allocation3 + $0x78] sm:$0xff]
    %v1831 = vld [vmem:[#allocation3 + $0x80] sm:$0xff]
    %v1832 = vld [vmem:[#allocation3 + $0x88] sm:$0xff]
    %v1833 = vld [vmem:[#allocation3 + $0x90] sm:$0xff]
    %v1834 = vld [vmem:[#allocation3 + $0x98] sm:$0xff]
    %v1835 = vld [vmem:[#allocation3 + $0xa0] sm:$0xff]
    %v1836 = vld [vmem:[#allocation3 + $0xa8] sm:$0xff]
    %v1837 = vld [vmem:[#allocation3 + $0xb0] sm:$0xff]
    %v1838 = vld [vmem:[#allocation3 + $0xb8] sm:$0xff]
    %v1839 = vld [vmem:[#allocation3 + $0xc0] sm:$0xff]
    %v1840 = vld [vmem:[#allocation3 + $0xc8] sm:$0xff]
    %v1841 = vld [vmem:[#allocation3 + $0xd0] sm:$0xff]
    %v1842 = vld [vmem:[#allocation3 + $0xd8] sm:$0xff]
    %v1843 = vld [vmem:[#allocation3 + $0xe0] sm:$0xff]
    %v1844 = vld [vmem:[#allocation3 + $0xe8] sm:$0xff]
    %v1845 = vld [vmem:[#allocation3 + $0xf0] sm:$0xff]
    %v1846 = vld [vmem:[#allocation3 + $0xf8] sm:$0xff]
    %v1847 = vld [vmem:[#allocation3 + $0x100] sm:$0xff]
    %v1848 = vld [vmem:[#allocation3 + $0x108] sm:$0xff]
    %v1849 = vld [vmem:[#allocation3 + $0x110] sm:$0xff]
    %v1850 = vld [vmem:[#allocation3 + $0x118] sm:$0xff]
    %v1851 = vld [vmem:[#allocation3 + $0x120] sm:$0xff]
    %v1852 = vld [vmem:[#allocation3 + $0x128] sm:$0xff]
    %v1853 = vld [vmem:[#allocation3 + $0x130] sm:$0xff]
    %v1854 = vld [vmem:[#allocation3 + $0x138] sm:$0xff]
    %v1855 = vld [vmem:[#allocation3 + $0x140] sm:$0xff]
    %v1856 = vld [vmem:[#allocation3 + $0x148] sm:$0xff]
    %v1857 = vld [vmem:[#allocation3 + $0x150] sm:$0xff]
    %v1858 = vld [vmem:[#allocation3 + $0x158] sm:$0xff]
    %v1859 = vld [vmem:[#allocation3 + $0x160] sm:$0xff]
    %v1860 = vld [vmem:[#allocation3 + $0x168] sm:$0xff]
    %v1861 = vld [vmem:[#allocation3 + $0x170] sm:$0xff]
    %v1862 = vld [vmem:[#allocation3 + $0x178] sm:$0xff]
    %v1863 = vld [vmem:[#allocation3 + $0x180] sm:$0xff]
    %v1864 = vld [vmem:[#allocation3 + $0x188] sm:$0xff]
    %v1865 = vld [vmem:[#allocation3 + $0x190] sm:$0xff]
    %v1866 = vld [vmem:[#allocation3 + $0x198] sm:$0xff]
    %v1867 = vld [vmem:[#allocation3 + $0x1a0] sm:$0xff]
    %v1868 = vld [vmem:[#allocation3 + $0x1a8] sm:$0xff]
    %v1869 = vld [vmem:[#allocation3 + $0x1b0] sm:$0xff]
    %v1870 = vld [vmem:[#allocation3 + $0x1b8] sm:$0xff]
    %v1871 = vld [vmem:[#allocation3 + $0x1c0] sm:$0xff]
    %v1872 = vld [vmem:[#allocation3 + $0x1c8] sm:$0xff]
    %v1873 = vld [vmem:[#allocation3 + $0x1d0] sm:$0xff]
    %v1874 = vld [vmem:[#allocation3 + $0x1d8] sm:$0xff]
    %v1875 = vld [vmem:[#allocation3 + $0x1e0] sm:$0xff]
    %v1876 = vld [vmem:[#allocation3 + $0x1e8] sm:$0xff]
    %v1877 = vld [vmem:[#allocation3 + $0x1f0] sm:$0xff]
    %v1878 = vld [vmem:[#allocation3 + $0x1f8] sm:$0xff]
    %1879 = vmatprep.subr.mxu0 %v1816
    %1880 = vmatpush1.msra.mxu0 %v1815
    %1881 = vmatprep.subr.mxu0 %v1820
    %1882 = vmatpush1.msra.mxu0 %v1819
    %1883 = vmatprep.subr.mxu0 %v1824
    %1884 = vmatpush1.msra.mxu0 %v1823
    %1885 = vmatprep.subr.mxu0 %v1828
    %1886 = vmatpush1.msra.mxu0 %v1827
    %1887 = vmatprep.subr.mxu0 %v1832
    %1888 = vmatpush1.msra.mxu0 %v1831
    %1889 = vmatprep.subr.mxu0 %v1836
    %1890 = vmatpush1.msra.mxu0 %v1835
    %1891 = vmatprep.subr.mxu0 %v1840
    %1892 = vmatpush1.msra.mxu0 %v1839
    %1893 = vmatprep.subr.mxu0 %v1844
    %1894 = vmatpush1.msra.mxu0 %v1843
    %1895 = vmatprep.subr.mxu0 %v1848
    %1896 = vmatpush1.msra.mxu0 %v1847
    %1897 = vmatprep.subr.mxu0 %v1852
    %1898 = vmatpush1.msra.mxu0 %v1851
    %1899 = vmatprep.subr.mxu0 %v1856
    %1900 = vmatpush1.msra.mxu0 %v1855
    %1901 = vmatprep.subr.mxu0 %v1860
    %1902 = vmatpush1.msra.mxu0 %v1859
    %1903 = vmatprep.subr.mxu0 %v1864
    %1904 = vmatpush1.msra.mxu0 %v1863
    %1905 = vmatprep.subr.mxu0 %v1868
    %1906 = vmatpush1.msra.mxu0 %v1867
    %1907 = vmatprep.subr.mxu0 %v1872
    %1908 = vmatpush1.msra.mxu0 %v1871
    %1909 = vmatprep.subr.mxu0 %v1876
    %1910 = vmatpush1.msra.mxu0 %v1875
    %1911 = vmatprep.subr.mxu0 0.0
    %1912 = vmatpush1.msra.mxu0 0.0
    %1913 = vmatprep.subr.mxu0 0.0
    %1914 = vmatpush1.msra.mxu0 0.0
    %1915 = vmatprep.subr.mxu0 0.0
    %1916 = vmatpush1.msra.mxu0 0.0
    %1917 = vmatprep.subr.mxu0 0.0
    %1918 = vmatpush1.msra.mxu0 0.0
    %1919 = vmatprep.subr.mxu0 0.0
    %1920 = vmatpush1.msra.mxu0 0.0
    %1921 = vmatprep.subr.mxu0 0.0
    %1922 = vmatpush1.msra.mxu0 0.0
    %1923 = vmatprep.subr.mxu0 0.0
    %1924 = vmatpush1.msra.mxu0 0.0
    %1925 = vmatprep.subr.mxu0 0.0
    %1926 = vmatpush1.msra.mxu0 0.0
    %1927 = vmatprep.subr.mxu0 0.0
    %1928 = vmatpush1.msra.mxu0 0.0
    %1929 = vmatprep.subr.mxu0 0.0
    %1930 = vmatpush1.msra.mxu0 0.0
    %1931 = vmatprep.subr.mxu0 0.0
    %1932 = vmatpush1.msra.mxu0 0.0
    %1933 = vmatprep.subr.mxu0 0.0
    %1934 = vmatpush1.msra.mxu0 0.0
    %1935 = vmatprep.subr.mxu0 0.0
    %1936 = vmatpush1.msra.mxu0 0.0
    %1937 = vmatprep.subr.mxu0 0.0
    %1938 = vmatpush1.msra.mxu0 0.0
    %1939 = vmatprep.subr.mxu0 0.0
    %1940 = vmatpush1.msra.mxu0 0.0
    %1941 = vmatprep.subr.mxu0 0.0
    %1942 = vmatpush1.msra.mxu0 0.0
    %1943 = vmatprep.mubr.f32.mxu0 0.0
    %1944 = vmatmul.mubr.f32.gmra.mrb[0].mxu0 %v1808
    %v1945 = vpop.f32.mrb[0].mxu0
    %v1946 = vadd.f32 0.0, %v1945
    %v1947 = vpop.f32.mrb[0].mxu0
    %v1948 = vadd.f32 0.0, %v1947
    %1949 = vdwg.mxu0
    %1950 = vmatprep.subr.mxu0 %v1818
    %1951 = vmatpush1.msra.mxu0 %v1817
    %1952 = vmatprep.subr.mxu0 %v1822
    %1953 = vmatpush1.msra.mxu0 %v1821
    %1954 = vmatprep.subr.mxu0 %v1826
    %1955 = vmatpush1.msra.mxu0 %v1825
    %1956 = vmatprep.subr.mxu0 %v1830
    %1957 = vmatpush1.msra.mxu0 %v1829
    %1958 = vmatprep.subr.mxu0 %v1834
    %1959 = vmatpush1.msra.mxu0 %v1833
    %1960 = vmatprep.subr.mxu0 %v1838
    %1961 = vmatpush1.msra.mxu0 %v1837
    %1962 = vmatprep.subr.mxu0 %v1842
    %1963 = vmatpush1.msra.mxu0 %v1841
    %1964 = vmatprep.subr.mxu0 %v1846
    %1965 = vmatpush1.msra.mxu0 %v1845
    %1966 = vmatprep.subr.mxu0 %v1850
    %1967 = vmatpush1.msra.mxu0 %v1849
    %1968 = vmatprep.subr.mxu0 %v1854
    %1969 = vmatpush1.msra.mxu0 %v1853
    %1970 = vmatprep.subr.mxu0 %v1858
    %1971 = vmatpush1.msra.mxu0 %v1857
    %1972 = vmatprep.subr.mxu0 %v1862
    %1973 = vmatpush1.msra.mxu0 %v1861
    %1974 = vmatprep.subr.mxu0 %v1866
    %1975 = vmatpush1.msra.mxu0 %v1865
    %1976 = vmatprep.subr.mxu0 %v1870
    %1977 = vmatpush1.msra.mxu0 %v1869
    %1978 = vmatprep.subr.mxu0 %v1874
    %1979 = vmatpush1.msra.mxu0 %v1873
    %1980 = vmatprep.subr.mxu0 %v1878
    %1981 = vmatpush1.msra.mxu0 %v1877
    %1982 = vmatprep.subr.mxu0 0.0
    %1983 = vmatpush1.msra.mxu0 0.0
    %1984 = vmatprep.subr.mxu0 0.0
    %1985 = vmatpush1.msra.mxu0 0.0
    %1986 = vmatprep.subr.mxu0 0.0
    %1987 = vmatpush1.msra.mxu0 0.0
    %1988 = vmatprep.subr.mxu0 0.0
    %1989 = vmatpush1.msra.mxu0 0.0
    %1990 = vmatprep.subr.mxu0 0.0
    %1991 = vmatpush1.msra.mxu0 0.0
    %1992 = vmatprep.subr.mxu0 0.0
    %1993 = vmatpush1.msra.mxu0 0.0
    %1994 = vmatprep.subr.mxu0 0.0
    %1995 = vmatpush1.msra.mxu0 0.0
    %1996 = vmatprep.subr.mxu0 0.0
    %1997 = vmatpush1.msra.mxu0 0.0
    %1998 = vmatprep.subr.mxu0 0.0
    %1999 = vmatpush1.msra.mxu0 0.0
    %2000 = vmatprep.subr.mxu0 0.0
    %2001 = vmatpush1.msra.mxu0 0.0
    %2002 = vmatprep.subr.mxu0 0.0
    %2003 = vmatpush1.msra.mxu0 0.0
    %2004 = vmatprep.subr.mxu0 0.0
    %2005 = vmatpush1.msra.mxu0 0.0
    %2006 = vmatprep.subr.mxu0 0.0
    %2007 = vmatpush1.msra.mxu0 0.0
    %2008 = vmatprep.subr.mxu0 0.0
    %2009 = vmatpush1.msra.mxu0 0.0
    %2010 = vmatprep.subr.mxu0 0.0
    %2011 = vmatpush1.msra.mxu0 0.0
    %2012 = vmatprep.subr.mxu0 0.0
    %2013 = vmatpush1.msra.mxu0 0.0
    %2014 = vmatprep.mubr.f32.mxu0 0.0
    %2015 = vmatmul.mubr.f32.gmra.mrb[0].mxu0 %v1808
    %v2016 = vpop.f32.mrb[0].mxu0
    %v2017 = vadd.f32 0.0, %v2016
    %v2018 = vpop.f32.mrb[0].mxu0
    %v2019 = vadd.f32 0.0, %v2018
    %2020 = vdwg.mxu0
    %v2021 = vadd.f32 %v1811, %v1946
    %v2022 = vadd.f32 %v1812, %v1948
    %v2023 = vadd.f32 %v1813, %v2017
    %v2024 = vadd.f32 %v1814, %v2019
    %v2025 = vxor.u32 %v2021, 2147483648
    %v2026 = vxor.u32 %v2022, 2147483648
    %v2027 = vxor.u32 %v2023, 2147483648
    %v2028 = vmul.f32 %v2025, 1.442695
    %v2029 = vpow.pop %v2028
    %v2030 = vmul.f32 %v2026, 1.442695
    %v2031 = vpow.pop %v2030
    %v2032 = vmul.f32 %v2027, 1.442695
    %v2033 = vpow.pop %v2032
    %v2034 = vadd.f32 %v2029, 1.0
    %v2035 = vadd.f32 %v2031, 1.0
    %v2036 = vadd.f32 %v2033, 1.0
    %v2037 = vrcp.pop %v2034
    %v2038 = vmul.f32 1.0, %v2037
    %v2039 = vrcp.pop %v2035
    %v2040 = vmul.f32 1.0, %v2039
    %v2041 = vrcp.pop %v2036
    %v2042 = vmul.f32 1.0, %v2041
    %v2043 = vtanh.pop %v2024
    %v2044 = vmul.f32 %v2040, %v1806
    %v2045 = vmul.f32 %v2038, %v2043
    %v2046 = vadd.f32 %v2044, %v2045
    %v2047 = vtanh.pop %v2046
    %v2048 = vmul.f32 %v2042, %v2047
    %s2049 = scalar_lea.vmem [#allocation6], 48
    %2050 = vst [vmem:[%s2049] sm:$0xff] %v2048
    %v2051 = vld [vmem:[#allocation2 + $0xe0] sm:$0xff]
    %v2052 = vld [vmem:[#allocation2 + $0xe8] sm:$0xff]
    %v2053 = vld [vmem:[#allocation2 + $0xf0] sm:$0xff]
    %v2054 = vld [vmem:[#allocation2 + $0xf8] sm:$0xff]
    %v2055 = vld [vmem:[#allocation3] sm:$0xff]
    %v2056 = vld [vmem:[#allocation3 + $0x8] sm:$0xff]
    %v2057 = vld [vmem:[#allocation3 + $0x10] sm:$0xff]
    %v2058 = vld [vmem:[#allocation3 + $0x18] sm:$0xff]
    %v2059 = vld [vmem:[#allocation3 + $0x20] sm:$0xff]
    %v2060 = vld [vmem:[#allocation3 + $0x28] sm:$0xff]
    %v2061 = vld [vmem:[#allocation3 + $0x30] sm:$0xff]
    %v2062 = vld [vmem:[#allocation3 + $0x38] sm:$0xff]
    %v2063 = vld [vmem:[#allocation3 + $0x40] sm:$0xff]
    %v2064 = vld [vmem:[#allocation3 + $0x48] sm:$0xff]
    %v2065 = vld [vmem:[#allocation3 + $0x50] sm:$0xff]
    %v2066 = vld [vmem:[#allocation3 + $0x58] sm:$0xff]
    %v2067 = vld [vmem:[#allocation3 + $0x60] sm:$0xff]
    %v2068 = vld [vmem:[#allocation3 + $0x68] sm:$0xff]
    %v2069 = vld [vmem:[#allocation3 + $0x70] sm:$0xff]
    %v2070 = vld [vmem:[#allocation3 + $0x78] sm:$0xff]
    %v2071 = vld [vmem:[#allocation3 + $0x80] sm:$0xff]
    %v2072 = vld [vmem:[#allocation3 + $0x88] sm:$0xff]
    %v2073 = vld [vmem:[#allocation3 + $0x90] sm:$0xff]
    %v2074 = vld [vmem:[#allocation3 + $0x98] sm:$0xff]
    %v2075 = vld [vmem:[#allocation3 + $0xa0] sm:$0xff]
    %v2076 = vld [vmem:[#allocation3 + $0xa8] sm:$0xff]
    %v2077 = vld [vmem:[#allocation3 + $0xb0] sm:$0xff]
    %v2078 = vld [vmem:[#allocation3 + $0xb8] sm:$0xff]
    %v2079 = vld [vmem:[#allocation3 + $0xc0] sm:$0xff]
    %v2080 = vld [vmem:[#allocation3 + $0xc8] sm:$0xff]
    %v2081 = vld [vmem:[#allocation3 + $0xd0] sm:$0xff]
    %v2082 = vld [vmem:[#allocation3 + $0xd8] sm:$0xff]
    %v2083 = vld [vmem:[#allocation3 + $0xe0] sm:$0xff]
    %v2084 = vld [vmem:[#allocation3 + $0xe8] sm:$0xff]
    %v2085 = vld [vmem:[#allocation3 + $0xf0] sm:$0xff]
    %v2086 = vld [vmem:[#allocation3 + $0xf8] sm:$0xff]
    %v2087 = vld [vmem:[#allocation3 + $0x100] sm:$0xff]
    %v2088 = vld [vmem:[#allocation3 + $0x108] sm:$0xff]
    %v2089 = vld [vmem:[#allocation3 + $0x110] sm:$0xff]
    %v2090 = vld [vmem:[#allocation3 + $0x118] sm:$0xff]
    %v2091 = vld [vmem:[#allocation3 + $0x120] sm:$0xff]
    %v2092 = vld [vmem:[#allocation3 + $0x128] sm:$0xff]
    %v2093 = vld [vmem:[#allocation3 + $0x130] sm:$0xff]
    %v2094 = vld [vmem:[#allocation3 + $0x138] sm:$0xff]
    %v2095 = vld [vmem:[#allocation3 + $0x140] sm:$0xff]
    %v2096 = vld [vmem:[#allocation3 + $0x148] sm:$0xff]
    %v2097 = vld [vmem:[#allocation3 + $0x150] sm:$0xff]
    %v2098 = vld [vmem:[#allocation3 + $0x158] sm:$0xff]
    %v2099 = vld [vmem:[#allocation3 + $0x160] sm:$0xff]
    %v2100 = vld [vmem:[#allocation3 + $0x168] sm:$0xff]
    %v2101 = vld [vmem:[#allocation3 + $0x170] sm:$0xff]
    %v2102 = vld [vmem:[#allocation3 + $0x178] sm:$0xff]
    %v2103 = vld [vmem:[#allocation3 + $0x180] sm:$0xff]
    %v2104 = vld [vmem:[#allocation3 + $0x188] sm:$0xff]
    %v2105 = vld [vmem:[#allocation3 + $0x190] sm:$0xff]
    %v2106 = vld [vmem:[#allocation3 + $0x198] sm:$0xff]
    %v2107 = vld [vmem:[#allocation3 + $0x1a0] sm:$0xff]
    %v2108 = vld [vmem:[#allocation3 + $0x1a8] sm:$0xff]
    %v2109 = vld [vmem:[#allocation3 + $0x1b0] sm:$0xff]
    %v2110 = vld [vmem:[#allocation3 + $0x1b8] sm:$0xff]
    %v2111 = vld [vmem:[#allocation3 + $0x1c0] sm:$0xff]
    %v2112 = vld [vmem:[#allocation3 + $0x1c8] sm:$0xff]
    %v2113 = vld [vmem:[#allocation3 + $0x1d0] sm:$0xff]
    %v2114 = vld [vmem:[#allocation3 + $0x1d8] sm:$0xff]
    %v2115 = vld [vmem:[#allocation3 + $0x1e0] sm:$0xff]
    %v2116 = vld [vmem:[#allocation3 + $0x1e8] sm:$0xff]
    %v2117 = vld [vmem:[#allocation3 + $0x1f0] sm:$0xff]
    %v2118 = vld [vmem:[#allocation3 + $0x1f8] sm:$0xff]
    %2119 = vmatprep.subr.mxu0 %v2056
    %2120 = vmatpush1.msra.mxu0 %v2055
    %2121 = vmatprep.subr.mxu0 %v2060
    %2122 = vmatpush1.msra.mxu0 %v2059
    %2123 = vmatprep.subr.mxu0 %v2064
    %2124 = vmatpush1.msra.mxu0 %v2063
    %2125 = vmatprep.subr.mxu0 %v2068
    %2126 = vmatpush1.msra.mxu0 %v2067
    %2127 = vmatprep.subr.mxu0 %v2072
    %2128 = vmatpush1.msra.mxu0 %v2071
    %2129 = vmatprep.subr.mxu0 %v2076
    %2130 = vmatpush1.msra.mxu0 %v2075
    %2131 = vmatprep.subr.mxu0 %v2080
    %2132 = vmatpush1.msra.mxu0 %v2079
    %2133 = vmatprep.subr.mxu0 %v2084
    %2134 = vmatpush1.msra.mxu0 %v2083
    %2135 = vmatprep.subr.mxu0 %v2088
    %2136 = vmatpush1.msra.mxu0 %v2087
    %2137 = vmatprep.subr.mxu0 %v2092
    %2138 = vmatpush1.msra.mxu0 %v2091
    %2139 = vmatprep.subr.mxu0 %v2096
    %2140 = vmatpush1.msra.mxu0 %v2095
    %2141 = vmatprep.subr.mxu0 %v2100
    %2142 = vmatpush1.msra.mxu0 %v2099
    %2143 = vmatprep.subr.mxu0 %v2104
    %2144 = vmatpush1.msra.mxu0 %v2103
    %2145 = vmatprep.subr.mxu0 %v2108
    %2146 = vmatpush1.msra.mxu0 %v2107
    %2147 = vmatprep.subr.mxu0 %v2112
    %2148 = vmatpush1.msra.mxu0 %v2111
    %2149 = vmatprep.subr.mxu0 %v2116
    %2150 = vmatpush1.msra.mxu0 %v2115
    %2151 = vmatprep.subr.mxu0 0.0
    %2152 = vmatpush1.msra.mxu0 0.0
    %2153 = vmatprep.subr.mxu0 0.0
    %2154 = vmatpush1.msra.mxu0 0.0
    %2155 = vmatprep.subr.mxu0 0.0
    %2156 = vmatpush1.msra.mxu0 0.0
    %2157 = vmatprep.subr.mxu0 0.0
    %2158 = vmatpush1.msra.mxu0 0.0
    %2159 = vmatprep.subr.mxu0 0.0
    %2160 = vmatpush1.msra.mxu0 0.0
    %2161 = vmatprep.subr.mxu0 0.0
    %2162 = vmatpush1.msra.mxu0 0.0
    %2163 = vmatprep.subr.mxu0 0.0
    %2164 = vmatpush1.msra.mxu0 0.0
    %2165 = vmatprep.subr.mxu0 0.0
    %2166 = vmatpush1.msra.mxu0 0.0
    %2167 = vmatprep.subr.mxu0 0.0
    %2168 = vmatpush1.msra.mxu0 0.0
    %2169 = vmatprep.subr.mxu0 0.0
    %2170 = vmatpush1.msra.mxu0 0.0
    %2171 = vmatprep.subr.mxu0 0.0
    %2172 = vmatpush1.msra.mxu0 0.0
    %2173 = vmatprep.subr.mxu0 0.0
    %2174 = vmatpush1.msra.mxu0 0.0
    %2175 = vmatprep.subr.mxu0 0.0
    %2176 = vmatpush1.msra.mxu0 0.0
    %2177 = vmatprep.subr.mxu0 0.0
    %2178 = vmatpush1.msra.mxu0 0.0
    %2179 = vmatprep.subr.mxu0 0.0
    %2180 = vmatpush1.msra.mxu0 0.0
    %2181 = vmatprep.subr.mxu0 0.0
    %2182 = vmatpush1.msra.mxu0 0.0
    %2183 = vmatprep.mubr.f32.mxu0 0.0
    %2184 = vmatmul.mubr.f32.gmra.mrb[0].mxu0 %v2048
    %v2185 = vpop.f32.mrb[0].mxu0
    %v2186 = vadd.f32 0.0, %v2185
    %v2187 = vpop.f32.mrb[0].mxu0
    %v2188 = vadd.f32 0.0, %v2187
    %2189 = vdwg.mxu0
    %2190 = vmatprep.subr.mxu0 %v2058
    %2191 = vmatpush1.msra.mxu0 %v2057
    %2192 = vmatprep.subr.mxu0 %v2062
    %2193 = vmatpush1.msra.mxu0 %v2061
    %2194 = vmatprep.subr.mxu0 %v2066
    %2195 = vmatpush1.msra.mxu0 %v2065
    %2196 = vmatprep.subr.mxu0 %v2070
    %2197 = vmatpush1.msra.mxu0 %v2069
    %2198 = vmatprep.subr.mxu0 %v2074
    %2199 = vmatpush1.msra.mxu0 %v2073
    %2200 = vmatprep.subr.mxu0 %v2078
    %2201 = vmatpush1.msra.mxu0 %v2077
    %2202 = vmatprep.subr.mxu0 %v2082
    %2203 = vmatpush1.msra.mxu0 %v2081
    %2204 = vmatprep.subr.mxu0 %v2086
    %2205 = vmatpush1.msra.mxu0 %v2085
    %2206 = vmatprep.subr.mxu0 %v2090
    %2207 = vmatpush1.msra.mxu0 %v2089
    %2208 = vmatprep.subr.mxu0 %v2094
    %2209 = vmatpush1.msra.mxu0 %v2093
    %2210 = vmatprep.subr.mxu0 %v2098
    %2211 = vmatpush1.msra.mxu0 %v2097
    %2212 = vmatprep.subr.mxu0 %v2102
    %2213 = vmatpush1.msra.mxu0 %v2101
    %2214 = vmatprep.subr.mxu0 %v2106
    %2215 = vmatpush1.msra.mxu0 %v2105
    %2216 = vmatprep.subr.mxu0 %v2110
    %2217 = vmatpush1.msra.mxu0 %v2109
    %2218 = vmatprep.subr.mxu0 %v2114
    %2219 = vmatpush1.msra.mxu0 %v2113
    %2220 = vmatprep.subr.mxu0 %v2118
    %2221 = vmatpush1.msra.mxu0 %v2117
    %2222 = vmatprep.subr.mxu0 0.0
    %2223 = vmatpush1.msra.mxu0 0.0
    %2224 = vmatprep.subr.mxu0 0.0
    %2225 = vmatpush1.msra.mxu0 0.0
    %2226 = vmatprep.subr.mxu0 0.0
    %2227 = vmatpush1.msra.mxu0 0.0
    %2228 = vmatprep.subr.mxu0 0.0
    %2229 = vmatpush1.msra.mxu0 0.0
    %2230 = vmatprep.subr.mxu0 0.0
    %2231 = vmatpush1.msra.mxu0 0.0
    %2232 = vmatprep.subr.mxu0 0.0
    %2233 = vmatpush1.msra.mxu0 0.0
    %2234 = vmatprep.subr.mxu0 0.0
    %2235 = vmatpush1.msra.mxu0 0.0
    %2236 = vmatprep.subr.mxu0 0.0
    %2237 = vmatpush1.msra.mxu0 0.0
    %2238 = vmatprep.subr.mxu0 0.0
    %2239 = vmatpush1.msra.mxu0 0.0
    %2240 = vmatprep.subr.mxu0 0.0
    %2241 = vmatpush1.msra.mxu0 0.0
    %2242 = vmatprep.subr.mxu0 0.0
    %2243 = vmatpush1.msra.mxu0 0.0
    %2244 = vmatprep.subr.mxu0 0.0
    %2245 = vmatpush1.msra.mxu0 0.0
    %2246 = vmatprep.subr.mxu0 0.0
    %2247 = vmatpush1.msra.mxu0 0.0
    %2248 = vmatprep.subr.mxu0 0.0
    %2249 = vmatpush1.msra.mxu0 0.0
    %2250 = vmatprep.subr.mxu0 0.0
    %2251 = vmatpush1.msra.mxu0 0.0
    %2252 = vmatprep.subr.mxu0 0.0
    %2253 = vmatpush1.msra.mxu0 0.0
    %2254 = vmatprep.mubr.f32.mxu0 0.0
    %2255 = vmatmul.mubr.f32.gmra.mrb[0].mxu0 %v2048
    %v2256 = vpop.f32.mrb[0].mxu0
    %v2257 = vadd.f32 0.0, %v2256
    %v2258 = vpop.f32.mrb[0].mxu0
    %v2259 = vadd.f32 0.0, %v2258
    %2260 = vdwg.mxu0
    %v2261 = vadd.f32 %v2051, %v2186
    %v2262 = vadd.f32 %v2052, %v2188
    %v2263 = vadd.f32 %v2053, %v2257
    %v2264 = vadd.f32 %v2054, %v2259
    %v2265 = vxor.u32 %v2261, 2147483648
    %v2266 = vxor.u32 %v2262, 2147483648
    %v2267 = vxor.u32 %v2263, 2147483648
    %v2268 = vmul.f32 %v2265, 1.442695
    %v2269 = vpow.pop %v2268
    %v2270 = vmul.f32 %v2266, 1.442695
    %v2271 = vpow.pop %v2270
    %v2272 = vmul.f32 %v2267, 1.442695
    %v2273 = vpow.pop %v2272
    %v2274 = vadd.f32 %v2269, 1.0
    %v2275 = vadd.f32 %v2271, 1.0
    %v2276 = vadd.f32 %v2273, 1.0
    %v2277 = vrcp.pop %v2274
    %v2278 = vmul.f32 1.0, %v2277
    %v2279 = vrcp.pop %v2275
    %v2280 = vmul.f32 1.0, %v2279
    %v2281 = vrcp.pop %v2276
    %v2282 = vmul.f32 1.0, %v2281
    %v2283 = vtanh.pop %v2264
    %v2284 = vmul.f32 %v2280, %v2046
    %v2285 = vmul.f32 %v2278, %v2283
    %v2286 = vadd.f32 %v2284, %v2285
    %v2287 = vtanh.pop %v2286
    %v2288 = vmul.f32 %v2282, %v2287
    %s2289 = scalar_lea.vmem [#allocation6], 56
    %2290 = vst [vmem:[%s2289] sm:$0xff] %v2288
    %2291 = vst [vmem:[#allocation7] sm:$0xff] %v2288
    %2292 = vst [vmem:[#allocation9] sm:$0xff] %v2286
    // Predicated region
    $region26: #{tpu_custom_call.1} parent=1 // pred_check
      _
    $region27: #{tpu_custom_call.1} parent=1 // pred_check_branch
      %2294 = sbr.rel (0) target = $region29
    $region28: #{tpu_custom_call.1} parent=1 // pred_region
      %s2296 = ssub.s32 1024, 1024
      %2297 = vsyncadd [#allocation5], %s2296
      %s2298 = sshll.u32 [#allocation6], 4
      %s2299 = int_to_ptr.vmem [resolvable:$true] %s2298
      %2304 = dma.vmem_to_hbm [thread:$0]  %s2299, 1024, %s4, [#allocation5], 128, 128, 8
    $region29: #{tpu_custom_call.1} parent=1 // pred_fallthru
      _
    // Predicated region
    $region30: #{tpu_custom_call.1} parent=1 // pred_check
      _
    $region31: #{tpu_custom_call.1} parent=1 // pred_check_branch
      %2306 = sbr.rel (0) target = $region33
    $region32: #{tpu_custom_call.1} parent=1 // pred_region
      %s2308 = ssub.s32 128, 128
      %2309 = vsyncadd [#allocation8], %s2308
      %s2311 = sshll.u32 [#allocation7], 4
      %s2312 = int_to_ptr.vmem [resolvable:$true] %s2311
      %2314 = dma.vmem_to_hbm [thread:$0]  %s2312, 128, %s5, [#allocation8]
    $region33: #{tpu_custom_call.1} parent=1 // pred_fallthru
      _
    // Predicated region
    $region34: #{tpu_custom_call.1} parent=1 // pred_check
      _
    $region35: #{tpu_custom_call.1} parent=1 // pred_check_branch
      %2316 = sbr.rel (0) target = $region37
    $region36: #{tpu_custom_call.1} parent=1 // pred_region
      %s2318 = ssub.s32 128, 128
      %2319 = vsyncadd [#allocation8], %s2318
      %s2321 = sshll.u32 [#allocation9], 4
      %s2322 = int_to_ptr.vmem [resolvable:$true] %s2321
      %2324 = dma.vmem_to_hbm [thread:$0]  %s2322, 128, %s6, [#allocation8]
    $region37: #{tpu_custom_call.1} parent=1 // pred_fallthru
      _
    // Predicated region
    $region38: #{tpu_custom_call.1} parent=1 // pred_check
      _
    $region39: #{tpu_custom_call.1} parent=1 // pred_check_branch
      %2326 = sbr.rel (0) target = $region41
    $region40: #{tpu_custom_call.1} parent=1 // pred_region
      %2327 = dma.done [#allocation5], 1024
    $region41: #{tpu_custom_call.1} parent=1 // pred_fallthru
      _
    // Predicated region
    $region42: #{tpu_custom_call.1} parent=1 // pred_check
      _
    $region43: #{tpu_custom_call.1} parent=1 // pred_check_branch
      %2329 = sbr.rel (0) target = $region45
    $region44: #{tpu_custom_call.1} parent=1 // pred_region
      %2330 = dma.done [#allocation8], 128
    $region45: #{tpu_custom_call.1} parent=1 // pred_fallthru
      _
    // Predicated region
    $region46: #{tpu_custom_call.1} parent=1 // pred_check
      _
    $region47: #{tpu_custom_call.1} parent=1 // pred_check_branch
      %2332 = sbr.rel (0) target = $region49
    $region48: #{tpu_custom_call.1} parent=1 // pred_region
      %2333 = dma.done [#allocation8], 128
    $region49: #{tpu_custom_call.1} parent=1 // pred_fallthru
      _
    %2334 = vsyncpa [#allocation4], 1
    %2335 = vsyncpa [#allocation5], 1
    %2336 = vsyncpa [#allocation8], 1

</llo_original>
